<compile_context>
chip_gen: v7x
topology: tpu7x:2x2x1
jax: 0.10.0
libtpu: 0.0.40
codegen_flags: <defaults>
</compile_context>

<pallas_src>
import functools

import jax
import jax.numpy as jnp
from jax.experimental import pallas as pl
from jax.experimental.pallas import tpu as pltpu

LN_EPS = 1e-5  # PyTorch nn.LayerNorm default


def _round_up(n, m):
    return (n + m - 1) // m * m


def _layer_norm(x, gamma, beta):
    # Both lane-dim reductions issued up front; var = E[x^2] - mu^2 (clamped).
    # Division replaced by multiply with a compile-time 1/D constant; rsqrt on EUP.
    inv_d = jnp.float32(1.0 / x.shape[-1])
    s1 = jnp.sum(x, axis=-1, keepdims=True)
    s2 = jnp.sum(x * x, axis=-1, keepdims=True)
    mu = s1 * inv_d
    var = jnp.maximum(s2 * inv_d - mu * mu, 0.0)
    return (x - mu) * jax.lax.rsqrt(var + LN_EPS) * gamma + beta


def ppo_forward_kernel(x_ref, w1_ref, w2_ref, w3_ref, vh_ref, vo_ref, o_ref):
    x = x_ref[...].astype(jnp.float32)

    # layer_norm_input with its affine folded into fc1: center + normalize only.
    inv_d = jnp.float32(1.0 / x.shape[-1])
    s1 = jnp.sum(x, axis=-1, keepdims=True)
    s2 = jnp.sum(x * x, axis=-1, keepdims=True)
    mu = s1 * inv_d
    var = jnp.maximum(s2 * inv_d - mu * mu, 0.0)
    x = (x - mu) * jax.lax.rsqrt(var + LN_EPS)

    vh = vh_ref[...]   # (6, hidden):      [b1, ln1_g, ln1_b, b2, ln2_g, ln2_b]
    vo = vo_ref[...]   # (3, hidden // 2): [b3, ln3_g, ln3_b]

    # fc1 -> LN1 -> tanh   (dropout is identity in eval mode)
    h = jnp.dot(x.astype(w1_ref.dtype), w1_ref[...],
                preferred_element_type=jnp.float32) + vh[0:1]
    h = jnp.tanh(_layer_norm(h, vh[1:2], vh[2:3]))

    # fc2 -> LN2 -> tanh
    h = jnp.dot(h.astype(w2_ref.dtype), w2_ref[...],
                preferred_element_type=jnp.float32) + vh[3:4]
    h = jnp.tanh(_layer_norm(h, vh[4:5], vh[5:6]))

    # fc3 -> LN3 -> tanh
    h = jnp.dot(h.astype(w3_ref.dtype), w3_ref[...],
                preferred_element_type=jnp.float32) + vo[0:1]
    h = jnp.tanh(_layer_norm(h, vo[1:2], vo[2:3]))

    o_ref[...] = h.astype(o_ref.dtype)


def ppo_forward(state, params, *, tile_b=512, out_dtype=jnp.float32):
    """state: (B, state_dim). Returns (B, hidden_dim // 2) in `out_dtype`."""
    B, state_dim = state.shape
    hidden_dim = params["w2"].shape[0]
    hidden_half = params["w3"].shape[1]

    # Stream activations into the kernel in bf16 (halves input HBM bytes);
    # all LayerNorm / tanh math is done in f32 inside the kernel.
    if state.dtype != jnp.bfloat16:
        state = state.astype(jnp.bfloat16)

    if B <= tile_b:
        tb = B                                   # single block, no grid overhead
    else:
        tb = _round_up(min(tile_b, B), 8)        # sublane-aligned batch tile
    grid = (pl.cdiv(B, tb),)                     # partial last block -> masked writes

    weight_args = (params["w1"], params["w2"], params["w3"],
                   params["vec_h"], params["vec_o"])

    # Activations stream over the batch grid; params use constant index_maps so
    # their VMEM buffers are fetched once and stay resident across grid steps.
    x_spec = pl.BlockSpec((tb, state_dim), lambda i: (i, 0))
    w_specs = [pl.BlockSpec(w.shape, lambda i: (0, 0)) for w in weight_args]
    o_spec = pl.BlockSpec((tb, hidden_half), lambda i: (i, 0))

    # Rough VMEM budget: double-buffered activation tiles + resident params +
    # live f32 intermediates. Clamp at 64 MiB so the request is valid on v7x.
    out_isz = jnp.dtype(out_dtype).itemsize
    weight_bytes = sum(int(w.size) * w.dtype.itemsize for w in weight_args)
    act_bytes = 2 * (tb * state_dim * 2 + tb * hidden_half * out_isz)
    interm_bytes = 4 * tb * hidden_dim * 4
    est = weight_bytes + act_bytes + interm_bytes
    vmem_limit = int(min(max(2 * est, 32 << 20), 64 << 20))

    return pl.pallas_call(
        ppo_forward_kernel,
        out_shape=jax.ShapeDtypeStruct((B, hidden_half), out_dtype),
        grid=grid,
        in_specs=[x_spec] + w_specs,
        out_specs=o_spec,
        compiler_params=pltpu.CompilerParams(
            dimension_semantics=("parallel",),   # shards batch tiles across TCs on v7x
            vmem_limit_bytes=vmem_limit,
        ),
    )(state, *weight_args)


def init_raw_params(key, state_dim, hidden_dim):
    """Mirror PPOModel._init_weights: orthogonal(gain=sqrt(2)) Linear weights,
    zero biases, ones/zeros LayerNorm affine. Weights stored (in, out) = W_torch.T."""
    orth = jax.nn.initializers.orthogonal(scale=jnp.sqrt(2.0))
    k1, k2, k3 = jax.random.split(key, 3)
    h2 = hidden_dim // 2
    return {
        "ln_in_g": jnp.ones((state_dim,), jnp.float32),
        "ln_in_b": jnp.zeros((state_dim,), jnp.float32),
        "w1": orth(k1, (state_dim, hidden_dim), jnp.float32),
        "b1": jnp.zeros((hidden_dim,), jnp.float32),
        "ln1_g": jnp.ones((hidden_dim,), jnp.float32),
        "ln1_b": jnp.zeros((hidden_dim,), jnp.float32),
        "w2": orth(k2, (hidden_dim, hidden_dim), jnp.float32),
        "b2": jnp.zeros((hidden_dim,), jnp.float32),
        "ln2_g": jnp.ones((hidden_dim,), jnp.float32),
        "ln2_b": jnp.zeros((hidden_dim,), jnp.float32),
        "w3": orth(k3, (hidden_dim, h2), jnp.float32),
        "b3": jnp.zeros((h2,), jnp.float32),
        "ln3_g": jnp.ones((h2,), jnp.float32),
        "ln3_b": jnp.zeros((h2,), jnp.float32),
    }


def prepare_params(raw, matmul_dtype=jnp.bfloat16):
    """Compile-time prep: fold LN_in's affine into fc1 and pack the small
    per-feature vectors; matmul weights cast to bf16 (f32 MXU accumulation
    happens in-kernel), elementwise params stay f32."""
    # (z*g + b) @ W1 + b1  ==  z @ (g[:,None]*W1) + (b @ W1 + b1)
    w1 = raw["ln_in_g"][:, None] * raw["w1"]
    b1 = raw["b1"] + raw["ln_in_b"] @ raw["w1"]
    vec_h = jnp.stack([b1, raw["ln1_g"], raw["ln1_b"],
                       raw["b2"], raw["ln2_g"], raw["ln2_b"]], axis=0)
    vec_o = jnp.stack([raw["b3"], raw["ln3_g"], raw["ln3_b"]], axis=0)
    return {
        "w1": w1.astype(matmul_dtype),
        "w2": raw["w2"].astype(matmul_dtype),
        "w3": raw["w3"].astype(matmul_dtype),
        "vec_h": vec_h.astype(jnp.float32),
        "vec_o": vec_o.astype(jnp.float32),
    }


def ppo_forward_ref(state, params):
    """Pure-JAX reference with the identical bf16-operand / f32-accumulate recipe."""
    x = state.astype(jnp.bfloat16).astype(jnp.float32)
    inv_d = jnp.float32(1.0 / x.shape[-1])
    mu = jnp.sum(x, -1, keepdims=True) * inv_d
    var = jnp.maximum(jnp.sum(x * x, -1, keepdims=True) * inv_d - mu * mu, 0.0)
    x = (x - mu) * jax.lax.rsqrt(var + LN_EPS)

    vh, vo = params["vec_h"], params["vec_o"]

    def dense(x, w, b):
        return jnp.dot(x.astype(w.dtype), w, preferred_element_type=jnp.float32) + b

    x = jnp.tanh(_layer_norm(dense(x, params["w1"], vh[0:1]), vh[1:2], vh[2:3]))
    x = jnp.tanh(_layer_norm(dense(x, params["w2"], vh[3:4]), vh[4:5], vh[5:6]))
    x = jnp.tanh(_layer_norm(dense(x, params["w3"], vo[0:1]), vo[1:2], vo[2:3]))
    return x


if __name__ == "__main__":
    # Small but vreg/MXU-aligned shapes: feature dims are multiples of 128 so
    # vregs / MXU tiles are fully populated and the output store is lane-dense.
    batch, state_dim, hidden_dim = 256, 128, 256

    key = jax.random.PRNGKey(0)
    k_params, k_state, k_state2 = jax.random.split(key, 3)
    raw = init_raw_params(k_params, state_dim, hidden_dim)
    params = prepare_params(raw)

    # Case 1: B <= tile_b -> single block, no grid overhead.
    state = jax.random.normal(k_state, (batch, state_dim), jnp.float32)
    fwd = jax.jit(functools.partial(ppo_forward, tile_b=512))
    out = jax.block_until_ready(fwd(state, params))
    ref = ppo_forward_ref(state, params)
    assert out.shape == (batch, hidden_dim // 2)
    assert jnp.allclose(out, ref.astype(out.dtype), atol=2e-3, rtol=2e-3), \
        "mismatch vs JAX reference (single-tile path)"

    # Case 2: B not a multiple of tile_b -> cdiv grid, partial last block handled
    # by Pallas masked writes (no host-side padding copy).
    b2 = 384
    state2 = jax.random.normal(k_state2, (b2, state_dim), jnp.float32)
    fwd2 = jax.jit(functools.partial(ppo_forward, tile_b=256))
    out2 = jax.block_until_ready(fwd2(state2, params))
    ref2 = ppo_forward_ref(state2, params)
    assert out2.shape == (b2, hidden_dim // 2)
    assert jnp.allclose(out2, ref2.astype(out2.dtype), atol=2e-3, rtol=2e-3), \
        "mismatch vs JAX reference (partial-block path)"

    # TODO(synk): get_action's Normal.rsample / log_prob / entropy and get_value's
    # critic head are not part of forward(); training-mode dropout (PRNG masking)
    # is also not implemented (forward here is eval-mode, dropout = identity).
    print("KERNEL_OK")
</pallas_src>

<mosaic_0001>
module attributes {stable_mosaic.version = 11 : i64} {
  func.func @ppo_forward_kernel(%arg0: i32, %arg1: memref<256x128xbf16, #tpu.memory_space<vmem>>, %arg2: memref<128x256xbf16, #tpu.memory_space<vmem>>, %arg3: memref<256x256xbf16, #tpu.memory_space<vmem>>, %arg4: memref<256x128xbf16, #tpu.memory_space<vmem>>, %arg5: memref<6x256xf32, #tpu.memory_space<vmem>>, %arg6: memref<3x128xf32, #tpu.memory_space<vmem>>, %arg7: memref<256x128xf32, #tpu.memory_space<vmem>>) attributes {dimension_semantics = [#tpu.dimension_semantics<parallel>], iteration_bounds = array<i64: 1>, scalar_prefetch = 0 : i64, scratch_operands = 0 : i64, tpu.core_type = #tpu.core_type<tc>, window_params = [{transform_indices = @transform_0, window_bounds = array<i64: 256, 128>}, {pipeline_mode = #tpu.pipeline_mode<synchronous>, transform_indices = @transform_1, window_bounds = array<i64: 128, 256>}, {pipeline_mode = #tpu.pipeline_mode<synchronous>, transform_indices = @transform_2, window_bounds = array<i64: 256, 256>}, {pipeline_mode = #tpu.pipeline_mode<synchronous>, transform_indices = @transform_3, window_bounds = array<i64: 256, 128>}, {pipeline_mode = #tpu.pipeline_mode<synchronous>, transform_indices = @transform_4, window_bounds = array<i64: 6, 256>}, {pipeline_mode = #tpu.pipeline_mode<synchronous>, transform_indices = @transform_5, window_bounds = array<i64: 3, 128>}, {transform_indices = @transform_6, window_bounds = array<i64: 256, 128>}]} {
    %c0 = arith.constant 0 : index
    %c0_0 = arith.constant 0 : index
    %0 = vector.load %arg1[%c0, %c0_0] : memref<256x128xbf16, #tpu.memory_space<vmem>>, vector<256x128xbf16>
    %1 = arith.extf %0 : vector<256x128xbf16> to vector<256x128xf32>
    %cst = arith.constant dense<0.000000e+00> : vector<256xf32>
    %2 = vector.multi_reduction <add>, %1, %cst [1] : vector<256x128xf32> to vector<256xf32>
    %3 = vector.shape_cast %2 : vector<256xf32> to vector<256x1xf32>
    %4 = arith.mulf %1, %1 : vector<256x128xf32>
    %cst_1 = arith.constant dense<0.000000e+00> : vector<256xf32>
    %5 = vector.multi_reduction <add>, %4, %cst_1 [1] : vector<256x128xf32> to vector<256xf32>
    %6 = vector.shape_cast %5 : vector<256xf32> to vector<256x1xf32>
    %cst_2 = arith.constant 7.812500e-03 : f32
    %7 = vector.broadcast %cst_2 : f32 to vector<256x1xf32>
    %8 = arith.mulf %3, %7 : vector<256x1xf32>
    %cst_3 = arith.constant 7.812500e-03 : f32
    %9 = vector.broadcast %cst_3 : f32 to vector<256x1xf32>
    %10 = arith.mulf %6, %9 : vector<256x1xf32>
    %11 = arith.mulf %8, %8 : vector<256x1xf32>
    %12 = arith.subf %10, %11 : vector<256x1xf32>
    %cst_4 = arith.constant 0.000000e+00 : f32
    %13 = vector.broadcast %cst_4 : f32 to vector<256x1xf32>
    %14 = arith.maximumf %12, %13 : vector<256x1xf32>
    %15 = vector.broadcast %8 : vector<256x1xf32> to vector<256x128xf32>
    %16 = arith.subf %1, %15 : vector<256x128xf32>
    %cst_5 = arith.constant 9.99999974E-6 : f32
    %17 = vector.broadcast %cst_5 : f32 to vector<256x1xf32>
    %18 = arith.addf %14, %17 : vector<256x1xf32>
    %19 = math.rsqrt %18 : vector<256x1xf32>
    %20 = vector.broadcast %19 : vector<256x1xf32> to vector<256x128xf32>
    %21 = arith.mulf %16, %20 : vector<256x128xf32>
    %c0_6 = arith.constant 0 : index
    %c0_7 = arith.constant 0 : index
    %22 = vector.load %arg5[%c0_6, %c0_7] : memref<6x256xf32, #tpu.memory_space<vmem>>, vector<6x256xf32>
    %c0_8 = arith.constant 0 : index
    %c0_9 = arith.constant 0 : index
    %23 = vector.load %arg6[%c0_8, %c0_9] : memref<3x128xf32, #tpu.memory_space<vmem>>, vector<3x128xf32>
    %24 = arith.truncf %21 : vector<256x128xf32> to vector<256x128xbf16>
    %c0_10 = arith.constant 0 : index
    %c0_11 = arith.constant 0 : index
    %25 = vector.load %arg2[%c0_10, %c0_11] : memref<128x256xbf16, #tpu.memory_space<vmem>>, vector<128x256xbf16>
    %cst_12 = arith.constant dense<0.000000e+00> : vector<256x256xf32>
    %26 = tpu.matmul %24, %25, %cst_12 {dimension_numbers = #tpu.dot_dimension_numbers<[1], [0], [0], [1], [0, 0, 1, 1], [], []>} : vector<256x128xbf16>, vector<128x256xbf16>, vector<256x256xf32> -> vector<256x256xf32>
    %27 = vector.extract_strided_slice %22 {offsets = [0, 0], sizes = [1, 256], strides = [1, 1]} : vector<6x256xf32> to vector<1x256xf32>
    %28 = vector.broadcast %27 : vector<1x256xf32> to vector<256x256xf32>
    %29 = arith.addf %26, %28 : vector<256x256xf32>
    %30 = vector.extract_strided_slice %22 {offsets = [1, 0], sizes = [1, 256], strides = [1, 1]} : vector<6x256xf32> to vector<1x256xf32>
    %31 = vector.extract_strided_slice %22 {offsets = [2, 0], sizes = [1, 256], strides = [1, 1]} : vector<6x256xf32> to vector<1x256xf32>
    %cst_13 = arith.constant dense<0.000000e+00> : vector<256xf32>
    %32 = vector.multi_reduction <add>, %29, %cst_13 [1] : vector<256x256xf32> to vector<256xf32>
    %33 = vector.shape_cast %32 : vector<256xf32> to vector<256x1xf32>
    %34 = arith.mulf %29, %29 : vector<256x256xf32>
    %cst_14 = arith.constant dense<0.000000e+00> : vector<256xf32>
    %35 = vector.multi_reduction <add>, %34, %cst_14 [1] : vector<256x256xf32> to vector<256xf32>
    %36 = vector.shape_cast %35 : vector<256xf32> to vector<256x1xf32>
    %cst_15 = arith.constant 3.906250e-03 : f32
    %37 = vector.broadcast %cst_15 : f32 to vector<256x1xf32>
    %38 = arith.mulf %33, %37 : vector<256x1xf32>
    %cst_16 = arith.constant 3.906250e-03 : f32
    %39 = vector.broadcast %cst_16 : f32 to vector<256x1xf32>
    %40 = arith.mulf %36, %39 : vector<256x1xf32>
    %41 = arith.mulf %38, %38 : vector<256x1xf32>
    %42 = arith.subf %40, %41 : vector<256x1xf32>
    %cst_17 = arith.constant 0.000000e+00 : f32
    %43 = vector.broadcast %cst_17 : f32 to vector<256x1xf32>
    %44 = arith.maximumf %42, %43 : vector<256x1xf32>
    %45 = vector.broadcast %38 : vector<256x1xf32> to vector<256x256xf32>
    %46 = arith.subf %29, %45 : vector<256x256xf32>
    %cst_18 = arith.constant 9.99999974E-6 : f32
    %47 = vector.broadcast %cst_18 : f32 to vector<256x1xf32>
    %48 = arith.addf %44, %47 : vector<256x1xf32>
    %49 = math.rsqrt %48 : vector<256x1xf32>
    %50 = vector.broadcast %49 : vector<256x1xf32> to vector<256x256xf32>
    %51 = arith.mulf %46, %50 : vector<256x256xf32>
    %52 = vector.broadcast %30 : vector<1x256xf32> to vector<256x256xf32>
    %53 = arith.mulf %51, %52 : vector<256x256xf32>
    %54 = vector.broadcast %31 : vector<1x256xf32> to vector<256x256xf32>
    %55 = arith.addf %53, %54 : vector<256x256xf32>
    %56 = math.tanh %55 : vector<256x256xf32>
    %57 = arith.truncf %56 : vector<256x256xf32> to vector<256x256xbf16>
    %c0_19 = arith.constant 0 : index
    %c0_20 = arith.constant 0 : index
    %58 = vector.load %arg3[%c0_19, %c0_20] : memref<256x256xbf16, #tpu.memory_space<vmem>>, vector<256x256xbf16>
    %cst_21 = arith.constant dense<0.000000e+00> : vector<256x256xf32>
    %59 = tpu.matmul %57, %58, %cst_21 {dimension_numbers = #tpu.dot_dimension_numbers<[1], [0], [0], [1], [0, 0, 1, 1], [], []>} : vector<256x256xbf16>, vector<256x256xbf16>, vector<256x256xf32> -> vector<256x256xf32>
    %60 = vector.extract_strided_slice %22 {offsets = [3, 0], sizes = [1, 256], strides = [1, 1]} : vector<6x256xf32> to vector<1x256xf32>
    %61 = vector.broadcast %60 : vector<1x256xf32> to vector<256x256xf32>
    %62 = arith.addf %59, %61 : vector<256x256xf32>
    %63 = vector.extract_strided_slice %22 {offsets = [4, 0], sizes = [1, 256], strides = [1, 1]} : vector<6x256xf32> to vector<1x256xf32>
    %64 = vector.extract_strided_slice %22 {offsets = [5, 0], sizes = [1, 256], strides = [1, 1]} : vector<6x256xf32> to vector<1x256xf32>
    %cst_22 = arith.constant dense<0.000000e+00> : vector<256xf32>
    %65 = vector.multi_reduction <add>, %62, %cst_22 [1] : vector<256x256xf32> to vector<256xf32>
    %66 = vector.shape_cast %65 : vector<256xf32> to vector<256x1xf32>
    %67 = arith.mulf %62, %62 : vector<256x256xf32>
    %cst_23 = arith.constant dense<0.000000e+00> : vector<256xf32>
    %68 = vector.multi_reduction <add>, %67, %cst_23 [1] : vector<256x256xf32> to vector<256xf32>
    %69 = vector.shape_cast %68 : vector<256xf32> to vector<256x1xf32>
    %cst_24 = arith.constant 3.906250e-03 : f32
    %70 = vector.broadcast %cst_24 : f32 to vector<256x1xf32>
    %71 = arith.mulf %66, %70 : vector<256x1xf32>
    %cst_25 = arith.constant 3.906250e-03 : f32
    %72 = vector.broadcast %cst_25 : f32 to vector<256x1xf32>
    %73 = arith.mulf %69, %72 : vector<256x1xf32>
    %74 = arith.mulf %71, %71 : vector<256x1xf32>
    %75 = arith.subf %73, %74 : vector<256x1xf32>
    %cst_26 = arith.constant 0.000000e+00 : f32
    %76 = vector.broadcast %cst_26 : f32 to vector<256x1xf32>
    %77 = arith.maximumf %75, %76 : vector<256x1xf32>
    %78 = vector.broadcast %71 : vector<256x1xf32> to vector<256x256xf32>
    %79 = arith.subf %62, %78 : vector<256x256xf32>
    %cst_27 = arith.constant 9.99999974E-6 : f32
    %80 = vector.broadcast %cst_27 : f32 to vector<256x1xf32>
    %81 = arith.addf %77, %80 : vector<256x1xf32>
    %82 = math.rsqrt %81 : vector<256x1xf32>
    %83 = vector.broadcast %82 : vector<256x1xf32> to vector<256x256xf32>
    %84 = arith.mulf %79, %83 : vector<256x256xf32>
    %85 = vector.broadcast %63 : vector<1x256xf32> to vector<256x256xf32>
    %86 = arith.mulf %84, %85 : vector<256x256xf32>
    %87 = vector.broadcast %64 : vector<1x256xf32> to vector<256x256xf32>
    %88 = arith.addf %86, %87 : vector<256x256xf32>
    %89 = math.tanh %88 : vector<256x256xf32>
    %90 = arith.truncf %89 : vector<256x256xf32> to vector<256x256xbf16>
    %c0_28 = arith.constant 0 : index
    %c0_29 = arith.constant 0 : index
    %91 = vector.load %arg4[%c0_28, %c0_29] : memref<256x128xbf16, #tpu.memory_space<vmem>>, vector<256x128xbf16>
    %cst_30 = arith.constant dense<0.000000e+00> : vector<256x128xf32>
    %92 = tpu.matmul %90, %91, %cst_30 {dimension_numbers = #tpu.dot_dimension_numbers<[1], [0], [0], [1], [0, 0, 1, 1], [], []>} : vector<256x256xbf16>, vector<256x128xbf16>, vector<256x128xf32> -> vector<256x128xf32>
    %93 = vector.extract_strided_slice %23 {offsets = [0, 0], sizes = [1, 128], strides = [1, 1]} : vector<3x128xf32> to vector<1x128xf32>
    %94 = vector.broadcast %93 : vector<1x128xf32> to vector<256x128xf32>
    %95 = arith.addf %92, %94 : vector<256x128xf32>
    %96 = vector.extract_strided_slice %23 {offsets = [1, 0], sizes = [1, 128], strides = [1, 1]} : vector<3x128xf32> to vector<1x128xf32>
    %97 = vector.extract_strided_slice %23 {offsets = [2, 0], sizes = [1, 128], strides = [1, 1]} : vector<3x128xf32> to vector<1x128xf32>
    %cst_31 = arith.constant dense<0.000000e+00> : vector<256xf32>
    %98 = vector.multi_reduction <add>, %95, %cst_31 [1] : vector<256x128xf32> to vector<256xf32>
    %99 = vector.shape_cast %98 : vector<256xf32> to vector<256x1xf32>
    %100 = arith.mulf %95, %95 : vector<256x128xf32>
    %cst_32 = arith.constant dense<0.000000e+00> : vector<256xf32>
    %101 = vector.multi_reduction <add>, %100, %cst_32 [1] : vector<256x128xf32> to vector<256xf32>
    %102 = vector.shape_cast %101 : vector<256xf32> to vector<256x1xf32>
    %cst_33 = arith.constant 7.812500e-03 : f32
    %103 = vector.broadcast %cst_33 : f32 to vector<256x1xf32>
    %104 = arith.mulf %99, %103 : vector<256x1xf32>
    %cst_34 = arith.constant 7.812500e-03 : f32
    %105 = vector.broadcast %cst_34 : f32 to vector<256x1xf32>
    %106 = arith.mulf %102, %105 : vector<256x1xf32>
    %107 = arith.mulf %104, %104 : vector<256x1xf32>
    %108 = arith.subf %106, %107 : vector<256x1xf32>
    %cst_35 = arith.constant 0.000000e+00 : f32
    %109 = vector.broadcast %cst_35 : f32 to vector<256x1xf32>
    %110 = arith.maximumf %108, %109 : vector<256x1xf32>
    %111 = vector.broadcast %104 : vector<256x1xf32> to vector<256x128xf32>
    %112 = arith.subf %95, %111 : vector<256x128xf32>
    %cst_36 = arith.constant 9.99999974E-6 : f32
    %113 = vector.broadcast %cst_36 : f32 to vector<256x1xf32>
    %114 = arith.addf %110, %113 : vector<256x1xf32>
    %115 = math.rsqrt %114 : vector<256x1xf32>
    %116 = vector.broadcast %115 : vector<256x1xf32> to vector<256x128xf32>
    %117 = arith.mulf %112, %116 : vector<256x128xf32>
    %118 = vector.broadcast %96 : vector<1x128xf32> to vector<256x128xf32>
    %119 = arith.mulf %117, %118 : vector<256x128xf32>
    %120 = vector.broadcast %97 : vector<1x128xf32> to vector<256x128xf32>
    %121 = arith.addf %119, %120 : vector<256x128xf32>
    %122 = math.tanh %121 : vector<256x128xf32>
    %c0_37 = arith.constant 0 : index
    %c0_38 = arith.constant 0 : index
    %123 = vector.load %arg7[%c0_37, %c0_38] : memref<256x128xf32, #tpu.memory_space<vmem>>, vector<256x128xf32>
    tpu.vector_store %arg7[%c0_37, %c0_38], %122 {strides = array<i32>} : memref<256x128xf32, #tpu.memory_space<vmem>>, vector<256x128xf32>,
    return
  }
  func.func @transform_0(%arg0: i32) -> (i32, i32) {
    %c0_i32 = arith.constant 0 : i32
    %c0_i32_0 = arith.constant 0 : i32
    return %arg0, %c0_i32 : i32, i32
  }
  func.func @transform_1(%arg0: i32) -> (i32, i32) {
    %c0_i32 = arith.constant 0 : i32
    %c0_i32_0 = arith.constant 0 : i32
    %c0_i32_1 = arith.constant 0 : i32
    return %c0_i32, %c0_i32_0 : i32, i32
  }
  func.func @transform_2(%arg0: i32) -> (i32, i32) {
    %c0_i32 = arith.constant 0 : i32
    %c0_i32_0 = arith.constant 0 : i32
    %c0_i32_1 = arith.constant 0 : i32
    return %c0_i32, %c0_i32_0 : i32, i32
  }
  func.func @transform_3(%arg0: i32) -> (i32, i32) {
    %c0_i32 = arith.constant 0 : i32
    %c0_i32_0 = arith.constant 0 : i32
    %c0_i32_1 = arith.constant 0 : i32
    return %c0_i32, %c0_i32_0 : i32, i32
  }
  func.func @transform_4(%arg0: i32) -> (i32, i32) {
    %c0_i32 = arith.constant 0 : i32
    %c0_i32_0 = arith.constant 0 : i32
    %c0_i32_1 = arith.constant 0 : i32
    return %c0_i32, %c0_i32_0 : i32, i32
  }
  func.func @transform_5(%arg0: i32) -> (i32, i32) {
    %c0_i32 = arith.constant 0 : i32
    %c0_i32_0 = arith.constant 0 : i32
    %c0_i32_1 = arith.constant 0 : i32
    return %c0_i32, %c0_i32_0 : i32, i32
  }
  func.func @transform_6(%arg0: i32) -> (i32, i32) {
    %c0_i32 = arith.constant 0 : i32
    %c0_i32_0 = arith.constant 0 : i32
    return %arg0, %c0_i32 : i32, i32
  }
}

</mosaic_0001>

<llo_original>
// kernel: ppo_forward.1
$region0: #{ppo_forward.1}
  #allocation0 [shape = 'u32[]', space=smem, size = 0x4, offset = 0x4, fixed_abs, tag = 'smem constant byte address 0x4 - core index']
  #allocation1 [shape = 'u32[144,128]{1,0:T(1,128)}', space=vmem, size = 0x12000, scoped, tag = 'internal scratch']
  %s0 = inlined_call_operand.vmem [shape: bf16[256,128], index: 0, kind: input, shape index: {}]
  %s1 = inlined_call_operand.vmem [shape: bf16[128,256], index: 1, kind: input, shape index: {}]
  %s2 = inlined_call_operand.vmem [shape: bf16[256,256], index: 2, kind: input, shape index: {}]
  %s3 = inlined_call_operand.hbm [shape: bf16[256,128], index: 3, kind: input, shape index: {}]
  %s4 = inlined_call_operand.hbm [shape: f32[6,256], index: 4, kind: input, shape index: {}]
  %s5 = inlined_call_operand.vmem [shape: f32[3,128], index: 5, kind: input, shape index: {}]
  %s6 = inlined_call_operand.hbm [shape: f32[256,128], index: 6, kind: output, shape index: {}]
  %s7 = sld [smem:[#allocation0]]
  $region42: #{ppo_forward.1} parent=0
    _
  %s9 = ssub.s32 1, %s7
  %s10 = scalar_select 0, %s9, %s7
  $region1: #{ppo_forward.1} parent=0
    #allocation2 [shape = 'u8[65536]{0}', space=vmem, size = 0x10000, scoped, tag = 'input window, operand 3, single buffered']
    #allocation3 [shape = 's32[1]{0}', space=sflag, size = 0x4, scoped, tag = 'scoped memory for ppo_forward.1']
    #allocation4 [shape = 's32[1]{0}', space=sflag, size = 0x4, scoped, tag = 'scoped memory for ppo_forward.1']
    #allocation5 [shape = 'u8[8192]{0}', space=vmem, size = 0x2000, scoped, tag = 'input window, operand 4, single buffered']
    #allocation6 [shape = 's32[1]{0}', space=sflag, size = 0x4, scoped, tag = 'scoped memory for ppo_forward.1']
    #allocation7 [shape = 'u8[131072]{0}', space=vmem, size = 0x20000, scoped, tag = 'output window, operand 0, single buffered']
    %11 = vsyncpa [#allocation3], 0
    %12 = vsyncpa [#allocation6], 0
    %13 = vsyncpa [#allocation4], 0
    // Predicated region
    $region2: #{ppo_forward.1} parent=1 // pred_check
      _
    $region3: #{ppo_forward.1} parent=1 // pred_check_branch
      %15 = sbr.rel (0) target = $region5
    $region4: #{ppo_forward.1} parent=1 // pred_region
      _
    $region5: #{ppo_forward.1} parent=1 // pred_fallthru
      _
    // Predicated region
    $region6: #{ppo_forward.1} parent=1 // pred_check
      _
    $region7: #{ppo_forward.1} parent=1 // pred_check_branch
      %17 = sbr.rel (0) target = $region9
    $region8: #{ppo_forward.1} parent=1 // pred_region
      _
    $region9: #{ppo_forward.1} parent=1 // pred_fallthru
      _
    // Predicated region
    $region10: #{ppo_forward.1} parent=1 // pred_check
      _
    $region11: #{ppo_forward.1} parent=1 // pred_check_branch
      %19 = sbr.rel (0) target = $region13
    $region12: #{ppo_forward.1} parent=1 // pred_region
      _
    $region13: #{ppo_forward.1} parent=1 // pred_fallthru
      _
    // Predicated region
    $region14: #{ppo_forward.1} parent=1 // pred_check
      _
    $region15: #{ppo_forward.1} parent=1 // pred_check_branch
      %21 = sbr.rel (0) target = $region17
    $region16: #{ppo_forward.1} parent=1 // pred_region
      %s23 = ssub.s32 2048, 2048
      %24 = vsyncadd [#allocation3], %s23
      %s25 = sshll.u32 [#allocation2], 4
      %s26 = int_to_ptr.vmem [resolvable:$true] %s25
      %31 = dma.hbm_to_vmem [thread:$0]  %s3, 2048, %s26, [#allocation3], 64, 64, 4
    $region17: #{ppo_forward.1} parent=1 // pred_fallthru
      _
    // Predicated region
    $region18: #{ppo_forward.1} parent=1 // pred_check
      _
    $region19: #{ppo_forward.1} parent=1 // pred_check_branch
      %33 = sbr.rel (0) target = $region21
    $region20: #{ppo_forward.1} parent=1 // pred_region
      %s35 = ssub.s32 256, 256
      %36 = vsyncadd [#allocation6], %s35
      %s38 = sshll.u32 [#allocation5], 4
      %s39 = int_to_ptr.vmem [resolvable:$true] %s38
      %41 = dma.hbm_to_vmem [thread:$0]  %s4, 256, %s39, [#allocation6]
    $region21: #{ppo_forward.1} parent=1 // pred_fallthru
      _
    // Predicated region
    $region22: #{ppo_forward.1} parent=1 // pred_check
      _
    $region23: #{ppo_forward.1} parent=1 // pred_check_branch
      %43 = sbr.rel (0) target = $region25
    $region24: #{ppo_forward.1} parent=1 // pred_region
      _
    $region25: #{ppo_forward.1} parent=1 // pred_fallthru
      _
    // Predicated region
    $region26: #{ppo_forward.1} parent=1 // pred_check
      _
    $region27: #{ppo_forward.1} parent=1 // pred_check_branch
      %45 = sbr.rel (0) target = $region29
    $region28: #{ppo_forward.1} parent=1 // pred_region
      %46 = dma.done [#allocation3], 2048
    $region29: #{ppo_forward.1} parent=1 // pred_fallthru
      _
    // Predicated region
    $region30: #{ppo_forward.1} parent=1 // pred_check
      _
    $region31: #{ppo_forward.1} parent=1 // pred_check_branch
      %48 = sbr.rel (0) target = $region33
    $region32: #{ppo_forward.1} parent=1 // pred_region
      %49 = dma.done [#allocation6], 256
    $region33: #{ppo_forward.1} parent=1 // pred_fallthru
      _
    %v51 = vld [vmem:[%s0] sm:$0xf]
    %v52 = vld [vmem:[%s0 + $0x4] sm:$0xf]
    %v53 = vld [vmem:[%s0 + $0x8] sm:$0xf]
    %v54 = vld [vmem:[%s0 + $0xc] sm:$0xf]
    %v55 = vld [vmem:[%s0 + $0x10] sm:$0xf]
    %v56 = vld [vmem:[%s0 + $0x14] sm:$0xf]
    %v57 = vld [vmem:[%s0 + $0x18] sm:$0xf]
    %v58 = vld [vmem:[%s0 + $0x1c] sm:$0xf]
    %v59 = vld [vmem:[%s0 + $0x20] sm:$0xf]
    %v60 = vld [vmem:[%s0 + $0x24] sm:$0xf]
    %v61 = vld [vmem:[%s0 + $0x28] sm:$0xf]
    %v62 = vld [vmem:[%s0 + $0x2c] sm:$0xf]
    %v63 = vld [vmem:[%s0 + $0x30] sm:$0xf]
    %v64 = vld [vmem:[%s0 + $0x34] sm:$0xf]
    %v65 = vld [vmem:[%s0 + $0x38] sm:$0xf]
    %v66 = vld [vmem:[%s0 + $0x3c] sm:$0xf]
    %v67 = vld [vmem:[%s0 + $0x40] sm:$0xf]
    %v68 = vld [vmem:[%s0 + $0x44] sm:$0xf]
    %v69 = vld [vmem:[%s0 + $0x48] sm:$0xf]
    %v70 = vld [vmem:[%s0 + $0x4c] sm:$0xf]
    %v71 = vld [vmem:[%s0 + $0x50] sm:$0xf]
    %v72 = vld [vmem:[%s0 + $0x54] sm:$0xf]
    %v73 = vld [vmem:[%s0 + $0x58] sm:$0xf]
    %v74 = vld [vmem:[%s0 + $0x5c] sm:$0xf]
    %v75 = vld [vmem:[%s0 + $0x60] sm:$0xf]
    %v76 = vld [vmem:[%s0 + $0x64] sm:$0xf]
    %v77 = vld [vmem:[%s0 + $0x68] sm:$0xf]
    %v78 = vld [vmem:[%s0 + $0x6c] sm:$0xf]
    %v79 = vld [vmem:[%s0 + $0x70] sm:$0xf]
    %v80 = vld [vmem:[%s0 + $0x74] sm:$0xf]
    %v81 = vld [vmem:[%s0 + $0x78] sm:$0xf]
    %v82 = vld [vmem:[%s0 + $0x7c] sm:$0xf]
    %v83 = vunpack.c.l.bf16 %v51
    %v84 = vunpack.c.l.bf16 %v52
    %v85 = vunpack.c.l.bf16 %v53
    %v86 = vunpack.c.l.bf16 %v54
    %v87 = vunpack.c.l.bf16 %v55
    %v88 = vunpack.c.l.bf16 %v56
    %v89 = vunpack.c.l.bf16 %v57
    %v90 = vunpack.c.l.bf16 %v58
    %v91 = vunpack.c.l.bf16 %v59
    %v92 = vunpack.c.l.bf16 %v60
    %v93 = vunpack.c.l.bf16 %v61
    %v94 = vunpack.c.l.bf16 %v62
    %v95 = vunpack.c.l.bf16 %v63
    %v96 = vunpack.c.l.bf16 %v64
    %v97 = vunpack.c.l.bf16 %v65
    %v98 = vunpack.c.l.bf16 %v66
    %v99 = vunpack.c.l.bf16 %v67
    %v100 = vunpack.c.l.bf16 %v68
    %v101 = vunpack.c.l.bf16 %v69
    %v102 = vunpack.c.l.bf16 %v70
    %v103 = vunpack.c.l.bf16 %v71
    %v104 = vunpack.c.l.bf16 %v72
    %v105 = vunpack.c.l.bf16 %v73
    %v106 = vunpack.c.l.bf16 %v74
    %v107 = vunpack.c.l.bf16 %v75
    %v108 = vunpack.c.l.bf16 %v76
    %v109 = vunpack.c.l.bf16 %v77
    %v110 = vunpack.c.l.bf16 %v78
    %v111 = vunpack.c.l.bf16 %v79
    %v112 = vunpack.c.l.bf16 %v80
    %v113 = vunpack.c.l.bf16 %v81
    %v114 = vunpack.c.l.bf16 %v82
    %115 = vadd.xlane.f32.xlu0 %v83
    %v116 = vpop.xlane.xlu0 %115
    %117 = vadd.xlane.f32.xlu0 %v84
    %v118 = vpop.xlane.xlu0 %117
    %119 = vadd.xlane.f32.xlu0 %v85
    %v120 = vpop.xlane.xlu0 %119
    %121 = vadd.xlane.f32.xlu0 %v86
    %v122 = vpop.xlane.xlu0 %121
    %123 = vadd.xlane.f32.xlu0 %v87
    %v124 = vpop.xlane.xlu0 %123
    %125 = vadd.xlane.f32.xlu0 %v88
    %v126 = vpop.xlane.xlu0 %125
    %127 = vadd.xlane.f32.xlu0 %v89
    %v128 = vpop.xlane.xlu0 %127
    %129 = vadd.xlane.f32.xlu0 %v90
    %v130 = vpop.xlane.xlu0 %129
    %131 = vadd.xlane.f32.xlu0 %v91
    %v132 = vpop.xlane.xlu0 %131
    %133 = vadd.xlane.f32.xlu0 %v92
    %v134 = vpop.xlane.xlu0 %133
    %135 = vadd.xlane.f32.xlu0 %v93
    %v136 = vpop.xlane.xlu0 %135
    %137 = vadd.xlane.f32.xlu0 %v94
    %v138 = vpop.xlane.xlu0 %137
    %139 = vadd.xlane.f32.xlu0 %v95
    %v140 = vpop.xlane.xlu0 %139
    %141 = vadd.xlane.f32.xlu0 %v96
    %v142 = vpop.xlane.xlu0 %141
    %143 = vadd.xlane.f32.xlu0 %v97
    %v144 = vpop.xlane.xlu0 %143
    %145 = vadd.xlane.f32.xlu0 %v98
    %v146 = vpop.xlane.xlu0 %145
    %147 = vadd.xlane.f32.xlu0 %v99
    %v148 = vpop.xlane.xlu0 %147
    %149 = vadd.xlane.f32.xlu0 %v100
    %v150 = vpop.xlane.xlu0 %149
    %151 = vadd.xlane.f32.xlu0 %v101
    %v152 = vpop.xlane.xlu0 %151
    %153 = vadd.xlane.f32.xlu0 %v102
    %v154 = vpop.xlane.xlu0 %153
    %155 = vadd.xlane.f32.xlu0 %v103
    %v156 = vpop.xlane.xlu0 %155
    %157 = vadd.xlane.f32.xlu0 %v104
    %v158 = vpop.xlane.xlu0 %157
    %159 = vadd.xlane.f32.xlu0 %v105
    %v160 = vpop.xlane.xlu0 %159
    %161 = vadd.xlane.f32.xlu0 %v106
    %v162 = vpop.xlane.xlu0 %161
    %163 = vadd.xlane.f32.xlu0 %v107
    %v164 = vpop.xlane.xlu0 %163
    %165 = vadd.xlane.f32.xlu0 %v108
    %v166 = vpop.xlane.xlu0 %165
    %167 = vadd.xlane.f32.xlu0 %v109
    %v168 = vpop.xlane.xlu0 %167
    %169 = vadd.xlane.f32.xlu0 %v110
    %v170 = vpop.xlane.xlu0 %169
    %171 = vadd.xlane.f32.xlu0 %v111
    %v172 = vpop.xlane.xlu0 %171
    %173 = vadd.xlane.f32.xlu0 %v112
    %v174 = vpop.xlane.xlu0 %173
    %175 = vadd.xlane.f32.xlu0 %v113
    %v176 = vpop.xlane.xlu0 %175
    %177 = vadd.xlane.f32.xlu0 %v114
    %v178 = vpop.xlane.xlu0 %177
    %v179 = vmul.f32 %v83, %v83
    %v180 = vmul.f32 %v84, %v84
    %v181 = vmul.f32 %v85, %v85
    %v182 = vmul.f32 %v86, %v86
    %v183 = vmul.f32 %v87, %v87
    %v184 = vmul.f32 %v88, %v88
    %v185 = vmul.f32 %v89, %v89
    %v186 = vmul.f32 %v90, %v90
    %v187 = vmul.f32 %v91, %v91
    %v188 = vmul.f32 %v92, %v92
    %v189 = vmul.f32 %v93, %v93
    %v190 = vmul.f32 %v94, %v94
    %v191 = vmul.f32 %v95, %v95
    %v192 = vmul.f32 %v96, %v96
    %v193 = vmul.f32 %v97, %v97
    %v194 = vmul.f32 %v98, %v98
    %v195 = vmul.f32 %v99, %v99
    %v196 = vmul.f32 %v100, %v100
    %v197 = vmul.f32 %v101, %v101
    %v198 = vmul.f32 %v102, %v102
    %v199 = vmul.f32 %v103, %v103
    %v200 = vmul.f32 %v104, %v104
    %v201 = vmul.f32 %v105, %v105
    %v202 = vmul.f32 %v106, %v106
    %v203 = vmul.f32 %v107, %v107
    %v204 = vmul.f32 %v108, %v108
    %v205 = vmul.f32 %v109, %v109
    %v206 = vmul.f32 %v110, %v110
    %v207 = vmul.f32 %v111, %v111
    %v208 = vmul.f32 %v112, %v112
    %v209 = vmul.f32 %v113, %v113
    %v210 = vmul.f32 %v114, %v114
    %211 = vadd.xlane.f32.xlu0 %v179
    %v212 = vpop.xlane.xlu0 %211
    %213 = vadd.xlane.f32.xlu0 %v180
    %v214 = vpop.xlane.xlu0 %213
    %215 = vadd.xlane.f32.xlu0 %v181
    %v216 = vpop.xlane.xlu0 %215
    %217 = vadd.xlane.f32.xlu0 %v182
    %v218 = vpop.xlane.xlu0 %217
    %219 = vadd.xlane.f32.xlu0 %v183
    %v220 = vpop.xlane.xlu0 %219
    %221 = vadd.xlane.f32.xlu0 %v184
    %v222 = vpop.xlane.xlu0 %221
    %223 = vadd.xlane.f32.xlu0 %v185
    %v224 = vpop.xlane.xlu0 %223
    %225 = vadd.xlane.f32.xlu0 %v186
    %v226 = vpop.xlane.xlu0 %225
    %227 = vadd.xlane.f32.xlu0 %v187
    %v228 = vpop.xlane.xlu0 %227
    %229 = vadd.xlane.f32.xlu0 %v188
    %v230 = vpop.xlane.xlu0 %229
    %231 = vadd.xlane.f32.xlu0 %v189
    %v232 = vpop.xlane.xlu0 %231
    %233 = vadd.xlane.f32.xlu0 %v190
    %v234 = vpop.xlane.xlu0 %233
    %235 = vadd.xlane.f32.xlu0 %v191
    %v236 = vpop.xlane.xlu0 %235
    %237 = vadd.xlane.f32.xlu0 %v192
    %v238 = vpop.xlane.xlu0 %237
    %239 = vadd.xlane.f32.xlu0 %v193
    %v240 = vpop.xlane.xlu0 %239
    %241 = vadd.xlane.f32.xlu0 %v194
    %v242 = vpop.xlane.xlu0 %241
    %243 = vadd.xlane.f32.xlu0 %v195
    %v244 = vpop.xlane.xlu0 %243
    %245 = vadd.xlane.f32.xlu0 %v196
    %v246 = vpop.xlane.xlu0 %245
    %247 = vadd.xlane.f32.xlu0 %v197
    %v248 = vpop.xlane.xlu0 %247
    %249 = vadd.xlane.f32.xlu0 %v198
    %v250 = vpop.xlane.xlu0 %249
    %251 = vadd.xlane.f32.xlu0 %v199
    %v252 = vpop.xlane.xlu0 %251
    %253 = vadd.xlane.f32.xlu0 %v200
    %v254 = vpop.xlane.xlu0 %253
    %255 = vadd.xlane.f32.xlu0 %v201
    %v256 = vpop.xlane.xlu0 %255
    %257 = vadd.xlane.f32.xlu0 %v202
    %v258 = vpop.xlane.xlu0 %257
    %259 = vadd.xlane.f32.xlu0 %v203
    %v260 = vpop.xlane.xlu0 %259
    %261 = vadd.xlane.f32.xlu0 %v204
    %v262 = vpop.xlane.xlu0 %261
    %263 = vadd.xlane.f32.xlu0 %v205
    %v264 = vpop.xlane.xlu0 %263
    %265 = vadd.xlane.f32.xlu0 %v206
    %v266 = vpop.xlane.xlu0 %265
    %267 = vadd.xlane.f32.xlu0 %v207
    %v268 = vpop.xlane.xlu0 %267
    %269 = vadd.xlane.f32.xlu0 %v208
    %v270 = vpop.xlane.xlu0 %269
    %271 = vadd.xlane.f32.xlu0 %v209
    %v272 = vpop.xlane.xlu0 %271
    %273 = vadd.xlane.f32.xlu0 %v210
    %v274 = vpop.xlane.xlu0 %273
    %v275 = vmul.f32 %v116, 0.0078125
    %v276 = vmul.f32 %v118, 0.0078125
    %v277 = vmul.f32 %v120, 0.0078125
    %v278 = vmul.f32 %v122, 0.0078125
    %v279 = vmul.f32 %v124, 0.0078125
    %v280 = vmul.f32 %v126, 0.0078125
    %v281 = vmul.f32 %v128, 0.0078125
    %v282 = vmul.f32 %v130, 0.0078125
    %v283 = vmul.f32 %v132, 0.0078125
    %v284 = vmul.f32 %v134, 0.0078125
    %v285 = vmul.f32 %v136, 0.0078125
    %v286 = vmul.f32 %v138, 0.0078125
    %v287 = vmul.f32 %v140, 0.0078125
    %v288 = vmul.f32 %v142, 0.0078125
    %v289 = vmul.f32 %v144, 0.0078125
    %v290 = vmul.f32 %v146, 0.0078125
    %v291 = vmul.f32 %v148, 0.0078125
    %v292 = vmul.f32 %v150, 0.0078125
    %v293 = vmul.f32 %v152, 0.0078125
    %v294 = vmul.f32 %v154, 0.0078125
    %v295 = vmul.f32 %v156, 0.0078125
    %v296 = vmul.f32 %v158, 0.0078125
    %v297 = vmul.f32 %v160, 0.0078125
    %v298 = vmul.f32 %v162, 0.0078125
    %v299 = vmul.f32 %v164, 0.0078125
    %v300 = vmul.f32 %v166, 0.0078125
    %v301 = vmul.f32 %v168, 0.0078125
    %v302 = vmul.f32 %v170, 0.0078125
    %v303 = vmul.f32 %v172, 0.0078125
    %v304 = vmul.f32 %v174, 0.0078125
    %v305 = vmul.f32 %v176, 0.0078125
    %v306 = vmul.f32 %v178, 0.0078125
    %v307 = vmul.f32 %v212, 0.0078125
    %v308 = vmul.f32 %v214, 0.0078125
    %v309 = vmul.f32 %v216, 0.0078125
    %v310 = vmul.f32 %v218, 0.0078125
    %v311 = vmul.f32 %v220, 0.0078125
    %v312 = vmul.f32 %v222, 0.0078125
    %v313 = vmul.f32 %v224, 0.0078125
    %v314 = vmul.f32 %v226, 0.0078125
    %v315 = vmul.f32 %v228, 0.0078125
    %v316 = vmul.f32 %v230, 0.0078125
    %v317 = vmul.f32 %v232, 0.0078125
    %v318 = vmul.f32 %v234, 0.0078125
    %v319 = vmul.f32 %v236, 0.0078125
    %v320 = vmul.f32 %v238, 0.0078125
    %v321 = vmul.f32 %v240, 0.0078125
    %v322 = vmul.f32 %v242, 0.0078125
    %v323 = vmul.f32 %v244, 0.0078125
    %v324 = vmul.f32 %v246, 0.0078125
    %v325 = vmul.f32 %v248, 0.0078125
    %v326 = vmul.f32 %v250, 0.0078125
    %v327 = vmul.f32 %v252, 0.0078125
    %v328 = vmul.f32 %v254, 0.0078125
    %v329 = vmul.f32 %v256, 0.0078125
    %v330 = vmul.f32 %v258, 0.0078125
    %v331 = vmul.f32 %v260, 0.0078125
    %v332 = vmul.f32 %v262, 0.0078125
    %v333 = vmul.f32 %v264, 0.0078125
    %v334 = vmul.f32 %v266, 0.0078125
    %v335 = vmul.f32 %v268, 0.0078125
    %v336 = vmul.f32 %v270, 0.0078125
    %v337 = vmul.f32 %v272, 0.0078125
    %v338 = vmul.f32 %v274, 0.0078125
    %v339 = vmul.f32 %v275, %v275
    %v340 = vmul.f32 %v276, %v276
    %v341 = vmul.f32 %v277, %v277
    %v342 = vmul.f32 %v278, %v278
    %v343 = vmul.f32 %v279, %v279
    %v344 = vmul.f32 %v280, %v280
    %v345 = vmul.f32 %v281, %v281
    %v346 = vmul.f32 %v282, %v282
    %v347 = vmul.f32 %v283, %v283
    %v348 = vmul.f32 %v284, %v284
    %v349 = vmul.f32 %v285, %v285
    %v350 = vmul.f32 %v286, %v286
    %v351 = vmul.f32 %v287, %v287
    %v352 = vmul.f32 %v288, %v288
    %v353 = vmul.f32 %v289, %v289
    %v354 = vmul.f32 %v290, %v290
    %v355 = vmul.f32 %v291, %v291
    %v356 = vmul.f32 %v292, %v292
    %v357 = vmul.f32 %v293, %v293
    %v358 = vmul.f32 %v294, %v294
    %v359 = vmul.f32 %v295, %v295
    %v360 = vmul.f32 %v296, %v296
    %v361 = vmul.f32 %v297, %v297
    %v362 = vmul.f32 %v298, %v298
    %v363 = vmul.f32 %v299, %v299
    %v364 = vmul.f32 %v300, %v300
    %v365 = vmul.f32 %v301, %v301
    %v366 = vmul.f32 %v302, %v302
    %v367 = vmul.f32 %v303, %v303
    %v368 = vmul.f32 %v304, %v304
    %v369 = vmul.f32 %v305, %v305
    %v370 = vmul.f32 %v306, %v306
    %v371 = vsub.f32 %v307, %v339
    %v372 = vsub.f32 %v308, %v340
    %v373 = vsub.f32 %v309, %v341
    %v374 = vsub.f32 %v310, %v342
    %v375 = vsub.f32 %v311, %v343
    %v376 = vsub.f32 %v312, %v344
    %v377 = vsub.f32 %v313, %v345
    %v378 = vsub.f32 %v314, %v346
    %v379 = vsub.f32 %v315, %v347
    %v380 = vsub.f32 %v316, %v348
    %v381 = vsub.f32 %v317, %v349
    %v382 = vsub.f32 %v318, %v350
    %v383 = vsub.f32 %v319, %v351
    %v384 = vsub.f32 %v320, %v352
    %v385 = vsub.f32 %v321, %v353
    %v386 = vsub.f32 %v322, %v354
    %v387 = vsub.f32 %v323, %v355
    %v388 = vsub.f32 %v324, %v356
    %v389 = vsub.f32 %v325, %v357
    %v390 = vsub.f32 %v326, %v358
    %v391 = vsub.f32 %v327, %v359
    %v392 = vsub.f32 %v328, %v360
    %v393 = vsub.f32 %v329, %v361
    %v394 = vsub.f32 %v330, %v362
    %v395 = vsub.f32 %v331, %v363
    %v396 = vsub.f32 %v332, %v364
    %v397 = vsub.f32 %v333, %v365
    %v398 = vsub.f32 %v334, %v366
    %v399 = vsub.f32 %v335, %v367
    %v400 = vsub.f32 %v336, %v368
    %v401 = vsub.f32 %v337, %v369
    %v402 = vsub.f32 %v338, %v370
    %v403 = vmax.f32 %v371, 0.0
    %v404 = vmax.f32 %v372, 0.0
    %v405 = vmax.f32 %v373, 0.0
    %v406 = vmax.f32 %v374, 0.0
    %v407 = vmax.f32 %v375, 0.0
    %v408 = vmax.f32 %v376, 0.0
    %v409 = vmax.f32 %v377, 0.0
    %v410 = vmax.f32 %v378, 0.0
    %v411 = vmax.f32 %v379, 0.0
    %v412 = vmax.f32 %v380, 0.0
    %v413 = vmax.f32 %v381, 0.0
    %v414 = vmax.f32 %v382, 0.0
    %v415 = vmax.f32 %v383, 0.0
    %v416 = vmax.f32 %v384, 0.0
    %v417 = vmax.f32 %v385, 0.0
    %v418 = vmax.f32 %v386, 0.0
    %v419 = vmax.f32 %v387, 0.0
    %v420 = vmax.f32 %v388, 0.0
    %v421 = vmax.f32 %v389, 0.0
    %v422 = vmax.f32 %v390, 0.0
    %v423 = vmax.f32 %v391, 0.0
    %v424 = vmax.f32 %v392, 0.0
    %v425 = vmax.f32 %v393, 0.0
    %v426 = vmax.f32 %v394, 0.0
    %v427 = vmax.f32 %v395, 0.0
    %v428 = vmax.f32 %v396, 0.0
    %v429 = vmax.f32 %v397, 0.0
    %v430 = vmax.f32 %v398, 0.0
    %v431 = vmax.f32 %v399, 0.0
    %v432 = vmax.f32 %v400, 0.0
    %v433 = vmax.f32 %v401, 0.0
    %v434 = vmax.f32 %v402, 0.0
    %v435 = vsub.f32 %v83, %v275
    %v436 = vsub.f32 %v84, %v276
    %v437 = vsub.f32 %v85, %v277
    %v438 = vsub.f32 %v86, %v278
    %v439 = vsub.f32 %v87, %v279
    %v440 = vsub.f32 %v88, %v280
    %v441 = vsub.f32 %v89, %v281
    %v442 = vsub.f32 %v90, %v282
    %v443 = vsub.f32 %v91, %v283
    %v444 = vsub.f32 %v92, %v284
    %v445 = vsub.f32 %v93, %v285
    %v446 = vsub.f32 %v94, %v286
    %v447 = vsub.f32 %v95, %v287
    %v448 = vsub.f32 %v96, %v288
    %v449 = vsub.f32 %v97, %v289
    %v450 = vsub.f32 %v98, %v290
    %v451 = vsub.f32 %v99, %v291
    %v452 = vsub.f32 %v100, %v292
    %v453 = vsub.f32 %v101, %v293
    %v454 = vsub.f32 %v102, %v294
    %v455 = vsub.f32 %v103, %v295
    %v456 = vsub.f32 %v104, %v296
    %v457 = vsub.f32 %v105, %v297
    %v458 = vsub.f32 %v106, %v298
    %v459 = vsub.f32 %v107, %v299
    %v460 = vsub.f32 %v108, %v300
    %v461 = vsub.f32 %v109, %v301
    %v462 = vsub.f32 %v110, %v302
    %v463 = vsub.f32 %v111, %v303
    %v464 = vsub.f32 %v112, %v304
    %v465 = vsub.f32 %v113, %v305
    %v466 = vsub.f32 %v114, %v306
    %v467 = vadd.f32 %v403, 1e-05
    %v468 = vadd.f32 %v404, 1e-05
    %v469 = vadd.f32 %v405, 1e-05
    %v470 = vadd.f32 %v406, 1e-05
    %v471 = vadd.f32 %v407, 1e-05
    %v472 = vadd.f32 %v408, 1e-05
    %v473 = vadd.f32 %v409, 1e-05
    %v474 = vadd.f32 %v410, 1e-05
    %v475 = vadd.f32 %v411, 1e-05
    %v476 = vadd.f32 %v412, 1e-05
    %v477 = vadd.f32 %v413, 1e-05
    %v478 = vadd.f32 %v414, 1e-05
    %v479 = vadd.f32 %v415, 1e-05
    %v480 = vadd.f32 %v416, 1e-05
    %v481 = vadd.f32 %v417, 1e-05
    %v482 = vadd.f32 %v418, 1e-05
    %v483 = vadd.f32 %v419, 1e-05
    %v484 = vadd.f32 %v420, 1e-05
    %v485 = vadd.f32 %v421, 1e-05
    %v486 = vadd.f32 %v422, 1e-05
    %v487 = vadd.f32 %v423, 1e-05
    %v488 = vadd.f32 %v424, 1e-05
    %v489 = vadd.f32 %v425, 1e-05
    %v490 = vadd.f32 %v426, 1e-05
    %v491 = vadd.f32 %v427, 1e-05
    %v492 = vadd.f32 %v428, 1e-05
    %v493 = vadd.f32 %v429, 1e-05
    %v494 = vadd.f32 %v430, 1e-05
    %v495 = vadd.f32 %v431, 1e-05
    %v496 = vadd.f32 %v432, 1e-05
    %v497 = vadd.f32 %v433, 1e-05
    %v498 = vadd.f32 %v434, 1e-05
    %v499 = vrsqrt.pop %v467
    %v500 = vrsqrt.pop %v468
    %v501 = vrsqrt.pop %v469
    %v502 = vrsqrt.pop %v470
    %v503 = vrsqrt.pop %v471
    %v504 = vrsqrt.pop %v472
    %v505 = vrsqrt.pop %v473
    %v506 = vrsqrt.pop %v474
    %v507 = vrsqrt.pop %v475
    %v508 = vrsqrt.pop %v476
    %v509 = vrsqrt.pop %v477
    %v510 = vrsqrt.pop %v478
    %v511 = vrsqrt.pop %v479
    %v512 = vrsqrt.pop %v480
    %v513 = vrsqrt.pop %v481
    %v514 = vrsqrt.pop %v482
    %v515 = vrsqrt.pop %v483
    %v516 = vrsqrt.pop %v484
    %v517 = vrsqrt.pop %v485
    %v518 = vrsqrt.pop %v486
    %v519 = vrsqrt.pop %v487
    %v520 = vrsqrt.pop %v488
    %v521 = vrsqrt.pop %v489
    %v522 = vrsqrt.pop %v490
    %v523 = vrsqrt.pop %v491
    %v524 = vrsqrt.pop %v492
    %v525 = vrsqrt.pop %v493
    %v526 = vrsqrt.pop %v494
    %v527 = vrsqrt.pop %v495
    %v528 = vrsqrt.pop %v496
    %v529 = vrsqrt.pop %v497
    %v530 = vrsqrt.pop %v498
    %v531 = vmul.f32 %v435, %v499
    %v532 = vmul.f32 %v436, %v500
    %v533 = vmul.f32 %v437, %v501
    %v534 = vmul.f32 %v438, %v502
    %v535 = vmul.f32 %v439, %v503
    %v536 = vmul.f32 %v440, %v504
    %v537 = vmul.f32 %v441, %v505
    %v538 = vmul.f32 %v442, %v506
    %v539 = vmul.f32 %v443, %v507
    %v540 = vmul.f32 %v444, %v508
    %v541 = vmul.f32 %v445, %v509
    %v542 = vmul.f32 %v446, %v510
    %v543 = vmul.f32 %v447, %v511
    %v544 = vmul.f32 %v448, %v512
    %v545 = vmul.f32 %v449, %v513
    %v546 = vmul.f32 %v450, %v514
    %v547 = vmul.f32 %v451, %v515
    %v548 = vmul.f32 %v452, %v516
    %v549 = vmul.f32 %v453, %v517
    %v550 = vmul.f32 %v454, %v518
    %v551 = vmul.f32 %v455, %v519
    %v552 = vmul.f32 %v456, %v520
    %v553 = vmul.f32 %v457, %v521
    %v554 = vmul.f32 %v458, %v522
    %v555 = vmul.f32 %v459, %v523
    %v556 = vmul.f32 %v460, %v524
    %v557 = vmul.f32 %v461, %v525
    %v558 = vmul.f32 %v462, %v526
    %v559 = vmul.f32 %v463, %v527
    %v560 = vmul.f32 %v464, %v528
    %v561 = vmul.f32 %v465, %v529
    %v562 = vmul.f32 %v466, %v530
    %v563 = vld [vmem:[#allocation5] sm:$0x3f]
    %v564 = vld [vmem:[#allocation5 + $0x8] sm:$0x3f]
    %v565 = vld [vmem:[%s5] sm:$0x7]
    %v566 = vpack.c.bf16 %v532, %v531
    %v567 = vpack.c.bf16 %v534, %v533
    %v568 = vpack.c.bf16 %v536, %v535
    %v569 = vpack.c.bf16 %v538, %v537
    %v570 = vpack.c.bf16 %v540, %v539
    %v571 = vpack.c.bf16 %v542, %v541
    %v572 = vpack.c.bf16 %v544, %v543
    %v573 = vpack.c.bf16 %v546, %v545
    %v574 = vpack.c.bf16 %v548, %v547
    %v575 = vpack.c.bf16 %v550, %v549
    %v576 = vpack.c.bf16 %v552, %v551
    %v577 = vpack.c.bf16 %v554, %v553
    %v578 = vpack.c.bf16 %v556, %v555
    %v579 = vpack.c.bf16 %v558, %v557
    %v580 = vpack.c.bf16 %v560, %v559
    %v581 = vpack.c.bf16 %v562, %v561
    %v582 = vld [vmem:[%s1] sm:$0xff]
    %v583 = vld [vmem:[%s1 + $0x8] sm:$0xff]
    %v584 = vld [vmem:[%s1 + $0x10] sm:$0xff]
    %v585 = vld [vmem:[%s1 + $0x18] sm:$0xff]
    %v586 = vld [vmem:[%s1 + $0x20] sm:$0xff]
    %v587 = vld [vmem:[%s1 + $0x28] sm:$0xff]
    %v588 = vld [vmem:[%s1 + $0x30] sm:$0xff]
    %v589 = vld [vmem:[%s1 + $0x38] sm:$0xff]
    %v590 = vld [vmem:[%s1 + $0x40] sm:$0xff]
    %v591 = vld [vmem:[%s1 + $0x48] sm:$0xff]
    %v592 = vld [vmem:[%s1 + $0x50] sm:$0xff]
    %v593 = vld [vmem:[%s1 + $0x58] sm:$0xff]
    %v594 = vld [vmem:[%s1 + $0x60] sm:$0xff]
    %v595 = vld [vmem:[%s1 + $0x68] sm:$0xff]
    %v596 = vld [vmem:[%s1 + $0x70] sm:$0xff]
    %v597 = vld [vmem:[%s1 + $0x78] sm:$0xff]
    %v598 = vlaneseq
    %v599 = vshrl.u32 %v598, 7
    %v600 = vsub.s32 0, %v599
    %v601 = vrot.slane %v563, %v600
    %v602 = vlaneseq
    %v603 = vshrl.u32 %v602, 7
    %v604 = vsub.s32 0, %v603
    %v605 = vrot.slane %v564, %v604
    %v622 = vunpack.c.l.b16 %v582
    %v623 = vunpack.c.h.b16 %v582
    %v624 = vunpack.c.l.b16 %v583
    %v625 = vunpack.c.h.b16 %v583
    %v626 = vunpack.c.l.b16 %v584
    %v627 = vunpack.c.h.b16 %v584
    %v628 = vunpack.c.l.b16 %v585
    %v629 = vunpack.c.h.b16 %v585
    %v630 = vunpack.c.l.b16 %v586
    %v631 = vunpack.c.h.b16 %v586
    %v632 = vunpack.c.l.b16 %v587
    %v633 = vunpack.c.h.b16 %v587
    %v634 = vunpack.c.l.b16 %v588
    %v635 = vunpack.c.h.b16 %v588
    %v636 = vunpack.c.l.b16 %v589
    %v637 = vunpack.c.h.b16 %v589
    %v638 = vunpack.c.l.b16 %v590
    %v639 = vunpack.c.h.b16 %v590
    %v640 = vunpack.c.l.b16 %v591
    %v641 = vunpack.c.h.b16 %v591
    %v642 = vunpack.c.l.b16 %v592
    %v643 = vunpack.c.h.b16 %v592
    %v644 = vunpack.c.l.b16 %v593
    %v645 = vunpack.c.h.b16 %v593
    %v646 = vunpack.c.l.b16 %v594
    %v647 = vunpack.c.h.b16 %v594
    %v648 = vunpack.c.l.b16 %v595
    %v649 = vunpack.c.h.b16 %v595
    %v650 = vunpack.c.l.b16 %v596
    %v651 = vunpack.c.h.b16 %v596
    %v652 = vunpack.c.l.b16 %v597
    %v653 = vunpack.c.h.b16 %v597
    %v654 = vpack.c.b16 %v624, %v622
    %v655 = vpack.c.b16 %v625, %v623
    %v656 = vpack.c.b16 %v628, %v626
    %v657 = vpack.c.b16 %v629, %v627
    %v658 = vpack.c.b16 %v632, %v630
    %v659 = vpack.c.b16 %v633, %v631
    %v660 = vpack.c.b16 %v636, %v634
    %v661 = vpack.c.b16 %v637, %v635
    %v662 = vpack.c.b16 %v640, %v638
    %v663 = vpack.c.b16 %v641, %v639
    %v664 = vpack.c.b16 %v644, %v642
    %v665 = vpack.c.b16 %v645, %v643
    %v666 = vpack.c.b16 %v648, %v646
    %v667 = vpack.c.b16 %v649, %v647
    %v668 = vpack.c.b16 %v652, %v650
    %v669 = vpack.c.b16 %v653, %v651
    %686 = vmatprep.subr.bf16.mxu0 %v655
    %687 = vmatpush1.bf16.msra.mxu0 %v654
    %688 = vmatprep.subr.bf16.mxu0 %v657
    %689 = vmatpush1.bf16.msra.mxu0 %v656
    %690 = vmatprep.subr.bf16.mxu0 %v659
    %691 = vmatpush1.bf16.msra.mxu0 %v658
    %692 = vmatprep.subr.bf16.mxu0 %v661
    %693 = vmatpush1.bf16.msra.mxu0 %v660
    %694 = vmatprep.subr.bf16.mxu0 %v663
    %695 = vmatpush1.bf16.msra.mxu0 %v662
    %696 = vmatprep.subr.bf16.mxu0 %v665
    %697 = vmatpush1.bf16.msra.mxu0 %v664
    %698 = vmatprep.subr.bf16.mxu0 %v667
    %699 = vmatpush1.bf16.msra.mxu0 %v666
    %700 = vmatprep.subr.bf16.mxu0 %v669
    %701 = vmatpush1.bf16.msra.mxu0 %v668
    %702 = vmatprep.subr.bf16.mxu0 0
    %703 = vmatpush1.bf16.msra.mxu0 0
    %704 = vmatprep.subr.bf16.mxu0 0
    %705 = vmatpush1.bf16.msra.mxu0 0
    %706 = vmatprep.subr.bf16.mxu0 0
    %707 = vmatpush1.bf16.msra.mxu0 0
    %708 = vmatprep.subr.bf16.mxu0 0
    %709 = vmatpush1.bf16.msra.mxu0 0
    %710 = vmatprep.subr.bf16.mxu0 0
    %711 = vmatpush1.bf16.msra.mxu0 0
    %712 = vmatprep.subr.bf16.mxu0 0
    %713 = vmatpush1.bf16.msra.mxu0 0
    %714 = vmatprep.subr.bf16.mxu0 0
    %715 = vmatpush1.bf16.msra.mxu0 0
    %716 = vmatprep.subr.bf16.mxu0 0
    %717 = vmatpush1.bf16.msra.mxu0 0
    %718 = vmatprep.mubr.bf16.mxu0 0
    %719 = vmatmul.mubr.bf16.gmra.mrb[0].mxu0 %v566
    %v720 = vpop.f32.mrb[0].mxu0
    %v721 = vadd.f32 %v601, %v720
    %v722 = vpop.f32.mrb[0].mxu0
    %v723 = vadd.f32 %v605, %v722
    %v724 = vpop.f32.mrb[0].mxu0
    %v725 = vadd.f32 %v601, %v724
    %v726 = vpop.f32.mrb[0].mxu0
    %v727 = vadd.f32 %v605, %v726
    %728 = vmatprep.mubr.bf16.mxu0 0
    %729 = vmatmul.mubr.bf16.gmra.mrb[0].mxu0 %v567
    %v730 = vpop.f32.mrb[0].mxu0
    %v731 = vadd.f32 %v601, %v730
    %v732 = vpop.f32.mrb[0].mxu0
    %v733 = vadd.f32 %v605, %v732
    %v734 = vpop.f32.mrb[0].mxu0
    %v735 = vadd.f32 %v601, %v734
    %v736 = vpop.f32.mrb[0].mxu0
    %v737 = vadd.f32 %v605, %v736
    %738 = vmatprep.mubr.bf16.mxu0 0
    %739 = vmatmul.mubr.bf16.gmra.mrb[0].mxu0 %v568
    %v740 = vpop.f32.mrb[0].mxu0
    %v741 = vadd.f32 %v601, %v740
    %v742 = vpop.f32.mrb[0].mxu0
    %v743 = vadd.f32 %v605, %v742
    %v744 = vpop.f32.mrb[0].mxu0
    %v745 = vadd.f32 %v601, %v744
    %v746 = vpop.f32.mrb[0].mxu0
    %v747 = vadd.f32 %v605, %v746
    %748 = vmatprep.mubr.bf16.mxu0 0
    %749 = vmatmul.mubr.bf16.gmra.mrb[0].mxu0 %v569
    %v750 = vpop.f32.mrb[0].mxu0
    %v751 = vadd.f32 %v601, %v750
    %v752 = vpop.f32.mrb[0].mxu0
    %v753 = vadd.f32 %v605, %v752
    %v754 = vpop.f32.mrb[0].mxu0
    %v755 = vadd.f32 %v601, %v754
    %v756 = vpop.f32.mrb[0].mxu0
    %v757 = vadd.f32 %v605, %v756
    %758 = vmatprep.mubr.bf16.mxu0 0
    %759 = vmatmul.mubr.bf16.gmra.mrb[0].mxu0 %v570
    %v760 = vpop.f32.mrb[0].mxu0
    %v761 = vadd.f32 %v601, %v760
    %v762 = vpop.f32.mrb[0].mxu0
    %v763 = vadd.f32 %v605, %v762
    %v764 = vpop.f32.mrb[0].mxu0
    %v765 = vadd.f32 %v601, %v764
    %v766 = vpop.f32.mrb[0].mxu0
    %v767 = vadd.f32 %v605, %v766
    %768 = vmatprep.mubr.bf16.mxu0 0
    %769 = vmatmul.mubr.bf16.gmra.mrb[0].mxu0 %v571
    %v770 = vpop.f32.mrb[0].mxu0
    %v771 = vadd.f32 %v601, %v770
    %v772 = vpop.f32.mrb[0].mxu0
    %v773 = vadd.f32 %v605, %v772
    %v774 = vpop.f32.mrb[0].mxu0
    %v775 = vadd.f32 %v601, %v774
    %v776 = vpop.f32.mrb[0].mxu0
    %v777 = vadd.f32 %v605, %v776
    %778 = vmatprep.mubr.bf16.mxu0 0
    %779 = vmatmul.mubr.bf16.gmra.mrb[0].mxu0 %v572
    %v780 = vpop.f32.mrb[0].mxu0
    %v781 = vadd.f32 %v601, %v780
    %v782 = vpop.f32.mrb[0].mxu0
    %v783 = vadd.f32 %v605, %v782
    %v784 = vpop.f32.mrb[0].mxu0
    %v785 = vadd.f32 %v601, %v784
    %v786 = vpop.f32.mrb[0].mxu0
    %v787 = vadd.f32 %v605, %v786
    %788 = vmatprep.mubr.bf16.mxu0 0
    %789 = vmatmul.mubr.bf16.gmra.mrb[0].mxu0 %v573
    %v790 = vpop.f32.mrb[0].mxu0
    %v791 = vadd.f32 %v601, %v790
    %v792 = vpop.f32.mrb[0].mxu0
    %v793 = vadd.f32 %v605, %v792
    %v794 = vpop.f32.mrb[0].mxu0
    %v795 = vadd.f32 %v601, %v794
    %v796 = vpop.f32.mrb[0].mxu0
    %v797 = vadd.f32 %v605, %v796
    %798 = vmatprep.mubr.bf16.mxu0 0
    %799 = vmatmul.mubr.bf16.gmra.mrb[0].mxu0 %v574
    %v800 = vpop.f32.mrb[0].mxu0
    %v801 = vadd.f32 %v601, %v800
    %v802 = vpop.f32.mrb[0].mxu0
    %v803 = vadd.f32 %v605, %v802
    %v804 = vpop.f32.mrb[0].mxu0
    %v805 = vadd.f32 %v601, %v804
    %v806 = vpop.f32.mrb[0].mxu0
    %v807 = vadd.f32 %v605, %v806
    %808 = vmatprep.mubr.bf16.mxu0 0
    %809 = vmatmul.mubr.bf16.gmra.mrb[0].mxu0 %v575
    %v810 = vpop.f32.mrb[0].mxu0
    %v811 = vadd.f32 %v601, %v810
    %v812 = vpop.f32.mrb[0].mxu0
    %v813 = vadd.f32 %v605, %v812
    %v814 = vpop.f32.mrb[0].mxu0
    %v815 = vadd.f32 %v601, %v814
    %v816 = vpop.f32.mrb[0].mxu0
    %v817 = vadd.f32 %v605, %v816
    %818 = vmatprep.mubr.bf16.mxu0 0
    %819 = vmatmul.mubr.bf16.gmra.mrb[0].mxu0 %v576
    %v820 = vpop.f32.mrb[0].mxu0
    %v821 = vadd.f32 %v601, %v820
    %v822 = vpop.f32.mrb[0].mxu0
    %v823 = vadd.f32 %v605, %v822
    %v824 = vpop.f32.mrb[0].mxu0
    %v825 = vadd.f32 %v601, %v824
    %v826 = vpop.f32.mrb[0].mxu0
    %v827 = vadd.f32 %v605, %v826
    %828 = vmatprep.mubr.bf16.mxu0 0
    %829 = vmatmul.mubr.bf16.gmra.mrb[0].mxu0 %v577
    %v830 = vpop.f32.mrb[0].mxu0
    %v831 = vadd.f32 %v601, %v830
    %v832 = vpop.f32.mrb[0].mxu0
    %v833 = vadd.f32 %v605, %v832
    %v834 = vpop.f32.mrb[0].mxu0
    %v835 = vadd.f32 %v601, %v834
    %v836 = vpop.f32.mrb[0].mxu0
    %v837 = vadd.f32 %v605, %v836
    %838 = vmatprep.mubr.bf16.mxu0 0
    %839 = vmatmul.mubr.bf16.gmra.mrb[0].mxu0 %v578
    %v840 = vpop.f32.mrb[0].mxu0
    %v841 = vadd.f32 %v601, %v840
    %v842 = vpop.f32.mrb[0].mxu0
    %v843 = vadd.f32 %v605, %v842
    %v844 = vpop.f32.mrb[0].mxu0
    %v845 = vadd.f32 %v601, %v844
    %v846 = vpop.f32.mrb[0].mxu0
    %v847 = vadd.f32 %v605, %v846
    %848 = vmatprep.mubr.bf16.mxu0 0
    %849 = vmatmul.mubr.bf16.gmra.mrb[0].mxu0 %v579
    %v850 = vpop.f32.mrb[0].mxu0
    %v851 = vadd.f32 %v601, %v850
    %v852 = vpop.f32.mrb[0].mxu0
    %v853 = vadd.f32 %v605, %v852
    %v854 = vpop.f32.mrb[0].mxu0
    %v855 = vadd.f32 %v601, %v854
    %v856 = vpop.f32.mrb[0].mxu0
    %v857 = vadd.f32 %v605, %v856
    %858 = vmatprep.mubr.bf16.mxu0 0
    %859 = vmatmul.mubr.bf16.gmra.mrb[0].mxu0 %v580
    %v860 = vpop.f32.mrb[0].mxu0
    %v861 = vadd.f32 %v601, %v860
    %v862 = vpop.f32.mrb[0].mxu0
    %v863 = vadd.f32 %v605, %v862
    %v864 = vpop.f32.mrb[0].mxu0
    %v865 = vadd.f32 %v601, %v864
    %v866 = vpop.f32.mrb[0].mxu0
    %v867 = vadd.f32 %v605, %v866
    %868 = vmatprep.mubr.bf16.mxu0 0
    %869 = vmatmul.mubr.bf16.gmra.mrb[0].mxu0 %v581
    %v870 = vpop.f32.mrb[0].mxu0
    %v871 = vadd.f32 %v601, %v870
    %v872 = vpop.f32.mrb[0].mxu0
    %v873 = vadd.f32 %v605, %v872
    %v874 = vpop.f32.mrb[0].mxu0
    %v875 = vadd.f32 %v601, %v874
    %v876 = vpop.f32.mrb[0].mxu0
    %v877 = vadd.f32 %v605, %v876
    %878 = vdwg.mxu0
    %v879 = vadd.f32 %v721, %v723
    %880 = vadd.xlane.f32.xlu0 %v879
    %v881 = vpop.xlane.xlu0 %880
    %v882 = vadd.f32 %v725, %v727
    %883 = vadd.xlane.f32.xlu0 %v882
    %v884 = vpop.xlane.xlu0 %883
    %v885 = vadd.f32 %v731, %v733
    %886 = vadd.xlane.f32.xlu0 %v885
    %v887 = vpop.xlane.xlu0 %886
    %v888 = vadd.f32 %v735, %v737
    %889 = vadd.xlane.f32.xlu0 %v888
    %v890 = vpop.xlane.xlu0 %889
    %v891 = vadd.f32 %v741, %v743
    %892 = vadd.xlane.f32.xlu0 %v891
    %v893 = vpop.xlane.xlu0 %892
    %v894 = vadd.f32 %v745, %v747
    %895 = vadd.xlane.f32.xlu0 %v894
    %v896 = vpop.xlane.xlu0 %895
    %v897 = vadd.f32 %v751, %v753
    %898 = vadd.xlane.f32.xlu0 %v897
    %v899 = vpop.xlane.xlu0 %898
    %v900 = vadd.f32 %v755, %v757
    %901 = vadd.xlane.f32.xlu0 %v900
    %v902 = vpop.xlane.xlu0 %901
    %v903 = vadd.f32 %v761, %v763
    %904 = vadd.xlane.f32.xlu0 %v903
    %v905 = vpop.xlane.xlu0 %904
    %v906 = vadd.f32 %v765, %v767
    %907 = vadd.xlane.f32.xlu0 %v906
    %v908 = vpop.xlane.xlu0 %907
    %v909 = vadd.f32 %v771, %v773
    %910 = vadd.xlane.f32.xlu0 %v909
    %v911 = vpop.xlane.xlu0 %910
    %v912 = vadd.f32 %v775, %v777
    %913 = vadd.xlane.f32.xlu0 %v912
    %v914 = vpop.xlane.xlu0 %913
    %v915 = vadd.f32 %v781, %v783
    %916 = vadd.xlane.f32.xlu0 %v915
    %v917 = vpop.xlane.xlu0 %916
    %v918 = vadd.f32 %v785, %v787
    %919 = vadd.xlane.f32.xlu0 %v918
    %v920 = vpop.xlane.xlu0 %919
    %v921 = vadd.f32 %v791, %v793
    %922 = vadd.xlane.f32.xlu0 %v921
    %v923 = vpop.xlane.xlu0 %922
    %v924 = vadd.f32 %v795, %v797
    %925 = vadd.xlane.f32.xlu0 %v924
    %v926 = vpop.xlane.xlu0 %925
    %v927 = vadd.f32 %v801, %v803
    %928 = vadd.xlane.f32.xlu0 %v927
    %v929 = vpop.xlane.xlu0 %928
    %v930 = vadd.f32 %v805, %v807
    %931 = vadd.xlane.f32.xlu0 %v930
    %v932 = vpop.xlane.xlu0 %931
    %v933 = vadd.f32 %v811, %v813
    %934 = vadd.xlane.f32.xlu0 %v933
    %v935 = vpop.xlane.xlu0 %934
    %v936 = vadd.f32 %v815, %v817
    %937 = vadd.xlane.f32.xlu0 %v936
    %v938 = vpop.xlane.xlu0 %937
    %v939 = vadd.f32 %v821, %v823
    %940 = vadd.xlane.f32.xlu0 %v939
    %v941 = vpop.xlane.xlu0 %940
    %v942 = vadd.f32 %v825, %v827
    %943 = vadd.xlane.f32.xlu0 %v942
    %v944 = vpop.xlane.xlu0 %943
    %v945 = vadd.f32 %v831, %v833
    %946 = vadd.xlane.f32.xlu0 %v945
    %v947 = vpop.xlane.xlu0 %946
    %v948 = vadd.f32 %v835, %v837
    %949 = vadd.xlane.f32.xlu0 %v948
    %v950 = vpop.xlane.xlu0 %949
    %v951 = vadd.f32 %v841, %v843
    %952 = vadd.xlane.f32.xlu0 %v951
    %v953 = vpop.xlane.xlu0 %952
    %v954 = vadd.f32 %v845, %v847
    %955 = vadd.xlane.f32.xlu0 %v954
    %v956 = vpop.xlane.xlu0 %955
    %v957 = vadd.f32 %v851, %v853
    %958 = vadd.xlane.f32.xlu0 %v957
    %v959 = vpop.xlane.xlu0 %958
    %v960 = vadd.f32 %v855, %v857
    %961 = vadd.xlane.f32.xlu0 %v960
    %v962 = vpop.xlane.xlu0 %961
    %v963 = vadd.f32 %v861, %v863
    %964 = vadd.xlane.f32.xlu0 %v963
    %v965 = vpop.xlane.xlu0 %964
    %v966 = vadd.f32 %v865, %v867
    %967 = vadd.xlane.f32.xlu0 %v966
    %v968 = vpop.xlane.xlu0 %967
    %v969 = vadd.f32 %v871, %v873
    %970 = vadd.xlane.f32.xlu0 %v969
    %v971 = vpop.xlane.xlu0 %970
    %v972 = vadd.f32 %v875, %v877
    %973 = vadd.xlane.f32.xlu0 %v972
    %v974 = vpop.xlane.xlu0 %973
    %v975 = vmul.f32 %v721, %v721
    %v976 = vmul.f32 %v723, %v723
    %v977 = vmul.f32 %v725, %v725
    %v978 = vmul.f32 %v727, %v727
    %v979 = vmul.f32 %v731, %v731
    %v980 = vmul.f32 %v733, %v733
    %v981 = vmul.f32 %v735, %v735
    %v982 = vmul.f32 %v737, %v737
    %v983 = vmul.f32 %v741, %v741
    %v984 = vmul.f32 %v743, %v743
    %v985 = vmul.f32 %v745, %v745
    %v986 = vmul.f32 %v747, %v747
    %v987 = vmul.f32 %v751, %v751
    %v988 = vmul.f32 %v753, %v753
    %v989 = vmul.f32 %v755, %v755
    %v990 = vmul.f32 %v757, %v757
    %v991 = vmul.f32 %v761, %v761
    %v992 = vmul.f32 %v763, %v763
    %v993 = vmul.f32 %v765, %v765
    %v994 = vmul.f32 %v767, %v767
    %v995 = vmul.f32 %v771, %v771
    %v996 = vmul.f32 %v773, %v773
    %v997 = vmul.f32 %v775, %v775
    %v998 = vmul.f32 %v777, %v777
    %v999 = vmul.f32 %v781, %v781
    %v1000 = vmul.f32 %v783, %v783
    %v1001 = vmul.f32 %v785, %v785
    %v1002 = vmul.f32 %v787, %v787
    %v1003 = vmul.f32 %v791, %v791
    %v1004 = vmul.f32 %v793, %v793
    %v1005 = vmul.f32 %v795, %v795
    %v1006 = vmul.f32 %v797, %v797
    %v1007 = vmul.f32 %v801, %v801
    %v1008 = vmul.f32 %v803, %v803
    %v1009 = vmul.f32 %v805, %v805
    %v1010 = vmul.f32 %v807, %v807
    %v1011 = vmul.f32 %v811, %v811
    %v1012 = vmul.f32 %v813, %v813
    %v1013 = vmul.f32 %v815, %v815
    %v1014 = vmul.f32 %v817, %v817
    %v1015 = vmul.f32 %v821, %v821
    %v1016 = vmul.f32 %v823, %v823
    %v1017 = vmul.f32 %v825, %v825
    %v1018 = vmul.f32 %v827, %v827
    %v1019 = vmul.f32 %v831, %v831
    %v1020 = vmul.f32 %v833, %v833
    %v1021 = vmul.f32 %v835, %v835
    %v1022 = vmul.f32 %v837, %v837
    %v1023 = vmul.f32 %v841, %v841
    %v1024 = vmul.f32 %v843, %v843
    %v1025 = vmul.f32 %v845, %v845
    %v1026 = vmul.f32 %v847, %v847
    %v1027 = vmul.f32 %v851, %v851
    %v1028 = vmul.f32 %v853, %v853
    %v1029 = vmul.f32 %v855, %v855
    %v1030 = vmul.f32 %v857, %v857
    %v1031 = vmul.f32 %v861, %v861
    %v1032 = vmul.f32 %v863, %v863
    %v1033 = vmul.f32 %v865, %v865
    %v1034 = vmul.f32 %v867, %v867
    %v1035 = vmul.f32 %v871, %v871
    %v1036 = vmul.f32 %v873, %v873
    %v1037 = vmul.f32 %v875, %v875
    %v1038 = vmul.f32 %v877, %v877
    %v1039 = vadd.f32 %v975, %v976
    %1040 = vadd.xlane.f32.xlu0 %v1039
    %v1041 = vpop.xlane.xlu0 %1040
    %v1042 = vadd.f32 %v977, %v978
    %1043 = vadd.xlane.f32.xlu0 %v1042
    %v1044 = vpop.xlane.xlu0 %1043
    %v1045 = vadd.f32 %v979, %v980
    %1046 = vadd.xlane.f32.xlu0 %v1045
    %v1047 = vpop.xlane.xlu0 %1046
    %v1048 = vadd.f32 %v981, %v982
    %1049 = vadd.xlane.f32.xlu0 %v1048
    %v1050 = vpop.xlane.xlu0 %1049
    %v1051 = vadd.f32 %v983, %v984
    %1052 = vadd.xlane.f32.xlu0 %v1051
    %v1053 = vpop.xlane.xlu0 %1052
    %v1054 = vadd.f32 %v985, %v986
    %1055 = vadd.xlane.f32.xlu0 %v1054
    %v1056 = vpop.xlane.xlu0 %1055
    %v1057 = vadd.f32 %v987, %v988
    %1058 = vadd.xlane.f32.xlu0 %v1057
    %v1059 = vpop.xlane.xlu0 %1058
    %v1060 = vadd.f32 %v989, %v990
    %1061 = vadd.xlane.f32.xlu0 %v1060
    %v1062 = vpop.xlane.xlu0 %1061
    %v1063 = vadd.f32 %v991, %v992
    %1064 = vadd.xlane.f32.xlu0 %v1063
    %v1065 = vpop.xlane.xlu0 %1064
    %v1066 = vadd.f32 %v993, %v994
    %1067 = vadd.xlane.f32.xlu0 %v1066
    %v1068 = vpop.xlane.xlu0 %1067
    %v1069 = vadd.f32 %v995, %v996
    %1070 = vadd.xlane.f32.xlu0 %v1069
    %v1071 = vpop.xlane.xlu0 %1070
    %v1072 = vadd.f32 %v997, %v998
    %1073 = vadd.xlane.f32.xlu0 %v1072
    %v1074 = vpop.xlane.xlu0 %1073
    %v1075 = vadd.f32 %v999, %v1000
    %1076 = vadd.xlane.f32.xlu0 %v1075
    %v1077 = vpop.xlane.xlu0 %1076
    %v1078 = vadd.f32 %v1001, %v1002
    %1079 = vadd.xlane.f32.xlu0 %v1078
    %v1080 = vpop.xlane.xlu0 %1079
    %v1081 = vadd.f32 %v1003, %v1004
    %1082 = vadd.xlane.f32.xlu0 %v1081
    %v1083 = vpop.xlane.xlu0 %1082
    %v1084 = vadd.f32 %v1005, %v1006
    %1085 = vadd.xlane.f32.xlu0 %v1084
    %v1086 = vpop.xlane.xlu0 %1085
    %v1087 = vadd.f32 %v1007, %v1008
    %1088 = vadd.xlane.f32.xlu0 %v1087
    %v1089 = vpop.xlane.xlu0 %1088
    %v1090 = vadd.f32 %v1009, %v1010
    %1091 = vadd.xlane.f32.xlu0 %v1090
    %v1092 = vpop.xlane.xlu0 %1091
    %v1093 = vadd.f32 %v1011, %v1012
    %1094 = vadd.xlane.f32.xlu0 %v1093
    %v1095 = vpop.xlane.xlu0 %1094
    %v1096 = vadd.f32 %v1013, %v1014
    %1097 = vadd.xlane.f32.xlu0 %v1096
    %v1098 = vpop.xlane.xlu0 %1097
    %v1099 = vadd.f32 %v1015, %v1016
    %1100 = vadd.xlane.f32.xlu0 %v1099
    %v1101 = vpop.xlane.xlu0 %1100
    %v1102 = vadd.f32 %v1017, %v1018
    %1103 = vadd.xlane.f32.xlu0 %v1102
    %v1104 = vpop.xlane.xlu0 %1103
    %v1105 = vadd.f32 %v1019, %v1020
    %1106 = vadd.xlane.f32.xlu0 %v1105
    %v1107 = vpop.xlane.xlu0 %1106
    %v1108 = vadd.f32 %v1021, %v1022
    %1109 = vadd.xlane.f32.xlu0 %v1108
    %v1110 = vpop.xlane.xlu0 %1109
    %v1111 = vadd.f32 %v1023, %v1024
    %1112 = vadd.xlane.f32.xlu0 %v1111
    %v1113 = vpop.xlane.xlu0 %1112
    %v1114 = vadd.f32 %v1025, %v1026
    %1115 = vadd.xlane.f32.xlu0 %v1114
    %v1116 = vpop.xlane.xlu0 %1115
    %v1117 = vadd.f32 %v1027, %v1028
    %1118 = vadd.xlane.f32.xlu0 %v1117
    %v1119 = vpop.xlane.xlu0 %1118
    %v1120 = vadd.f32 %v1029, %v1030
    %1121 = vadd.xlane.f32.xlu0 %v1120
    %v1122 = vpop.xlane.xlu0 %1121
    %v1123 = vadd.f32 %v1031, %v1032
    %1124 = vadd.xlane.f32.xlu0 %v1123
    %v1125 = vpop.xlane.xlu0 %1124
    %v1126 = vadd.f32 %v1033, %v1034
    %1127 = vadd.xlane.f32.xlu0 %v1126
    %v1128 = vpop.xlane.xlu0 %1127
    %v1129 = vadd.f32 %v1035, %v1036
    %1130 = vadd.xlane.f32.xlu0 %v1129
    %v1131 = vpop.xlane.xlu0 %1130
    %v1132 = vadd.f32 %v1037, %v1038
    %1133 = vadd.xlane.f32.xlu0 %v1132
    %v1134 = vpop.xlane.xlu0 %1133
    %v1135 = vmul.f32 %v881, 0.00390625
    %v1136 = vmul.f32 %v884, 0.00390625
    %v1137 = vmul.f32 %v887, 0.00390625
    %v1138 = vmul.f32 %v890, 0.00390625
    %v1139 = vmul.f32 %v893, 0.00390625
    %v1140 = vmul.f32 %v896, 0.00390625
    %v1141 = vmul.f32 %v899, 0.00390625
    %v1142 = vmul.f32 %v902, 0.00390625
    %v1143 = vmul.f32 %v905, 0.00390625
    %v1144 = vmul.f32 %v908, 0.00390625
    %v1145 = vmul.f32 %v911, 0.00390625
    %v1146 = vmul.f32 %v914, 0.00390625
    %v1147 = vmul.f32 %v917, 0.00390625
    %v1148 = vmul.f32 %v920, 0.00390625
    %v1149 = vmul.f32 %v923, 0.00390625
    %v1150 = vmul.f32 %v926, 0.00390625
    %v1151 = vmul.f32 %v929, 0.00390625
    %v1152 = vmul.f32 %v932, 0.00390625
    %v1153 = vmul.f32 %v935, 0.00390625
    %v1154 = vmul.f32 %v938, 0.00390625
    %v1155 = vmul.f32 %v941, 0.00390625
    %v1156 = vmul.f32 %v944, 0.00390625
    %v1157 = vmul.f32 %v947, 0.00390625
    %v1158 = vmul.f32 %v950, 0.00390625
    %v1159 = vmul.f32 %v953, 0.00390625
    %v1160 = vmul.f32 %v956, 0.00390625
    %v1161 = vmul.f32 %v959, 0.00390625
    %v1162 = vmul.f32 %v962, 0.00390625
    %v1163 = vmul.f32 %v965, 0.00390625
    %v1164 = vmul.f32 %v968, 0.00390625
    %v1165 = vmul.f32 %v971, 0.00390625
    %v1166 = vmul.f32 %v974, 0.00390625
    %v1167 = vmul.f32 %v1041, 0.00390625
    %v1168 = vmul.f32 %v1044, 0.00390625
    %v1169 = vmul.f32 %v1047, 0.00390625
    %v1170 = vmul.f32 %v1050, 0.00390625
    %v1171 = vmul.f32 %v1053, 0.00390625
    %v1172 = vmul.f32 %v1056, 0.00390625
    %v1173 = vmul.f32 %v1059, 0.00390625
    %v1174 = vmul.f32 %v1062, 0.00390625
    %v1175 = vmul.f32 %v1065, 0.00390625
    %v1176 = vmul.f32 %v1068, 0.00390625
    %v1177 = vmul.f32 %v1071, 0.00390625
    %v1178 = vmul.f32 %v1074, 0.00390625
    %v1179 = vmul.f32 %v1077, 0.00390625
    %v1180 = vmul.f32 %v1080, 0.00390625
    %v1181 = vmul.f32 %v1083, 0.00390625
    %v1182 = vmul.f32 %v1086, 0.00390625
    %v1183 = vmul.f32 %v1089, 0.00390625
    %v1184 = vmul.f32 %v1092, 0.00390625
    %v1185 = vmul.f32 %v1095, 0.00390625
    %v1186 = vmul.f32 %v1098, 0.00390625
    %v1187 = vmul.f32 %v1101, 0.00390625
    %v1188 = vmul.f32 %v1104, 0.00390625
    %v1189 = vmul.f32 %v1107, 0.00390625
    %v1190 = vmul.f32 %v1110, 0.00390625
    %v1191 = vmul.f32 %v1113, 0.00390625
    %v1192 = vmul.f32 %v1116, 0.00390625
    %v1193 = vmul.f32 %v1119, 0.00390625
    %v1194 = vmul.f32 %v1122, 0.00390625
    %v1195 = vmul.f32 %v1125, 0.00390625
    %v1196 = vmul.f32 %v1128, 0.00390625
    %v1197 = vmul.f32 %v1131, 0.00390625
    %v1198 = vmul.f32 %v1134, 0.00390625
    %v1199 = vmul.f32 %v1135, %v1135
    %v1200 = vmul.f32 %v1136, %v1136
    %v1201 = vmul.f32 %v1137, %v1137
    %v1202 = vmul.f32 %v1138, %v1138
    %v1203 = vmul.f32 %v1139, %v1139
    %v1204 = vmul.f32 %v1140, %v1140
    %v1205 = vmul.f32 %v1141, %v1141
    %v1206 = vmul.f32 %v1142, %v1142
    %v1207 = vmul.f32 %v1143, %v1143
    %v1208 = vmul.f32 %v1144, %v1144
    %v1209 = vmul.f32 %v1145, %v1145
    %v1210 = vmul.f32 %v1146, %v1146
    %v1211 = vmul.f32 %v1147, %v1147
    %v1212 = vmul.f32 %v1148, %v1148
    %v1213 = vmul.f32 %v1149, %v1149
    %v1214 = vmul.f32 %v1150, %v1150
    %v1215 = vmul.f32 %v1151, %v1151
    %v1216 = vmul.f32 %v1152, %v1152
    %v1217 = vmul.f32 %v1153, %v1153
    %v1218 = vmul.f32 %v1154, %v1154
    %v1219 = vmul.f32 %v1155, %v1155
    %v1220 = vmul.f32 %v1156, %v1156
    %v1221 = vmul.f32 %v1157, %v1157
    %v1222 = vmul.f32 %v1158, %v1158
    %v1223 = vmul.f32 %v1159, %v1159
    %v1224 = vmul.f32 %v1160, %v1160
    %v1225 = vmul.f32 %v1161, %v1161
    %v1226 = vmul.f32 %v1162, %v1162
    %v1227 = vmul.f32 %v1163, %v1163
    %v1228 = vmul.f32 %v1164, %v1164
    %v1229 = vmul.f32 %v1165, %v1165
    %v1230 = vmul.f32 %v1166, %v1166
    %v1231 = vsub.f32 %v1167, %v1199
    %v1232 = vsub.f32 %v1168, %v1200
    %v1233 = vsub.f32 %v1169, %v1201
    %v1234 = vsub.f32 %v1170, %v1202
    %v1235 = vsub.f32 %v1171, %v1203
    %v1236 = vsub.f32 %v1172, %v1204
    %v1237 = vsub.f32 %v1173, %v1205
    %v1238 = vsub.f32 %v1174, %v1206
    %v1239 = vsub.f32 %v1175, %v1207
    %v1240 = vsub.f32 %v1176, %v1208
    %v1241 = vsub.f32 %v1177, %v1209
    %v1242 = vsub.f32 %v1178, %v1210
    %v1243 = vsub.f32 %v1179, %v1211
    %v1244 = vsub.f32 %v1180, %v1212
    %v1245 = vsub.f32 %v1181, %v1213
    %v1246 = vsub.f32 %v1182, %v1214
    %v1247 = vsub.f32 %v1183, %v1215
    %v1248 = vsub.f32 %v1184, %v1216
    %v1249 = vsub.f32 %v1185, %v1217
    %v1250 = vsub.f32 %v1186, %v1218
    %v1251 = vsub.f32 %v1187, %v1219
    %v1252 = vsub.f32 %v1188, %v1220
    %v1253 = vsub.f32 %v1189, %v1221
    %v1254 = vsub.f32 %v1190, %v1222
    %v1255 = vsub.f32 %v1191, %v1223
    %v1256 = vsub.f32 %v1192, %v1224
    %v1257 = vsub.f32 %v1193, %v1225
    %v1258 = vsub.f32 %v1194, %v1226
    %v1259 = vsub.f32 %v1195, %v1227
    %v1260 = vsub.f32 %v1196, %v1228
    %v1261 = vsub.f32 %v1197, %v1229
    %v1262 = vsub.f32 %v1198, %v1230
    %v1263 = vmax.f32 %v1231, 0.0
    %v1264 = vmax.f32 %v1232, 0.0
    %v1265 = vmax.f32 %v1233, 0.0
    %v1266 = vmax.f32 %v1234, 0.0
    %v1267 = vmax.f32 %v1235, 0.0
    %v1268 = vmax.f32 %v1236, 0.0
    %v1269 = vmax.f32 %v1237, 0.0
    %v1270 = vmax.f32 %v1238, 0.0
    %v1271 = vmax.f32 %v1239, 0.0
    %v1272 = vmax.f32 %v1240, 0.0
    %v1273 = vmax.f32 %v1241, 0.0
    %v1274 = vmax.f32 %v1242, 0.0
    %v1275 = vmax.f32 %v1243, 0.0
    %v1276 = vmax.f32 %v1244, 0.0
    %v1277 = vmax.f32 %v1245, 0.0
    %v1278 = vmax.f32 %v1246, 0.0
    %v1279 = vmax.f32 %v1247, 0.0
    %v1280 = vmax.f32 %v1248, 0.0
    %v1281 = vmax.f32 %v1249, 0.0
    %v1282 = vmax.f32 %v1250, 0.0
    %v1283 = vmax.f32 %v1251, 0.0
    %v1284 = vmax.f32 %v1252, 0.0
    %v1285 = vmax.f32 %v1253, 0.0
    %v1286 = vmax.f32 %v1254, 0.0
    %v1287 = vmax.f32 %v1255, 0.0
    %v1288 = vmax.f32 %v1256, 0.0
    %v1289 = vmax.f32 %v1257, 0.0
    %v1290 = vmax.f32 %v1258, 0.0
    %v1291 = vmax.f32 %v1259, 0.0
    %v1292 = vmax.f32 %v1260, 0.0
    %v1293 = vmax.f32 %v1261, 0.0
    %v1294 = vmax.f32 %v1262, 0.0
    %v1295 = vsub.f32 %v721, %v1135
    %v1296 = vsub.f32 %v723, %v1135
    %v1297 = vsub.f32 %v725, %v1136
    %v1298 = vsub.f32 %v727, %v1136
    %v1299 = vsub.f32 %v731, %v1137
    %v1300 = vsub.f32 %v733, %v1137
    %v1301 = vsub.f32 %v735, %v1138
    %v1302 = vsub.f32 %v737, %v1138
    %v1303 = vsub.f32 %v741, %v1139
    %v1304 = vsub.f32 %v743, %v1139
    %v1305 = vsub.f32 %v745, %v1140
    %v1306 = vsub.f32 %v747, %v1140
    %v1307 = vsub.f32 %v751, %v1141
    %v1308 = vsub.f32 %v753, %v1141
    %v1309 = vsub.f32 %v755, %v1142
    %v1310 = vsub.f32 %v757, %v1142
    %v1311 = vsub.f32 %v761, %v1143
    %v1312 = vsub.f32 %v763, %v1143
    %v1313 = vsub.f32 %v765, %v1144
    %v1314 = vsub.f32 %v767, %v1144
    %v1315 = vsub.f32 %v771, %v1145
    %v1316 = vsub.f32 %v773, %v1145
    %v1317 = vsub.f32 %v775, %v1146
    %v1318 = vsub.f32 %v777, %v1146
    %v1319 = vsub.f32 %v781, %v1147
    %v1320 = vsub.f32 %v783, %v1147
    %v1321 = vsub.f32 %v785, %v1148
    %v1322 = vsub.f32 %v787, %v1148
    %v1323 = vsub.f32 %v791, %v1149
    %v1324 = vsub.f32 %v793, %v1149
    %v1325 = vsub.f32 %v795, %v1150
    %v1326 = vsub.f32 %v797, %v1150
    %v1327 = vsub.f32 %v801, %v1151
    %v1328 = vsub.f32 %v803, %v1151
    %v1329 = vsub.f32 %v805, %v1152
    %v1330 = vsub.f32 %v807, %v1152
    %v1331 = vsub.f32 %v811, %v1153
    %v1332 = vsub.f32 %v813, %v1153
    %v1333 = vsub.f32 %v815, %v1154
    %v1334 = vsub.f32 %v817, %v1154
    %v1335 = vsub.f32 %v821, %v1155
    %v1336 = vsub.f32 %v823, %v1155
    %v1337 = vsub.f32 %v825, %v1156
    %v1338 = vsub.f32 %v827, %v1156
    %v1339 = vsub.f32 %v831, %v1157
    %v1340 = vsub.f32 %v833, %v1157
    %v1341 = vsub.f32 %v835, %v1158
    %v1342 = vsub.f32 %v837, %v1158
    %v1343 = vsub.f32 %v841, %v1159
    %v1344 = vsub.f32 %v843, %v1159
    %v1345 = vsub.f32 %v845, %v1160
    %v1346 = vsub.f32 %v847, %v1160
    %v1347 = vsub.f32 %v851, %v1161
    %v1348 = vsub.f32 %v853, %v1161
    %v1349 = vsub.f32 %v855, %v1162
    %v1350 = vsub.f32 %v857, %v1162
    %v1351 = vsub.f32 %v861, %v1163
    %v1352 = vsub.f32 %v863, %v1163
    %v1353 = vsub.f32 %v865, %v1164
    %v1354 = vsub.f32 %v867, %v1164
    %v1355 = vsub.f32 %v871, %v1165
    %v1356 = vsub.f32 %v873, %v1165
    %v1357 = vsub.f32 %v875, %v1166
    %v1358 = vsub.f32 %v877, %v1166
    %v1359 = vadd.f32 %v1263, 1e-05
    %v1360 = vadd.f32 %v1264, 1e-05
    %v1361 = vadd.f32 %v1265, 1e-05
    %v1362 = vadd.f32 %v1266, 1e-05
    %v1363 = vadd.f32 %v1267, 1e-05
    %v1364 = vadd.f32 %v1268, 1e-05
    %v1365 = vadd.f32 %v1269, 1e-05
    %v1366 = vadd.f32 %v1270, 1e-05
    %v1367 = vadd.f32 %v1271, 1e-05
    %v1368 = vadd.f32 %v1272, 1e-05
    %v1369 = vadd.f32 %v1273, 1e-05
    %v1370 = vadd.f32 %v1274, 1e-05
    %v1371 = vadd.f32 %v1275, 1e-05
    %v1372 = vadd.f32 %v1276, 1e-05
    %v1373 = vadd.f32 %v1277, 1e-05
    %v1374 = vadd.f32 %v1278, 1e-05
    %v1375 = vadd.f32 %v1279, 1e-05
    %v1376 = vadd.f32 %v1280, 1e-05
    %v1377 = vadd.f32 %v1281, 1e-05
    %v1378 = vadd.f32 %v1282, 1e-05
    %v1379 = vadd.f32 %v1283, 1e-05
    %v1380 = vadd.f32 %v1284, 1e-05
    %v1381 = vadd.f32 %v1285, 1e-05
    %v1382 = vadd.f32 %v1286, 1e-05
    %v1383 = vadd.f32 %v1287, 1e-05
    %v1384 = vadd.f32 %v1288, 1e-05
    %v1385 = vadd.f32 %v1289, 1e-05
    %v1386 = vadd.f32 %v1290, 1e-05
    %v1387 = vadd.f32 %v1291, 1e-05
    %v1388 = vadd.f32 %v1292, 1e-05
    %v1389 = vadd.f32 %v1293, 1e-05
    %v1390 = vadd.f32 %v1294, 1e-05
    %v1391 = vrsqrt.pop %v1359
    %v1392 = vrsqrt.pop %v1360
    %v1393 = vrsqrt.pop %v1361
    %v1394 = vrsqrt.pop %v1362
    %v1395 = vrsqrt.pop %v1363
    %v1396 = vrsqrt.pop %v1364
    %v1397 = vrsqrt.pop %v1365
    %v1398 = vrsqrt.pop %v1366
    %v1399 = vrsqrt.pop %v1367
    %v1400 = vrsqrt.pop %v1368
    %v1401 = vrsqrt.pop %v1369
    %v1402 = vrsqrt.pop %v1370
    %v1403 = vrsqrt.pop %v1371
    %v1404 = vrsqrt.pop %v1372
    %v1405 = vrsqrt.pop %v1373
    %v1406 = vrsqrt.pop %v1374
    %v1407 = vrsqrt.pop %v1375
    %v1408 = vrsqrt.pop %v1376
    %v1409 = vrsqrt.pop %v1377
    %v1410 = vrsqrt.pop %v1378
    %v1411 = vrsqrt.pop %v1379
    %v1412 = vrsqrt.pop %v1380
    %v1413 = vrsqrt.pop %v1381
    %v1414 = vrsqrt.pop %v1382
    %v1415 = vrsqrt.pop %v1383
    %v1416 = vrsqrt.pop %v1384
    %v1417 = vrsqrt.pop %v1385
    %v1418 = vrsqrt.pop %v1386
    %v1419 = vrsqrt.pop %v1387
    %v1420 = vrsqrt.pop %v1388
    %v1421 = vrsqrt.pop %v1389
    %v1422 = vrsqrt.pop %v1390
    %v1423 = vmul.f32 %v1295, %v1391
    %v1424 = vmul.f32 %v1296, %v1391
    %v1425 = vmul.f32 %v1297, %v1392
    %v1426 = vmul.f32 %v1298, %v1392
    %v1427 = vmul.f32 %v1299, %v1393
    %v1428 = vmul.f32 %v1300, %v1393
    %v1429 = vmul.f32 %v1301, %v1394
    %v1430 = vmul.f32 %v1302, %v1394
    %v1431 = vmul.f32 %v1303, %v1395
    %v1432 = vmul.f32 %v1304, %v1395
    %v1433 = vmul.f32 %v1305, %v1396
    %v1434 = vmul.f32 %v1306, %v1396
    %v1435 = vmul.f32 %v1307, %v1397
    %v1436 = vmul.f32 %v1308, %v1397
    %v1437 = vmul.f32 %v1309, %v1398
    %v1438 = vmul.f32 %v1310, %v1398
    %v1439 = vmul.f32 %v1311, %v1399
    %v1440 = vmul.f32 %v1312, %v1399
    %v1441 = vmul.f32 %v1313, %v1400
    %v1442 = vmul.f32 %v1314, %v1400
    %v1443 = vmul.f32 %v1315, %v1401
    %v1444 = vmul.f32 %v1316, %v1401
    %v1445 = vmul.f32 %v1317, %v1402
    %v1446 = vmul.f32 %v1318, %v1402
    %v1447 = vmul.f32 %v1319, %v1403
    %v1448 = vmul.f32 %v1320, %v1403
    %v1449 = vmul.f32 %v1321, %v1404
    %v1450 = vmul.f32 %v1322, %v1404
    %v1451 = vmul.f32 %v1323, %v1405
    %v1452 = vmul.f32 %v1324, %v1405
    %v1453 = vmul.f32 %v1325, %v1406
    %v1454 = vmul.f32 %v1326, %v1406
    %v1455 = vmul.f32 %v1327, %v1407
    %v1456 = vmul.f32 %v1328, %v1407
    %v1457 = vmul.f32 %v1329, %v1408
    %v1458 = vmul.f32 %v1330, %v1408
    %v1459 = vmul.f32 %v1331, %v1409
    %v1460 = vmul.f32 %v1332, %v1409
    %v1461 = vmul.f32 %v1333, %v1410
    %v1462 = vmul.f32 %v1334, %v1410
    %v1463 = vmul.f32 %v1335, %v1411
    %v1464 = vmul.f32 %v1336, %v1411
    %v1465 = vmul.f32 %v1337, %v1412
    %v1466 = vmul.f32 %v1338, %v1412
    %v1467 = vmul.f32 %v1339, %v1413
    %v1468 = vmul.f32 %v1340, %v1413
    %v1469 = vmul.f32 %v1341, %v1414
    %v1470 = vmul.f32 %v1342, %v1414
    %v1471 = vmul.f32 %v1343, %v1415
    %v1472 = vmul.f32 %v1344, %v1415
    %v1473 = vmul.f32 %v1345, %v1416
    %v1474 = vmul.f32 %v1346, %v1416
    %v1475 = vmul.f32 %v1347, %v1417
    %v1476 = vmul.f32 %v1348, %v1417
    %v1477 = vmul.f32 %v1349, %v1418
    %v1478 = vmul.f32 %v1350, %v1418
    %v1479 = vmul.f32 %v1351, %v1419
    %v1480 = vmul.f32 %v1352, %v1419
    %v1481 = vmul.f32 %v1353, %v1420
    %v1482 = vmul.f32 %v1354, %v1420
    %v1483 = vmul.f32 %v1355, %v1421
    %v1484 = vmul.f32 %v1356, %v1421
    %v1485 = vmul.f32 %v1357, %v1422
    %v1486 = vmul.f32 %v1358, %v1422
    %v1487 = vlaneseq
    %v1488 = vshrl.u32 %v1487, 7
    %v1489 = vsub.s32 1, %v1488
    %v1490 = vrot.slane %v563, %v1489
    %v1491 = vlaneseq
    %v1492 = vshrl.u32 %v1491, 7
    %v1493 = vsub.s32 1, %v1492
    %v1494 = vrot.slane %v564, %v1493
    %v1495 = vmul.f32 %v1423, %v1490
    %v1496 = vmul.f32 %v1424, %v1494
    %v1497 = vmul.f32 %v1425, %v1490
    %v1498 = vmul.f32 %v1426, %v1494
    %v1499 = vmul.f32 %v1427, %v1490
    %v1500 = vmul.f32 %v1428, %v1494
    %v1501 = vmul.f32 %v1429, %v1490
    %v1502 = vmul.f32 %v1430, %v1494
    %v1503 = vmul.f32 %v1431, %v1490
    %v1504 = vmul.f32 %v1432, %v1494
    %v1505 = vmul.f32 %v1433, %v1490
    %v1506 = vmul.f32 %v1434, %v1494
    %v1507 = vmul.f32 %v1435, %v1490
    %v1508 = vmul.f32 %v1436, %v1494
    %v1509 = vmul.f32 %v1437, %v1490
    %v1510 = vmul.f32 %v1438, %v1494
    %v1511 = vmul.f32 %v1439, %v1490
    %v1512 = vmul.f32 %v1440, %v1494
    %v1513 = vmul.f32 %v1441, %v1490
    %v1514 = vmul.f32 %v1442, %v1494
    %v1515 = vmul.f32 %v1443, %v1490
    %v1516 = vmul.f32 %v1444, %v1494
    %v1517 = vmul.f32 %v1445, %v1490
    %v1518 = vmul.f32 %v1446, %v1494
    %v1519 = vmul.f32 %v1447, %v1490
    %v1520 = vmul.f32 %v1448, %v1494
    %v1521 = vmul.f32 %v1449, %v1490
    %v1522 = vmul.f32 %v1450, %v1494
    %v1523 = vmul.f32 %v1451, %v1490
    %v1524 = vmul.f32 %v1452, %v1494
    %v1525 = vmul.f32 %v1453, %v1490
    %v1526 = vmul.f32 %v1454, %v1494
    %v1527 = vmul.f32 %v1455, %v1490
    %v1528 = vmul.f32 %v1456, %v1494
    %v1529 = vmul.f32 %v1457, %v1490
    %v1530 = vmul.f32 %v1458, %v1494
    %v1531 = vmul.f32 %v1459, %v1490
    %v1532 = vmul.f32 %v1460, %v1494
    %v1533 = vmul.f32 %v1461, %v1490
    %v1534 = vmul.f32 %v1462, %v1494
    %v1535 = vmul.f32 %v1463, %v1490
    %v1536 = vmul.f32 %v1464, %v1494
    %v1537 = vmul.f32 %v1465, %v1490
    %v1538 = vmul.f32 %v1466, %v1494
    %v1539 = vmul.f32 %v1467, %v1490
    %v1540 = vmul.f32 %v1468, %v1494
    %v1541 = vmul.f32 %v1469, %v1490
    %v1542 = vmul.f32 %v1470, %v1494
    %v1543 = vmul.f32 %v1471, %v1490
    %v1544 = vmul.f32 %v1472, %v1494
    %v1545 = vmul.f32 %v1473, %v1490
    %v1546 = vmul.f32 %v1474, %v1494
    %v1547 = vmul.f32 %v1475, %v1490
    %v1548 = vmul.f32 %v1476, %v1494
    %v1549 = vmul.f32 %v1477, %v1490
    %v1550 = vmul.f32 %v1478, %v1494
    %v1551 = vmul.f32 %v1479, %v1490
    %v1552 = vmul.f32 %v1480, %v1494
    %v1553 = vmul.f32 %v1481, %v1490
    %v1554 = vmul.f32 %v1482, %v1494
    %v1555 = vmul.f32 %v1483, %v1490
    %v1556 = vmul.f32 %v1484, %v1494
    %v1557 = vmul.f32 %v1485, %v1490
    %v1558 = vmul.f32 %v1486, %v1494
    %v1559 = vlaneseq
    %v1560 = vshrl.u32 %v1559, 7
    %v1561 = vsub.s32 2, %v1560
    %v1562 = vrot.slane %v563, %v1561
    %v1563 = vlaneseq
    %v1564 = vshrl.u32 %v1563, 7
    %v1565 = vsub.s32 2, %v1564
    %v1566 = vrot.slane %v564, %v1565
    %v1567 = vadd.f32 %v1495, %v1562
    %v1568 = vadd.f32 %v1496, %v1566
    %v1569 = vadd.f32 %v1497, %v1562
    %v1570 = vadd.f32 %v1498, %v1566
    %v1571 = vadd.f32 %v1499, %v1562
    %v1572 = vadd.f32 %v1500, %v1566
    %v1573 = vadd.f32 %v1501, %v1562
    %v1574 = vadd.f32 %v1502, %v1566
    %v1575 = vadd.f32 %v1503, %v1562
    %v1576 = vadd.f32 %v1504, %v1566
    %v1577 = vadd.f32 %v1505, %v1562
    %v1578 = vadd.f32 %v1506, %v1566
    %v1579 = vadd.f32 %v1507, %v1562
    %v1580 = vadd.f32 %v1508, %v1566
    %v1581 = vadd.f32 %v1509, %v1562
    %v1582 = vadd.f32 %v1510, %v1566
    %v1583 = vadd.f32 %v1511, %v1562
    %v1584 = vadd.f32 %v1512, %v1566
    %v1585 = vadd.f32 %v1513, %v1562
    %v1586 = vadd.f32 %v1514, %v1566
    %v1587 = vadd.f32 %v1515, %v1562
    %v1588 = vadd.f32 %v1516, %v1566
    %v1589 = vadd.f32 %v1517, %v1562
    %v1590 = vadd.f32 %v1518, %v1566
    %v1591 = vadd.f32 %v1519, %v1562
    %v1592 = vadd.f32 %v1520, %v1566
    %v1593 = vadd.f32 %v1521, %v1562
    %v1594 = vadd.f32 %v1522, %v1566
    %v1595 = vadd.f32 %v1523, %v1562
    %v1596 = vadd.f32 %v1524, %v1566
    %v1597 = vadd.f32 %v1525, %v1562
    %v1598 = vadd.f32 %v1526, %v1566
    %v1599 = vadd.f32 %v1527, %v1562
    %v1600 = vadd.f32 %v1528, %v1566
    %v1601 = vadd.f32 %v1529, %v1562
    %v1602 = vadd.f32 %v1530, %v1566
    %v1603 = vadd.f32 %v1531, %v1562
    %v1604 = vadd.f32 %v1532, %v1566
    %v1605 = vadd.f32 %v1533, %v1562
    %v1606 = vadd.f32 %v1534, %v1566
    %v1607 = vadd.f32 %v1535, %v1562
    %v1608 = vadd.f32 %v1536, %v1566
    %v1609 = vadd.f32 %v1537, %v1562
    %v1610 = vadd.f32 %v1538, %v1566
    %v1611 = vadd.f32 %v1539, %v1562
    %v1612 = vadd.f32 %v1540, %v1566
    %v1613 = vadd.f32 %v1541, %v1562
    %v1614 = vadd.f32 %v1542, %v1566
    %v1615 = vadd.f32 %v1543, %v1562
    %v1616 = vadd.f32 %v1544, %v1566
    %v1617 = vadd.f32 %v1545, %v1562
    %v1618 = vadd.f32 %v1546, %v1566
    %v1619 = vadd.f32 %v1547, %v1562
    %v1620 = vadd.f32 %v1548, %v1566
    %v1621 = vadd.f32 %v1549, %v1562
    %v1622 = vadd.f32 %v1550, %v1566
    %v1623 = vadd.f32 %v1551, %v1562
    %v1624 = vadd.f32 %v1552, %v1566
    %v1625 = vadd.f32 %v1553, %v1562
    %v1626 = vadd.f32 %v1554, %v1566
    %v1627 = vadd.f32 %v1555, %v1562
    %v1628 = vadd.f32 %v1556, %v1566
    %v1629 = vadd.f32 %v1557, %v1562
    %v1630 = vadd.f32 %v1558, %v1566
    %v1631 = vtanh.pop %v1567
    %v1632 = vtanh.pop %v1568
    %v1633 = vtanh.pop %v1569
    %v1634 = vtanh.pop %v1570
    %v1635 = vtanh.pop %v1571
    %v1636 = vtanh.pop %v1572
    %v1637 = vtanh.pop %v1573
    %v1638 = vtanh.pop %v1574
    %v1639 = vtanh.pop %v1575
    %v1640 = vtanh.pop %v1576
    %v1641 = vtanh.pop %v1577
    %v1642 = vtanh.pop %v1578
    %v1643 = vtanh.pop %v1579
    %v1644 = vtanh.pop %v1580
    %v1645 = vtanh.pop %v1581
    %v1646 = vtanh.pop %v1582
    %v1647 = vtanh.pop %v1583
    %v1648 = vtanh.pop %v1584
    %v1649 = vtanh.pop %v1585
    %v1650 = vtanh.pop %v1586
    %v1651 = vtanh.pop %v1587
    %v1652 = vtanh.pop %v1588
    %v1653 = vtanh.pop %v1589
    %v1654 = vtanh.pop %v1590
    %v1655 = vtanh.pop %v1591
    %v1656 = vtanh.pop %v1592
    %v1657 = vtanh.pop %v1593
    %v1658 = vtanh.pop %v1594
    %v1659 = vtanh.pop %v1595
    %v1660 = vtanh.pop %v1596
    %v1661 = vtanh.pop %v1597
    %v1662 = vtanh.pop %v1598
    %v1663 = vtanh.pop %v1599
    %v1664 = vtanh.pop %v1600
    %v1665 = vtanh.pop %v1601
    %v1666 = vtanh.pop %v1602
    %v1667 = vtanh.pop %v1603
    %v1668 = vtanh.pop %v1604
    %v1669 = vtanh.pop %v1605
    %v1670 = vtanh.pop %v1606
    %v1671 = vtanh.pop %v1607
    %v1672 = vtanh.pop %v1608
    %v1673 = vtanh.pop %v1609
    %v1674 = vtanh.pop %v1610
    %v1675 = vtanh.pop %v1611
    %v1676 = vtanh.pop %v1612
    %v1677 = vtanh.pop %v1613
    %v1678 = vtanh.pop %v1614
    %v1679 = vtanh.pop %v1615
    %v1680 = vtanh.pop %v1616
    %v1681 = vtanh.pop %v1617
    %v1682 = vtanh.pop %v1618
    %v1683 = vtanh.pop %v1619
    %v1684 = vtanh.pop %v1620
    %v1685 = vtanh.pop %v1621
    %v1686 = vtanh.pop %v1622
    %v1687 = vtanh.pop %v1623
    %v1688 = vtanh.pop %v1624
    %v1689 = vtanh.pop %v1625
    %v1690 = vtanh.pop %v1626
    %v1691 = vtanh.pop %v1627
    %v1692 = vtanh.pop %v1628
    %v1693 = vtanh.pop %v1629
    %v1694 = vtanh.pop %v1630
    %v1695 = vpack.c.bf16 %v1633, %v1631
    %v1696 = vpack.c.bf16 %v1634, %v1632
    %v1697 = vpack.c.bf16 %v1637, %v1635
    %v1698 = vpack.c.bf16 %v1638, %v1636
    %v1699 = vpack.c.bf16 %v1641, %v1639
    %v1700 = vpack.c.bf16 %v1642, %v1640
    %v1701 = vpack.c.bf16 %v1645, %v1643
    %v1702 = vpack.c.bf16 %v1646, %v1644
    %v1703 = vpack.c.bf16 %v1649, %v1647
    %v1704 = vpack.c.bf16 %v1650, %v1648
    %v1705 = vpack.c.bf16 %v1653, %v1651
    %v1706 = vpack.c.bf16 %v1654, %v1652
    %v1707 = vpack.c.bf16 %v1657, %v1655
    %v1708 = vpack.c.bf16 %v1658, %v1656
    %v1709 = vpack.c.bf16 %v1661, %v1659
    %v1710 = vpack.c.bf16 %v1662, %v1660
    %v1711 = vpack.c.bf16 %v1665, %v1663
    %v1712 = vpack.c.bf16 %v1666, %v1664
    %v1713 = vpack.c.bf16 %v1669, %v1667
    %v1714 = vpack.c.bf16 %v1670, %v1668
    %v1715 = vpack.c.bf16 %v1673, %v1671
    %v1716 = vpack.c.bf16 %v1674, %v1672
    %v1717 = vpack.c.bf16 %v1677, %v1675
    %v1718 = vpack.c.bf16 %v1678, %v1676
    %v1719 = vpack.c.bf16 %v1681, %v1679
    %v1720 = vpack.c.bf16 %v1682, %v1680
    %v1721 = vpack.c.bf16 %v1685, %v1683
    %v1722 = vpack.c.bf16 %v1686, %v1684
    %v1723 = vpack.c.bf16 %v1689, %v1687
    %v1724 = vpack.c.bf16 %v1690, %v1688
    %v1725 = vpack.c.bf16 %v1693, %v1691
    %v1726 = vpack.c.bf16 %v1694, %v1692
    %v1727 = vld [vmem:[%s2] sm:$0xff]
    %v1728 = vld [vmem:[%s2 + $0x8] sm:$0xff]
    %v1729 = vld [vmem:[%s2 + $0x10] sm:$0xff]
    %v1730 = vld [vmem:[%s2 + $0x18] sm:$0xff]
    %v1731 = vld [vmem:[%s2 + $0x20] sm:$0xff]
    %v1732 = vld [vmem:[%s2 + $0x28] sm:$0xff]
    %v1733 = vld [vmem:[%s2 + $0x30] sm:$0xff]
    %v1734 = vld [vmem:[%s2 + $0x38] sm:$0xff]
    %v1735 = vld [vmem:[%s2 + $0x40] sm:$0xff]
    %v1736 = vld [vmem:[%s2 + $0x48] sm:$0xff]
    %v1737 = vld [vmem:[%s2 + $0x50] sm:$0xff]
    %v1738 = vld [vmem:[%s2 + $0x58] sm:$0xff]
    %v1739 = vld [vmem:[%s2 + $0x60] sm:$0xff]
    %v1740 = vld [vmem:[%s2 + $0x68] sm:$0xff]
    %v1741 = vld [vmem:[%s2 + $0x70] sm:$0xff]
    %v1742 = vld [vmem:[%s2 + $0x78] sm:$0xff]
    %v1743 = vld [vmem:[%s2 + $0x80] sm:$0xff]
    %v1744 = vld [vmem:[%s2 + $0x88] sm:$0xff]
    %v1745 = vld [vmem:[%s2 + $0x90] sm:$0xff]
    %v1746 = vld [vmem:[%s2 + $0x98] sm:$0xff]
    %v1747 = vld [vmem:[%s2 + $0xa0] sm:$0xff]
    %v1748 = vld [vmem:[%s2 + $0xa8] sm:$0xff]
    %v1749 = vld [vmem:[%s2 + $0xb0] sm:$0xff]
    %v1750 = vld [vmem:[%s2 + $0xb8] sm:$0xff]
    %v1751 = vld [vmem:[%s2 + $0xc0] sm:$0xff]
    %v1752 = vld [vmem:[%s2 + $0xc8] sm:$0xff]
    %v1753 = vld [vmem:[%s2 + $0xd0] sm:$0xff]
    %v1754 = vld [vmem:[%s2 + $0xd8] sm:$0xff]
    %v1755 = vld [vmem:[%s2 + $0xe0] sm:$0xff]
    %v1756 = vld [vmem:[%s2 + $0xe8] sm:$0xff]
    %v1757 = vld [vmem:[%s2 + $0xf0] sm:$0xff]
    %v1758 = vld [vmem:[%s2 + $0xf8] sm:$0xff]
    %v1759 = vlaneseq
    %v1760 = vshrl.u32 %v1759, 7
    %v1761 = vsub.s32 3, %v1760
    %v1762 = vrot.slane %v563, %v1761
    %v1763 = vlaneseq
    %v1764 = vshrl.u32 %v1763, 7
    %v1765 = vsub.s32 3, %v1764
    %v1766 = vrot.slane %v564, %v1765
    %v1799 = vunpack.c.l.b16 %v1727
    %v1800 = vunpack.c.h.b16 %v1727
    %v1801 = vunpack.c.l.b16 %v1728
    %v1802 = vunpack.c.h.b16 %v1728
    %v1803 = vunpack.c.l.b16 %v1729
    %v1804 = vunpack.c.h.b16 %v1729
    %v1805 = vunpack.c.l.b16 %v1730
    %v1806 = vunpack.c.h.b16 %v1730
    %v1807 = vunpack.c.l.b16 %v1731
    %v1808 = vunpack.c.h.b16 %v1731
    %v1809 = vunpack.c.l.b16 %v1732
    %v1810 = vunpack.c.h.b16 %v1732
    %v1811 = vunpack.c.l.b16 %v1733
    %v1812 = vunpack.c.h.b16 %v1733
    %v1813 = vunpack.c.l.b16 %v1734
    %v1814 = vunpack.c.h.b16 %v1734
    %v1815 = vunpack.c.l.b16 %v1735
    %v1816 = vunpack.c.h.b16 %v1735
    %v1817 = vunpack.c.l.b16 %v1736
    %v1818 = vunpack.c.h.b16 %v1736
    %v1819 = vunpack.c.l.b16 %v1737
    %v1820 = vunpack.c.h.b16 %v1737
    %v1821 = vunpack.c.l.b16 %v1738
    %v1822 = vunpack.c.h.b16 %v1738
    %v1823 = vunpack.c.l.b16 %v1739
    %v1824 = vunpack.c.h.b16 %v1739
    %v1825 = vunpack.c.l.b16 %v1740
    %v1826 = vunpack.c.h.b16 %v1740
    %v1827 = vunpack.c.l.b16 %v1741
    %v1828 = vunpack.c.h.b16 %v1741
    %v1829 = vunpack.c.l.b16 %v1742
    %v1830 = vunpack.c.h.b16 %v1742
    %v1831 = vunpack.c.l.b16 %v1743
    %v1832 = vunpack.c.h.b16 %v1743
    %v1833 = vunpack.c.l.b16 %v1744
    %v1834 = vunpack.c.h.b16 %v1744
    %v1835 = vunpack.c.l.b16 %v1745
    %v1836 = vunpack.c.h.b16 %v1745
    %v1837 = vunpack.c.l.b16 %v1746
    %v1838 = vunpack.c.h.b16 %v1746
    %v1839 = vunpack.c.l.b16 %v1747
    %v1840 = vunpack.c.h.b16 %v1747
    %v1841 = vunpack.c.l.b16 %v1748
    %v1842 = vunpack.c.h.b16 %v1748
    %v1843 = vunpack.c.l.b16 %v1749
    %v1844 = vunpack.c.h.b16 %v1749
    %v1845 = vunpack.c.l.b16 %v1750
    %v1846 = vunpack.c.h.b16 %v1750
    %v1847 = vunpack.c.l.b16 %v1751
    %v1848 = vunpack.c.h.b16 %v1751
    %v1849 = vunpack.c.l.b16 %v1752
    %v1850 = vunpack.c.h.b16 %v1752
    %v1851 = vunpack.c.l.b16 %v1753
    %v1852 = vunpack.c.h.b16 %v1753
    %v1853 = vunpack.c.l.b16 %v1754
    %v1854 = vunpack.c.h.b16 %v1754
    %v1855 = vunpack.c.l.b16 %v1755
    %v1856 = vunpack.c.h.b16 %v1755
    %v1857 = vunpack.c.l.b16 %v1756
    %v1858 = vunpack.c.h.b16 %v1756
    %v1859 = vunpack.c.l.b16 %v1757
    %v1860 = vunpack.c.h.b16 %v1757
    %v1861 = vunpack.c.l.b16 %v1758
    %v1862 = vunpack.c.h.b16 %v1758
    %v1863 = vpack.c.b16 %v1801, %v1799
    %v1864 = vpack.c.b16 %v1802, %v1800
    %v1865 = vpack.c.b16 %v1805, %v1803
    %v1866 = vpack.c.b16 %v1806, %v1804
    %v1867 = vpack.c.b16 %v1809, %v1807
    %v1868 = vpack.c.b16 %v1810, %v1808
    %v1869 = vpack.c.b16 %v1813, %v1811
    %v1870 = vpack.c.b16 %v1814, %v1812
    %v1871 = vpack.c.b16 %v1817, %v1815
    %v1872 = vpack.c.b16 %v1818, %v1816
    %v1873 = vpack.c.b16 %v1821, %v1819
    %v1874 = vpack.c.b16 %v1822, %v1820
    %v1875 = vpack.c.b16 %v1825, %v1823
    %v1876 = vpack.c.b16 %v1826, %v1824
    %v1877 = vpack.c.b16 %v1829, %v1827
    %v1878 = vpack.c.b16 %v1830, %v1828
    %v1879 = vpack.c.b16 %v1833, %v1831
    %v1880 = vpack.c.b16 %v1834, %v1832
    %v1881 = vpack.c.b16 %v1837, %v1835
    %v1882 = vpack.c.b16 %v1838, %v1836
    %v1883 = vpack.c.b16 %v1841, %v1839
    %v1884 = vpack.c.b16 %v1842, %v1840
    %v1885 = vpack.c.b16 %v1845, %v1843
    %v1886 = vpack.c.b16 %v1846, %v1844
    %v1887 = vpack.c.b16 %v1849, %v1847
    %v1888 = vpack.c.b16 %v1850, %v1848
    %v1889 = vpack.c.b16 %v1853, %v1851
    %v1890 = vpack.c.b16 %v1854, %v1852
    %v1891 = vpack.c.b16 %v1857, %v1855
    %v1892 = vpack.c.b16 %v1858, %v1856
    %v1893 = vpack.c.b16 %v1861, %v1859
    %v1894 = vpack.c.b16 %v1862, %v1860
    %1927 = vmatprep.subr.bf16.mxu0 %v1864
    %1928 = vmatpush1.bf16.msra.mxu0 %v1863
    %1929 = vmatprep.subr.bf16.mxu0 %v1866
    %1930 = vmatpush1.bf16.msra.mxu0 %v1865
    %1931 = vmatprep.subr.bf16.mxu0 %v1868
    %1932 = vmatpush1.bf16.msra.mxu0 %v1867
    %1933 = vmatprep.subr.bf16.mxu0 %v1870
    %1934 = vmatpush1.bf16.msra.mxu0 %v1869
    %1935 = vmatprep.subr.bf16.mxu0 %v1872
    %1936 = vmatpush1.bf16.msra.mxu0 %v1871
    %1937 = vmatprep.subr.bf16.mxu0 %v1874
    %1938 = vmatpush1.bf16.msra.mxu0 %v1873
    %1939 = vmatprep.subr.bf16.mxu0 %v1876
    %1940 = vmatpush1.bf16.msra.mxu0 %v1875
    %1941 = vmatprep.subr.bf16.mxu0 %v1878
    %1942 = vmatpush1.bf16.msra.mxu0 %v1877
    %1943 = vmatprep.subr.bf16.mxu0 %v1880
    %1944 = vmatpush1.bf16.msra.mxu0 %v1879
    %1945 = vmatprep.subr.bf16.mxu0 %v1882
    %1946 = vmatpush1.bf16.msra.mxu0 %v1881
    %1947 = vmatprep.subr.bf16.mxu0 %v1884
    %1948 = vmatpush1.bf16.msra.mxu0 %v1883
    %1949 = vmatprep.subr.bf16.mxu0 %v1886
    %1950 = vmatpush1.bf16.msra.mxu0 %v1885
    %1951 = vmatprep.subr.bf16.mxu0 %v1888
    %1952 = vmatpush1.bf16.msra.mxu0 %v1887
    %1953 = vmatprep.subr.bf16.mxu0 %v1890
    %1954 = vmatpush1.bf16.msra.mxu0 %v1889
    %1955 = vmatprep.subr.bf16.mxu0 %v1892
    %1956 = vmatpush1.bf16.msra.mxu0 %v1891
    %1957 = vmatprep.subr.bf16.mxu0 %v1894
    %1958 = vmatpush1.bf16.msra.mxu0 %v1893
    %1959 = vmatprep.mubr.bf16.mxu0 %v1696
    %1960 = vmatmul.mubr.bf16.gmra.mrb[0].mxu0 %v1695
    %v1961 = vpop.f32.mrb[0].mxu0
    %v1962 = vadd.f32 %v1762, %v1961
    %v1963 = vpop.f32.mrb[0].mxu0
    %v1964 = vadd.f32 %v1766, %v1963
    %v1965 = vpop.f32.mrb[0].mxu0
    %v1966 = vadd.f32 %v1762, %v1965
    %v1967 = vpop.f32.mrb[0].mxu0
    %v1968 = vadd.f32 %v1766, %v1967
    %1969 = vmatprep.mubr.bf16.mxu0 %v1698
    %1970 = vmatmul.mubr.bf16.gmra.mrb[0].mxu0 %v1697
    %v1971 = vpop.f32.mrb[0].mxu0
    %v1972 = vadd.f32 %v1762, %v1971
    %v1973 = vpop.f32.mrb[0].mxu0
    %v1974 = vadd.f32 %v1766, %v1973
    %v1975 = vpop.f32.mrb[0].mxu0
    %v1976 = vadd.f32 %v1762, %v1975
    %v1977 = vpop.f32.mrb[0].mxu0
    %v1978 = vadd.f32 %v1766, %v1977
    %1979 = vmatprep.mubr.bf16.mxu0 %v1700
    %1980 = vmatmul.mubr.bf16.gmra.mrb[0].mxu0 %v1699
    %v1981 = vpop.f32.mrb[0].mxu0
    %v1982 = vadd.f32 %v1762, %v1981
    %v1983 = vpop.f32.mrb[0].mxu0
    %v1984 = vadd.f32 %v1766, %v1983
    %v1985 = vpop.f32.mrb[0].mxu0
    %v1986 = vadd.f32 %v1762, %v1985
    %v1987 = vpop.f32.mrb[0].mxu0
    %v1988 = vadd.f32 %v1766, %v1987
    %1989 = vmatprep.mubr.bf16.mxu0 %v1702
    %1990 = vmatmul.mubr.bf16.gmra.mrb[0].mxu0 %v1701
    %v1991 = vpop.f32.mrb[0].mxu0
    %v1992 = vadd.f32 %v1762, %v1991
    %v1993 = vpop.f32.mrb[0].mxu0
    %v1994 = vadd.f32 %v1766, %v1993
    %v1995 = vpop.f32.mrb[0].mxu0
    %v1996 = vadd.f32 %v1762, %v1995
    %v1997 = vpop.f32.mrb[0].mxu0
    %v1998 = vadd.f32 %v1766, %v1997
    %1999 = vmatprep.mubr.bf16.mxu0 %v1704
    %2000 = vmatmul.mubr.bf16.gmra.mrb[0].mxu0 %v1703
    %v2001 = vpop.f32.mrb[0].mxu0
    %v2002 = vadd.f32 %v1762, %v2001
    %v2003 = vpop.f32.mrb[0].mxu0
    %v2004 = vadd.f32 %v1766, %v2003
    %v2005 = vpop.f32.mrb[0].mxu0
    %v2006 = vadd.f32 %v1762, %v2005
    %v2007 = vpop.f32.mrb[0].mxu0
    %v2008 = vadd.f32 %v1766, %v2007
    %2009 = vmatprep.mubr.bf16.mxu0 %v1706
    %2010 = vmatmul.mubr.bf16.gmra.mrb[0].mxu0 %v1705
    %v2011 = vpop.f32.mrb[0].mxu0
    %v2012 = vadd.f32 %v1762, %v2011
    %v2013 = vpop.f32.mrb[0].mxu0
    %v2014 = vadd.f32 %v1766, %v2013
    %v2015 = vpop.f32.mrb[0].mxu0
    %v2016 = vadd.f32 %v1762, %v2015
    %v2017 = vpop.f32.mrb[0].mxu0
    %v2018 = vadd.f32 %v1766, %v2017
    %2019 = vmatprep.mubr.bf16.mxu0 %v1708
    %2020 = vmatmul.mubr.bf16.gmra.mrb[0].mxu0 %v1707
    %v2021 = vpop.f32.mrb[0].mxu0
    %v2022 = vadd.f32 %v1762, %v2021
    %v2023 = vpop.f32.mrb[0].mxu0
    %v2024 = vadd.f32 %v1766, %v2023
    %v2025 = vpop.f32.mrb[0].mxu0
    %v2026 = vadd.f32 %v1762, %v2025
    %v2027 = vpop.f32.mrb[0].mxu0
    %v2028 = vadd.f32 %v1766, %v2027
    %2029 = vmatprep.mubr.bf16.mxu0 %v1710
    %2030 = vmatmul.mubr.bf16.gmra.mrb[0].mxu0 %v1709
    %v2031 = vpop.f32.mrb[0].mxu0
    %v2032 = vadd.f32 %v1762, %v2031
    %v2033 = vpop.f32.mrb[0].mxu0
    %v2034 = vadd.f32 %v1766, %v2033
    %v2035 = vpop.f32.mrb[0].mxu0
    %v2036 = vadd.f32 %v1762, %v2035
    %v2037 = vpop.f32.mrb[0].mxu0
    %v2038 = vadd.f32 %v1766, %v2037
    %2039 = vmatprep.mubr.bf16.mxu0 %v1712
    %2040 = vmatmul.mubr.bf16.gmra.mrb[0].mxu0 %v1711
    %v2041 = vpop.f32.mrb[0].mxu0
    %v2042 = vadd.f32 %v1762, %v2041
    %v2043 = vpop.f32.mrb[0].mxu0
    %v2044 = vadd.f32 %v1766, %v2043
    %v2045 = vpop.f32.mrb[0].mxu0
    %v2046 = vadd.f32 %v1762, %v2045
    %v2047 = vpop.f32.mrb[0].mxu0
    %v2048 = vadd.f32 %v1766, %v2047
    %2049 = vmatprep.mubr.bf16.mxu0 %v1714
    %2050 = vmatmul.mubr.bf16.gmra.mrb[0].mxu0 %v1713
    %v2051 = vpop.f32.mrb[0].mxu0
    %v2052 = vadd.f32 %v1762, %v2051
    %v2053 = vpop.f32.mrb[0].mxu0
    %v2054 = vadd.f32 %v1766, %v2053
    %v2055 = vpop.f32.mrb[0].mxu0
    %v2056 = vadd.f32 %v1762, %v2055
    %v2057 = vpop.f32.mrb[0].mxu0
    %v2058 = vadd.f32 %v1766, %v2057
    %2059 = vmatprep.mubr.bf16.mxu0 %v1716
    %2060 = vmatmul.mubr.bf16.gmra.mrb[0].mxu0 %v1715
    %v2061 = vpop.f32.mrb[0].mxu0
    %v2062 = vadd.f32 %v1762, %v2061
    %v2063 = vpop.f32.mrb[0].mxu0
    %v2064 = vadd.f32 %v1766, %v2063
    %v2065 = vpop.f32.mrb[0].mxu0
    %v2066 = vadd.f32 %v1762, %v2065
    %v2067 = vpop.f32.mrb[0].mxu0
    %v2068 = vadd.f32 %v1766, %v2067
    %2069 = vmatprep.mubr.bf16.mxu0 %v1718
    %2070 = vmatmul.mubr.bf16.gmra.mrb[0].mxu0 %v1717
    %v2071 = vpop.f32.mrb[0].mxu0
    %v2072 = vadd.f32 %v1762, %v2071
    %v2073 = vpop.f32.mrb[0].mxu0
    %v2074 = vadd.f32 %v1766, %v2073
    %v2075 = vpop.f32.mrb[0].mxu0
    %v2076 = vadd.f32 %v1762, %v2075
    %v2077 = vpop.f32.mrb[0].mxu0
    %v2078 = vadd.f32 %v1766, %v2077
    %2079 = vmatprep.mubr.bf16.mxu0 %v1720
    %2080 = vmatmul.mubr.bf16.gmra.mrb[0].mxu0 %v1719
    %v2081 = vpop.f32.mrb[0].mxu0
    %v2082 = vadd.f32 %v1762, %v2081
    %v2083 = vpop.f32.mrb[0].mxu0
    %v2084 = vadd.f32 %v1766, %v2083
    %v2085 = vpop.f32.mrb[0].mxu0
    %v2086 = vadd.f32 %v1762, %v2085
    %v2087 = vpop.f32.mrb[0].mxu0
    %v2088 = vadd.f32 %v1766, %v2087
    %2089 = vmatprep.mubr.bf16.mxu0 %v1722
    %2090 = vmatmul.mubr.bf16.gmra.mrb[0].mxu0 %v1721
    %v2091 = vpop.f32.mrb[0].mxu0
    %v2092 = vadd.f32 %v1762, %v2091
    %v2093 = vpop.f32.mrb[0].mxu0
    %v2094 = vadd.f32 %v1766, %v2093
    %v2095 = vpop.f32.mrb[0].mxu0
    %v2096 = vadd.f32 %v1762, %v2095
    %v2097 = vpop.f32.mrb[0].mxu0
    %v2098 = vadd.f32 %v1766, %v2097
    %2099 = vmatprep.mubr.bf16.mxu0 %v1724
    %2100 = vmatmul.mubr.bf16.gmra.mrb[0].mxu0 %v1723
    %v2101 = vpop.f32.mrb[0].mxu0
    %v2102 = vadd.f32 %v1762, %v2101
    %v2103 = vpop.f32.mrb[0].mxu0
    %v2104 = vadd.f32 %v1766, %v2103
    %v2105 = vpop.f32.mrb[0].mxu0
    %v2106 = vadd.f32 %v1762, %v2105
    %v2107 = vpop.f32.mrb[0].mxu0
    %v2108 = vadd.f32 %v1766, %v2107
    %2109 = vmatprep.mubr.bf16.mxu0 %v1726
    %2110 = vmatmul.mubr.bf16.gmra.mrb[0].mxu0 %v1725
    %v2111 = vpop.f32.mrb[0].mxu0
    %v2112 = vadd.f32 %v1762, %v2111
    %v2113 = vpop.f32.mrb[0].mxu0
    %v2114 = vadd.f32 %v1766, %v2113
    %v2115 = vpop.f32.mrb[0].mxu0
    %v2116 = vadd.f32 %v1762, %v2115
    %v2117 = vpop.f32.mrb[0].mxu0
    %v2118 = vadd.f32 %v1766, %v2117
    %2119 = vdwg.mxu0
    %v2120 = vadd.f32 %v1962, %v1964
    %2121 = vadd.xlane.f32.xlu0 %v2120
    %v2122 = vpop.xlane.xlu0 %2121
    %v2123 = vadd.f32 %v1966, %v1968
    %2124 = vadd.xlane.f32.xlu0 %v2123
    %v2125 = vpop.xlane.xlu0 %2124
    %v2126 = vadd.f32 %v1972, %v1974
    %2127 = vadd.xlane.f32.xlu0 %v2126
    %v2128 = vpop.xlane.xlu0 %2127
    %v2129 = vadd.f32 %v1976, %v1978
    %2130 = vadd.xlane.f32.xlu0 %v2129
    %v2131 = vpop.xlane.xlu0 %2130
    %v2132 = vadd.f32 %v1982, %v1984
    %2133 = vadd.xlane.f32.xlu0 %v2132
    %v2134 = vpop.xlane.xlu0 %2133
    %v2135 = vadd.f32 %v1986, %v1988
    %2136 = vadd.xlane.f32.xlu0 %v2135
    %v2137 = vpop.xlane.xlu0 %2136
    %v2138 = vadd.f32 %v1992, %v1994
    %2139 = vadd.xlane.f32.xlu0 %v2138
    %v2140 = vpop.xlane.xlu0 %2139
    %v2141 = vadd.f32 %v1996, %v1998
    %2142 = vadd.xlane.f32.xlu0 %v2141
    %v2143 = vpop.xlane.xlu0 %2142
    %v2144 = vadd.f32 %v2002, %v2004
    %2145 = vadd.xlane.f32.xlu0 %v2144
    %v2146 = vpop.xlane.xlu0 %2145
    %v2147 = vadd.f32 %v2006, %v2008
    %2148 = vadd.xlane.f32.xlu0 %v2147
    %v2149 = vpop.xlane.xlu0 %2148
    %v2150 = vadd.f32 %v2012, %v2014
    %2151 = vadd.xlane.f32.xlu0 %v2150
    %v2152 = vpop.xlane.xlu0 %2151
    %v2153 = vadd.f32 %v2016, %v2018
    %2154 = vadd.xlane.f32.xlu0 %v2153
    %v2155 = vpop.xlane.xlu0 %2154
    %v2156 = vadd.f32 %v2022, %v2024
    %2157 = vadd.xlane.f32.xlu0 %v2156
    %v2158 = vpop.xlane.xlu0 %2157
    %v2159 = vadd.f32 %v2026, %v2028
    %2160 = vadd.xlane.f32.xlu0 %v2159
    %v2161 = vpop.xlane.xlu0 %2160
    %v2162 = vadd.f32 %v2032, %v2034
    %2163 = vadd.xlane.f32.xlu0 %v2162
    %v2164 = vpop.xlane.xlu0 %2163
    %v2165 = vadd.f32 %v2036, %v2038
    %2166 = vadd.xlane.f32.xlu0 %v2165
    %v2167 = vpop.xlane.xlu0 %2166
    %v2168 = vadd.f32 %v2042, %v2044
    %2169 = vadd.xlane.f32.xlu0 %v2168
    %v2170 = vpop.xlane.xlu0 %2169
    %v2171 = vadd.f32 %v2046, %v2048
    %2172 = vadd.xlane.f32.xlu0 %v2171
    %v2173 = vpop.xlane.xlu0 %2172
    %v2174 = vadd.f32 %v2052, %v2054
    %2175 = vadd.xlane.f32.xlu0 %v2174
    %v2176 = vpop.xlane.xlu0 %2175
    %v2177 = vadd.f32 %v2056, %v2058
    %2178 = vadd.xlane.f32.xlu0 %v2177
    %v2179 = vpop.xlane.xlu0 %2178
    %v2180 = vadd.f32 %v2062, %v2064
    %2181 = vadd.xlane.f32.xlu0 %v2180
    %v2182 = vpop.xlane.xlu0 %2181
    %v2183 = vadd.f32 %v2066, %v2068
    %2184 = vadd.xlane.f32.xlu0 %v2183
    %v2185 = vpop.xlane.xlu0 %2184
    %v2186 = vadd.f32 %v2072, %v2074
    %2187 = vadd.xlane.f32.xlu0 %v2186
    %v2188 = vpop.xlane.xlu0 %2187
    %v2189 = vadd.f32 %v2076, %v2078
    %2190 = vadd.xlane.f32.xlu0 %v2189
    %v2191 = vpop.xlane.xlu0 %2190
    %v2192 = vadd.f32 %v2082, %v2084
    %2193 = vadd.xlane.f32.xlu0 %v2192
    %v2194 = vpop.xlane.xlu0 %2193
    %v2195 = vadd.f32 %v2086, %v2088
    %2196 = vadd.xlane.f32.xlu0 %v2195
    %v2197 = vpop.xlane.xlu0 %2196
    %v2198 = vadd.f32 %v2092, %v2094
    %2199 = vadd.xlane.f32.xlu0 %v2198
    %v2200 = vpop.xlane.xlu0 %2199
    %v2201 = vadd.f32 %v2096, %v2098
    %2202 = vadd.xlane.f32.xlu0 %v2201
    %v2203 = vpop.xlane.xlu0 %2202
    %v2204 = vadd.f32 %v2102, %v2104
    %2205 = vadd.xlane.f32.xlu0 %v2204
    %v2206 = vpop.xlane.xlu0 %2205
    %v2207 = vadd.f32 %v2106, %v2108
    %2208 = vadd.xlane.f32.xlu0 %v2207
    %v2209 = vpop.xlane.xlu0 %2208
    %v2210 = vadd.f32 %v2112, %v2114
    %2211 = vadd.xlane.f32.xlu0 %v2210
    %v2212 = vpop.xlane.xlu0 %2211
    %v2213 = vadd.f32 %v2116, %v2118
    %2214 = vadd.xlane.f32.xlu0 %v2213
    %v2215 = vpop.xlane.xlu0 %2214
    %v2216 = vmul.f32 %v1962, %v1962
    %v2217 = vmul.f32 %v1964, %v1964
    %v2218 = vmul.f32 %v1966, %v1966
    %v2219 = vmul.f32 %v1968, %v1968
    %v2220 = vmul.f32 %v1972, %v1972
    %v2221 = vmul.f32 %v1974, %v1974
    %v2222 = vmul.f32 %v1976, %v1976
    %v2223 = vmul.f32 %v1978, %v1978
    %v2224 = vmul.f32 %v1982, %v1982
    %v2225 = vmul.f32 %v1984, %v1984
    %v2226 = vmul.f32 %v1986, %v1986
    %v2227 = vmul.f32 %v1988, %v1988
    %v2228 = vmul.f32 %v1992, %v1992
    %v2229 = vmul.f32 %v1994, %v1994
    %v2230 = vmul.f32 %v1996, %v1996
    %v2231 = vmul.f32 %v1998, %v1998
    %v2232 = vmul.f32 %v2002, %v2002
    %v2233 = vmul.f32 %v2004, %v2004
    %v2234 = vmul.f32 %v2006, %v2006
    %v2235 = vmul.f32 %v2008, %v2008
    %v2236 = vmul.f32 %v2012, %v2012
    %v2237 = vmul.f32 %v2014, %v2014
    %v2238 = vmul.f32 %v2016, %v2016
    %v2239 = vmul.f32 %v2018, %v2018
    %v2240 = vmul.f32 %v2022, %v2022
    %v2241 = vmul.f32 %v2024, %v2024
    %v2242 = vmul.f32 %v2026, %v2026
    %v2243 = vmul.f32 %v2028, %v2028
    %v2244 = vmul.f32 %v2032, %v2032
    %v2245 = vmul.f32 %v2034, %v2034
    %v2246 = vmul.f32 %v2036, %v2036
    %v2247 = vmul.f32 %v2038, %v2038
    %v2248 = vmul.f32 %v2042, %v2042
    %v2249 = vmul.f32 %v2044, %v2044
    %v2250 = vmul.f32 %v2046, %v2046
    %v2251 = vmul.f32 %v2048, %v2048
    %v2252 = vmul.f32 %v2052, %v2052
    %v2253 = vmul.f32 %v2054, %v2054
    %v2254 = vmul.f32 %v2056, %v2056
    %v2255 = vmul.f32 %v2058, %v2058
    %v2256 = vmul.f32 %v2062, %v2062
    %v2257 = vmul.f32 %v2064, %v2064
    %v2258 = vmul.f32 %v2066, %v2066
    %v2259 = vmul.f32 %v2068, %v2068
    %v2260 = vmul.f32 %v2072, %v2072
    %v2261 = vmul.f32 %v2074, %v2074
    %v2262 = vmul.f32 %v2076, %v2076
    %v2263 = vmul.f32 %v2078, %v2078
    %v2264 = vmul.f32 %v2082, %v2082
    %v2265 = vmul.f32 %v2084, %v2084
    %v2266 = vmul.f32 %v2086, %v2086
    %v2267 = vmul.f32 %v2088, %v2088
    %v2268 = vmul.f32 %v2092, %v2092
    %v2269 = vmul.f32 %v2094, %v2094
    %v2270 = vmul.f32 %v2096, %v2096
    %v2271 = vmul.f32 %v2098, %v2098
    %v2272 = vmul.f32 %v2102, %v2102
    %v2273 = vmul.f32 %v2104, %v2104
    %v2274 = vmul.f32 %v2106, %v2106
    %v2275 = vmul.f32 %v2108, %v2108
    %v2276 = vmul.f32 %v2112, %v2112
    %v2277 = vmul.f32 %v2114, %v2114
    %v2278 = vmul.f32 %v2116, %v2116
    %v2279 = vmul.f32 %v2118, %v2118
    %v2280 = vadd.f32 %v2216, %v2217
    %2281 = vadd.xlane.f32.xlu0 %v2280
    %v2282 = vpop.xlane.xlu0 %2281
    %v2283 = vadd.f32 %v2218, %v2219
    %2284 = vadd.xlane.f32.xlu0 %v2283
    %v2285 = vpop.xlane.xlu0 %2284
    %v2286 = vadd.f32 %v2220, %v2221
    %2287 = vadd.xlane.f32.xlu0 %v2286
    %v2288 = vpop.xlane.xlu0 %2287
    %v2289 = vadd.f32 %v2222, %v2223
    %2290 = vadd.xlane.f32.xlu0 %v2289
    %v2291 = vpop.xlane.xlu0 %2290
    %v2292 = vadd.f32 %v2224, %v2225
    %2293 = vadd.xlane.f32.xlu0 %v2292
    %v2294 = vpop.xlane.xlu0 %2293
    %v2295 = vadd.f32 %v2226, %v2227
    %2296 = vadd.xlane.f32.xlu0 %v2295
    %v2297 = vpop.xlane.xlu0 %2296
    %v2298 = vadd.f32 %v2228, %v2229
    %2299 = vadd.xlane.f32.xlu0 %v2298
    %v2300 = vpop.xlane.xlu0 %2299
    %v2301 = vadd.f32 %v2230, %v2231
    %2302 = vadd.xlane.f32.xlu0 %v2301
    %v2303 = vpop.xlane.xlu0 %2302
    %v2304 = vadd.f32 %v2232, %v2233
    %2305 = vadd.xlane.f32.xlu0 %v2304
    %v2306 = vpop.xlane.xlu0 %2305
    %v2307 = vadd.f32 %v2234, %v2235
    %2308 = vadd.xlane.f32.xlu0 %v2307
    %v2309 = vpop.xlane.xlu0 %2308
    %v2310 = vadd.f32 %v2236, %v2237
    %2311 = vadd.xlane.f32.xlu0 %v2310
    %v2312 = vpop.xlane.xlu0 %2311
    %v2313 = vadd.f32 %v2238, %v2239
    %2314 = vadd.xlane.f32.xlu0 %v2313
    %v2315 = vpop.xlane.xlu0 %2314
    %v2316 = vadd.f32 %v2240, %v2241
    %2317 = vadd.xlane.f32.xlu0 %v2316
    %v2318 = vpop.xlane.xlu0 %2317
    %v2319 = vadd.f32 %v2242, %v2243
    %2320 = vadd.xlane.f32.xlu0 %v2319
    %v2321 = vpop.xlane.xlu0 %2320
    %v2322 = vadd.f32 %v2244, %v2245
    %2323 = vadd.xlane.f32.xlu0 %v2322
    %v2324 = vpop.xlane.xlu0 %2323
    %v2325 = vadd.f32 %v2246, %v2247
    %2326 = vadd.xlane.f32.xlu0 %v2325
    %v2327 = vpop.xlane.xlu0 %2326
    %v2328 = vadd.f32 %v2248, %v2249
    %2329 = vadd.xlane.f32.xlu0 %v2328
    %v2330 = vpop.xlane.xlu0 %2329
    %v2331 = vadd.f32 %v2250, %v2251
    %2332 = vadd.xlane.f32.xlu0 %v2331
    %v2333 = vpop.xlane.xlu0 %2332
    %v2334 = vadd.f32 %v2252, %v2253
    %2335 = vadd.xlane.f32.xlu0 %v2334
    %v2336 = vpop.xlane.xlu0 %2335
    %v2337 = vadd.f32 %v2254, %v2255
    %2338 = vadd.xlane.f32.xlu0 %v2337
    %v2339 = vpop.xlane.xlu0 %2338
    %v2340 = vadd.f32 %v2256, %v2257
    %2341 = vadd.xlane.f32.xlu0 %v2340
    %v2342 = vpop.xlane.xlu0 %2341
    %v2343 = vadd.f32 %v2258, %v2259
    %2344 = vadd.xlane.f32.xlu0 %v2343
    %v2345 = vpop.xlane.xlu0 %2344
    %v2346 = vadd.f32 %v2260, %v2261
    %2347 = vadd.xlane.f32.xlu0 %v2346
    %v2348 = vpop.xlane.xlu0 %2347
    %v2349 = vadd.f32 %v2262, %v2263
    %2350 = vadd.xlane.f32.xlu0 %v2349
    %v2351 = vpop.xlane.xlu0 %2350
    %v2352 = vadd.f32 %v2264, %v2265
    %2353 = vadd.xlane.f32.xlu0 %v2352
    %v2354 = vpop.xlane.xlu0 %2353
    %v2355 = vadd.f32 %v2266, %v2267
    %2356 = vadd.xlane.f32.xlu0 %v2355
    %v2357 = vpop.xlane.xlu0 %2356
    %v2358 = vadd.f32 %v2268, %v2269
    %2359 = vadd.xlane.f32.xlu0 %v2358
    %v2360 = vpop.xlane.xlu0 %2359
    %v2361 = vadd.f32 %v2270, %v2271
    %2362 = vadd.xlane.f32.xlu0 %v2361
    %v2363 = vpop.xlane.xlu0 %2362
    %v2364 = vadd.f32 %v2272, %v2273
    %2365 = vadd.xlane.f32.xlu0 %v2364
    %v2366 = vpop.xlane.xlu0 %2365
    %v2367 = vadd.f32 %v2274, %v2275
    %2368 = vadd.xlane.f32.xlu0 %v2367
    %v2369 = vpop.xlane.xlu0 %2368
    %v2370 = vadd.f32 %v2276, %v2277
    %2371 = vadd.xlane.f32.xlu0 %v2370
    %v2372 = vpop.xlane.xlu0 %2371
    %v2373 = vadd.f32 %v2278, %v2279
    %2374 = vadd.xlane.f32.xlu0 %v2373
    %v2375 = vpop.xlane.xlu0 %2374
    %v2376 = vmul.f32 %v2122, 0.00390625
    %v2377 = vmul.f32 %v2125, 0.00390625
    %v2378 = vmul.f32 %v2128, 0.00390625
    %v2379 = vmul.f32 %v2131, 0.00390625
    %v2380 = vmul.f32 %v2134, 0.00390625
    %v2381 = vmul.f32 %v2137, 0.00390625
    %v2382 = vmul.f32 %v2140, 0.00390625
    %v2383 = vmul.f32 %v2143, 0.00390625
    %v2384 = vmul.f32 %v2146, 0.00390625
    %v2385 = vmul.f32 %v2149, 0.00390625
    %v2386 = vmul.f32 %v2152, 0.00390625
    %v2387 = vmul.f32 %v2155, 0.00390625
    %v2388 = vmul.f32 %v2158, 0.00390625
    %v2389 = vmul.f32 %v2161, 0.00390625
    %v2390 = vmul.f32 %v2164, 0.00390625
    %v2391 = vmul.f32 %v2167, 0.00390625
    %v2392 = vmul.f32 %v2170, 0.00390625
    %v2393 = vmul.f32 %v2173, 0.00390625
    %v2394 = vmul.f32 %v2176, 0.00390625
    %v2395 = vmul.f32 %v2179, 0.00390625
    %v2396 = vmul.f32 %v2182, 0.00390625
    %v2397 = vmul.f32 %v2185, 0.00390625
    %v2398 = vmul.f32 %v2188, 0.00390625
    %v2399 = vmul.f32 %v2191, 0.00390625
    %v2400 = vmul.f32 %v2194, 0.00390625
    %v2401 = vmul.f32 %v2197, 0.00390625
    %v2402 = vmul.f32 %v2200, 0.00390625
    %v2403 = vmul.f32 %v2203, 0.00390625
    %v2404 = vmul.f32 %v2206, 0.00390625
    %v2405 = vmul.f32 %v2209, 0.00390625
    %v2406 = vmul.f32 %v2212, 0.00390625
    %v2407 = vmul.f32 %v2215, 0.00390625
    %v2408 = vmul.f32 %v2282, 0.00390625
    %v2409 = vmul.f32 %v2285, 0.00390625
    %v2410 = vmul.f32 %v2288, 0.00390625
    %v2411 = vmul.f32 %v2291, 0.00390625
    %v2412 = vmul.f32 %v2294, 0.00390625
    %v2413 = vmul.f32 %v2297, 0.00390625
    %v2414 = vmul.f32 %v2300, 0.00390625
    %v2415 = vmul.f32 %v2303, 0.00390625
    %v2416 = vmul.f32 %v2306, 0.00390625
    %v2417 = vmul.f32 %v2309, 0.00390625
    %v2418 = vmul.f32 %v2312, 0.00390625
    %v2419 = vmul.f32 %v2315, 0.00390625
    %v2420 = vmul.f32 %v2318, 0.00390625
    %v2421 = vmul.f32 %v2321, 0.00390625
    %v2422 = vmul.f32 %v2324, 0.00390625
    %v2423 = vmul.f32 %v2327, 0.00390625
    %v2424 = vmul.f32 %v2330, 0.00390625
    %v2425 = vmul.f32 %v2333, 0.00390625
    %v2426 = vmul.f32 %v2336, 0.00390625
    %v2427 = vmul.f32 %v2339, 0.00390625
    %v2428 = vmul.f32 %v2342, 0.00390625
    %v2429 = vmul.f32 %v2345, 0.00390625
    %v2430 = vmul.f32 %v2348, 0.00390625
    %v2431 = vmul.f32 %v2351, 0.00390625
    %v2432 = vmul.f32 %v2354, 0.00390625
    %v2433 = vmul.f32 %v2357, 0.00390625
    %v2434 = vmul.f32 %v2360, 0.00390625
    %v2435 = vmul.f32 %v2363, 0.00390625
    %v2436 = vmul.f32 %v2366, 0.00390625
    %v2437 = vmul.f32 %v2369, 0.00390625
    %v2438 = vmul.f32 %v2372, 0.00390625
    %v2439 = vmul.f32 %v2375, 0.00390625
    %v2440 = vmul.f32 %v2376, %v2376
    %v2441 = vmul.f32 %v2377, %v2377
    %v2442 = vmul.f32 %v2378, %v2378
    %v2443 = vmul.f32 %v2379, %v2379
    %v2444 = vmul.f32 %v2380, %v2380
    %v2445 = vmul.f32 %v2381, %v2381
    %v2446 = vmul.f32 %v2382, %v2382
    %v2447 = vmul.f32 %v2383, %v2383
    %v2448 = vmul.f32 %v2384, %v2384
    %v2449 = vmul.f32 %v2385, %v2385
    %v2450 = vmul.f32 %v2386, %v2386
    %v2451 = vmul.f32 %v2387, %v2387
    %v2452 = vmul.f32 %v2388, %v2388
    %v2453 = vmul.f32 %v2389, %v2389
    %v2454 = vmul.f32 %v2390, %v2390
    %v2455 = vmul.f32 %v2391, %v2391
    %v2456 = vmul.f32 %v2392, %v2392
    %v2457 = vmul.f32 %v2393, %v2393
    %v2458 = vmul.f32 %v2394, %v2394
    %v2459 = vmul.f32 %v2395, %v2395
    %v2460 = vmul.f32 %v2396, %v2396
    %v2461 = vmul.f32 %v2397, %v2397
    %v2462 = vmul.f32 %v2398, %v2398
    %v2463 = vmul.f32 %v2399, %v2399
    %v2464 = vmul.f32 %v2400, %v2400
    %v2465 = vmul.f32 %v2401, %v2401
    %v2466 = vmul.f32 %v2402, %v2402
    %v2467 = vmul.f32 %v2403, %v2403
    %v2468 = vmul.f32 %v2404, %v2404
    %v2469 = vmul.f32 %v2405, %v2405
    %v2470 = vmul.f32 %v2406, %v2406
    %v2471 = vmul.f32 %v2407, %v2407
    %v2472 = vsub.f32 %v2408, %v2440
    %v2473 = vsub.f32 %v2409, %v2441
    %v2474 = vsub.f32 %v2410, %v2442
    %v2475 = vsub.f32 %v2411, %v2443
    %v2476 = vsub.f32 %v2412, %v2444
    %v2477 = vsub.f32 %v2413, %v2445
    %v2478 = vsub.f32 %v2414, %v2446
    %v2479 = vsub.f32 %v2415, %v2447
    %v2480 = vsub.f32 %v2416, %v2448
    %v2481 = vsub.f32 %v2417, %v2449
    %v2482 = vsub.f32 %v2418, %v2450
    %v2483 = vsub.f32 %v2419, %v2451
    %v2484 = vsub.f32 %v2420, %v2452
    %v2485 = vsub.f32 %v2421, %v2453
    %v2486 = vsub.f32 %v2422, %v2454
    %v2487 = vsub.f32 %v2423, %v2455
    %v2488 = vsub.f32 %v2424, %v2456
    %v2489 = vsub.f32 %v2425, %v2457
    %v2490 = vsub.f32 %v2426, %v2458
    %v2491 = vsub.f32 %v2427, %v2459
    %v2492 = vsub.f32 %v2428, %v2460
    %v2493 = vsub.f32 %v2429, %v2461
    %v2494 = vsub.f32 %v2430, %v2462
    %v2495 = vsub.f32 %v2431, %v2463
    %v2496 = vsub.f32 %v2432, %v2464
    %v2497 = vsub.f32 %v2433, %v2465
    %v2498 = vsub.f32 %v2434, %v2466
    %v2499 = vsub.f32 %v2435, %v2467
    %v2500 = vsub.f32 %v2436, %v2468
    %v2501 = vsub.f32 %v2437, %v2469
    %v2502 = vsub.f32 %v2438, %v2470
    %v2503 = vsub.f32 %v2439, %v2471
    %v2504 = vmax.f32 %v2472, 0.0
    %v2505 = vmax.f32 %v2473, 0.0
    %v2506 = vmax.f32 %v2474, 0.0
    %v2507 = vmax.f32 %v2475, 0.0
    %v2508 = vmax.f32 %v2476, 0.0
    %v2509 = vmax.f32 %v2477, 0.0
    %v2510 = vmax.f32 %v2478, 0.0
    %v2511 = vmax.f32 %v2479, 0.0
    %v2512 = vmax.f32 %v2480, 0.0
    %v2513 = vmax.f32 %v2481, 0.0
    %v2514 = vmax.f32 %v2482, 0.0
    %v2515 = vmax.f32 %v2483, 0.0
    %v2516 = vmax.f32 %v2484, 0.0
    %v2517 = vmax.f32 %v2485, 0.0
    %v2518 = vmax.f32 %v2486, 0.0
    %v2519 = vmax.f32 %v2487, 0.0
    %v2520 = vmax.f32 %v2488, 0.0
    %v2521 = vmax.f32 %v2489, 0.0
    %v2522 = vmax.f32 %v2490, 0.0
    %v2523 = vmax.f32 %v2491, 0.0
    %v2524 = vmax.f32 %v2492, 0.0
    %v2525 = vmax.f32 %v2493, 0.0
    %v2526 = vmax.f32 %v2494, 0.0
    %v2527 = vmax.f32 %v2495, 0.0
    %v2528 = vmax.f32 %v2496, 0.0
    %v2529 = vmax.f32 %v2497, 0.0
    %v2530 = vmax.f32 %v2498, 0.0
    %v2531 = vmax.f32 %v2499, 0.0
    %v2532 = vmax.f32 %v2500, 0.0
    %v2533 = vmax.f32 %v2501, 0.0
    %v2534 = vmax.f32 %v2502, 0.0
    %v2535 = vmax.f32 %v2503, 0.0
    %v2536 = vsub.f32 %v1962, %v2376
    %v2537 = vsub.f32 %v1964, %v2376
    %v2538 = vsub.f32 %v1966, %v2377
    %v2539 = vsub.f32 %v1968, %v2377
    %v2540 = vsub.f32 %v1972, %v2378
    %v2541 = vsub.f32 %v1974, %v2378
    %v2542 = vsub.f32 %v1976, %v2379
    %v2543 = vsub.f32 %v1978, %v2379
    %v2544 = vsub.f32 %v1982, %v2380
    %v2545 = vsub.f32 %v1984, %v2380
    %v2546 = vsub.f32 %v1986, %v2381
    %v2547 = vsub.f32 %v1988, %v2381
    %v2548 = vsub.f32 %v1992, %v2382
    %v2549 = vsub.f32 %v1994, %v2382
    %v2550 = vsub.f32 %v1996, %v2383
    %v2551 = vsub.f32 %v1998, %v2383
    %v2552 = vsub.f32 %v2002, %v2384
    %v2553 = vsub.f32 %v2004, %v2384
    %v2554 = vsub.f32 %v2006, %v2385
    %v2555 = vsub.f32 %v2008, %v2385
    %v2556 = vsub.f32 %v2012, %v2386
    %v2557 = vsub.f32 %v2014, %v2386
    %v2558 = vsub.f32 %v2016, %v2387
    %v2559 = vsub.f32 %v2018, %v2387
    %v2560 = vsub.f32 %v2022, %v2388
    %v2561 = vsub.f32 %v2024, %v2388
    %v2562 = vsub.f32 %v2026, %v2389
    %v2563 = vsub.f32 %v2028, %v2389
    %v2564 = vsub.f32 %v2032, %v2390
    %v2565 = vsub.f32 %v2034, %v2390
    %v2566 = vsub.f32 %v2036, %v2391
    %v2567 = vsub.f32 %v2038, %v2391
    %v2568 = vsub.f32 %v2042, %v2392
    %v2569 = vsub.f32 %v2044, %v2392
    %v2570 = vsub.f32 %v2046, %v2393
    %v2571 = vsub.f32 %v2048, %v2393
    %v2572 = vsub.f32 %v2052, %v2394
    %v2573 = vsub.f32 %v2054, %v2394
    %v2574 = vsub.f32 %v2056, %v2395
    %v2575 = vsub.f32 %v2058, %v2395
    %v2576 = vsub.f32 %v2062, %v2396
    %v2577 = vsub.f32 %v2064, %v2396
    %v2578 = vsub.f32 %v2066, %v2397
    %v2579 = vsub.f32 %v2068, %v2397
    %v2580 = vsub.f32 %v2072, %v2398
    %v2581 = vsub.f32 %v2074, %v2398
    %v2582 = vsub.f32 %v2076, %v2399
    %v2583 = vsub.f32 %v2078, %v2399
    %v2584 = vsub.f32 %v2082, %v2400
    %v2585 = vsub.f32 %v2084, %v2400
    %v2586 = vsub.f32 %v2086, %v2401
    %v2587 = vsub.f32 %v2088, %v2401
    %v2588 = vsub.f32 %v2092, %v2402
    %v2589 = vsub.f32 %v2094, %v2402
    %v2590 = vsub.f32 %v2096, %v2403
    %v2591 = vsub.f32 %v2098, %v2403
    %v2592 = vsub.f32 %v2102, %v2404
    %v2593 = vsub.f32 %v2104, %v2404
    %v2594 = vsub.f32 %v2106, %v2405
    %v2595 = vsub.f32 %v2108, %v2405
    %v2596 = vsub.f32 %v2112, %v2406
    %v2597 = vsub.f32 %v2114, %v2406
    %v2598 = vsub.f32 %v2116, %v2407
    %v2599 = vsub.f32 %v2118, %v2407
    %v2600 = vadd.f32 %v2504, 1e-05
    %v2601 = vadd.f32 %v2505, 1e-05
    %v2602 = vadd.f32 %v2506, 1e-05
    %v2603 = vadd.f32 %v2507, 1e-05
    %v2604 = vadd.f32 %v2508, 1e-05
    %v2605 = vadd.f32 %v2509, 1e-05
    %v2606 = vadd.f32 %v2510, 1e-05
    %v2607 = vadd.f32 %v2511, 1e-05
    %v2608 = vadd.f32 %v2512, 1e-05
    %v2609 = vadd.f32 %v2513, 1e-05
    %v2610 = vadd.f32 %v2514, 1e-05
    %v2611 = vadd.f32 %v2515, 1e-05
    %v2612 = vadd.f32 %v2516, 1e-05
    %v2613 = vadd.f32 %v2517, 1e-05
    %v2614 = vadd.f32 %v2518, 1e-05
    %v2615 = vadd.f32 %v2519, 1e-05
    %v2616 = vadd.f32 %v2520, 1e-05
    %v2617 = vadd.f32 %v2521, 1e-05
    %v2618 = vadd.f32 %v2522, 1e-05
    %v2619 = vadd.f32 %v2523, 1e-05
    %v2620 = vadd.f32 %v2524, 1e-05
    %v2621 = vadd.f32 %v2525, 1e-05
    %v2622 = vadd.f32 %v2526, 1e-05
    %v2623 = vadd.f32 %v2527, 1e-05
    %v2624 = vadd.f32 %v2528, 1e-05
    %v2625 = vadd.f32 %v2529, 1e-05
    %v2626 = vadd.f32 %v2530, 1e-05
    %v2627 = vadd.f32 %v2531, 1e-05
    %v2628 = vadd.f32 %v2532, 1e-05
    %v2629 = vadd.f32 %v2533, 1e-05
    %v2630 = vadd.f32 %v2534, 1e-05
    %v2631 = vadd.f32 %v2535, 1e-05
    %v2632 = vrsqrt.pop %v2600
    %v2633 = vrsqrt.pop %v2601
    %v2634 = vrsqrt.pop %v2602
    %v2635 = vrsqrt.pop %v2603
    %v2636 = vrsqrt.pop %v2604
    %v2637 = vrsqrt.pop %v2605
    %v2638 = vrsqrt.pop %v2606
    %v2639 = vrsqrt.pop %v2607
    %v2640 = vrsqrt.pop %v2608
    %v2641 = vrsqrt.pop %v2609
    %v2642 = vrsqrt.pop %v2610
    %v2643 = vrsqrt.pop %v2611
    %v2644 = vrsqrt.pop %v2612
    %v2645 = vrsqrt.pop %v2613
    %v2646 = vrsqrt.pop %v2614
    %v2647 = vrsqrt.pop %v2615
    %v2648 = vrsqrt.pop %v2616
    %v2649 = vrsqrt.pop %v2617
    %v2650 = vrsqrt.pop %v2618
    %v2651 = vrsqrt.pop %v2619
    %v2652 = vrsqrt.pop %v2620
    %v2653 = vrsqrt.pop %v2621
    %v2654 = vrsqrt.pop %v2622
    %v2655 = vrsqrt.pop %v2623
    %v2656 = vrsqrt.pop %v2624
    %v2657 = vrsqrt.pop %v2625
    %v2658 = vrsqrt.pop %v2626
    %v2659 = vrsqrt.pop %v2627
    %v2660 = vrsqrt.pop %v2628
    %v2661 = vrsqrt.pop %v2629
    %v2662 = vrsqrt.pop %v2630
    %v2663 = vrsqrt.pop %v2631
    %v2664 = vmul.f32 %v2536, %v2632
    %v2665 = vmul.f32 %v2537, %v2632
    %v2666 = vmul.f32 %v2538, %v2633
    %v2667 = vmul.f32 %v2539, %v2633
    %v2668 = vmul.f32 %v2540, %v2634
    %v2669 = vmul.f32 %v2541, %v2634
    %v2670 = vmul.f32 %v2542, %v2635
    %v2671 = vmul.f32 %v2543, %v2635
    %v2672 = vmul.f32 %v2544, %v2636
    %v2673 = vmul.f32 %v2545, %v2636
    %v2674 = vmul.f32 %v2546, %v2637
    %v2675 = vmul.f32 %v2547, %v2637
    %v2676 = vmul.f32 %v2548, %v2638
    %v2677 = vmul.f32 %v2549, %v2638
    %v2678 = vmul.f32 %v2550, %v2639
    %v2679 = vmul.f32 %v2551, %v2639
    %v2680 = vmul.f32 %v2552, %v2640
    %v2681 = vmul.f32 %v2553, %v2640
    %v2682 = vmul.f32 %v2554, %v2641
    %v2683 = vmul.f32 %v2555, %v2641
    %v2684 = vmul.f32 %v2556, %v2642
    %v2685 = vmul.f32 %v2557, %v2642
    %v2686 = vmul.f32 %v2558, %v2643
    %v2687 = vmul.f32 %v2559, %v2643
    %v2688 = vmul.f32 %v2560, %v2644
    %v2689 = vmul.f32 %v2561, %v2644
    %v2690 = vmul.f32 %v2562, %v2645
    %v2691 = vmul.f32 %v2563, %v2645
    %v2692 = vmul.f32 %v2564, %v2646
    %v2693 = vmul.f32 %v2565, %v2646
    %v2694 = vmul.f32 %v2566, %v2647
    %v2695 = vmul.f32 %v2567, %v2647
    %v2696 = vmul.f32 %v2568, %v2648
    %v2697 = vmul.f32 %v2569, %v2648
    %v2698 = vmul.f32 %v2570, %v2649
    %v2699 = vmul.f32 %v2571, %v2649
    %v2700 = vmul.f32 %v2572, %v2650
    %v2701 = vmul.f32 %v2573, %v2650
    %v2702 = vmul.f32 %v2574, %v2651
    %v2703 = vmul.f32 %v2575, %v2651
    %v2704 = vmul.f32 %v2576, %v2652
    %v2705 = vmul.f32 %v2577, %v2652
    %v2706 = vmul.f32 %v2578, %v2653
    %v2707 = vmul.f32 %v2579, %v2653
    %v2708 = vmul.f32 %v2580, %v2654
    %v2709 = vmul.f32 %v2581, %v2654
    %v2710 = vmul.f32 %v2582, %v2655
    %v2711 = vmul.f32 %v2583, %v2655
    %v2712 = vmul.f32 %v2584, %v2656
    %v2713 = vmul.f32 %v2585, %v2656
    %v2714 = vmul.f32 %v2586, %v2657
    %v2715 = vmul.f32 %v2587, %v2657
    %v2716 = vmul.f32 %v2588, %v2658
    %v2717 = vmul.f32 %v2589, %v2658
    %v2718 = vmul.f32 %v2590, %v2659
    %v2719 = vmul.f32 %v2591, %v2659
    %v2720 = vmul.f32 %v2592, %v2660
    %v2721 = vmul.f32 %v2593, %v2660
    %v2722 = vmul.f32 %v2594, %v2661
    %v2723 = vmul.f32 %v2595, %v2661
    %v2724 = vmul.f32 %v2596, %v2662
    %v2725 = vmul.f32 %v2597, %v2662
    %v2726 = vmul.f32 %v2598, %v2663
    %v2727 = vmul.f32 %v2599, %v2663
    %v2728 = vlaneseq
    %v2729 = vshrl.u32 %v2728, 7
    %v2730 = vsub.s32 4, %v2729
    %v2731 = vrot.slane %v563, %v2730
    %v2732 = vlaneseq
    %v2733 = vshrl.u32 %v2732, 7
    %v2734 = vsub.s32 4, %v2733
    %v2735 = vrot.slane %v564, %v2734
    %v2736 = vmul.f32 %v2664, %v2731
    %v2737 = vmul.f32 %v2665, %v2735
    %v2738 = vmul.f32 %v2666, %v2731
    %v2739 = vmul.f32 %v2667, %v2735
    %v2740 = vmul.f32 %v2668, %v2731
    %v2741 = vmul.f32 %v2669, %v2735
    %v2742 = vmul.f32 %v2670, %v2731
    %v2743 = vmul.f32 %v2671, %v2735
    %v2744 = vmul.f32 %v2672, %v2731
    %v2745 = vmul.f32 %v2673, %v2735
    %v2746 = vmul.f32 %v2674, %v2731
    %v2747 = vmul.f32 %v2675, %v2735
    %v2748 = vmul.f32 %v2676, %v2731
    %v2749 = vmul.f32 %v2677, %v2735
    %v2750 = vmul.f32 %v2678, %v2731
    %v2751 = vmul.f32 %v2679, %v2735
    %v2752 = vmul.f32 %v2680, %v2731
    %v2753 = vmul.f32 %v2681, %v2735
    %v2754 = vmul.f32 %v2682, %v2731
    %v2755 = vmul.f32 %v2683, %v2735
    %v2756 = vmul.f32 %v2684, %v2731
    %v2757 = vmul.f32 %v2685, %v2735
    %v2758 = vmul.f32 %v2686, %v2731
    %v2759 = vmul.f32 %v2687, %v2735
    %v2760 = vmul.f32 %v2688, %v2731
    %v2761 = vmul.f32 %v2689, %v2735
    %v2762 = vmul.f32 %v2690, %v2731
    %v2763 = vmul.f32 %v2691, %v2735
    %v2764 = vmul.f32 %v2692, %v2731
    %v2765 = vmul.f32 %v2693, %v2735
    %v2766 = vmul.f32 %v2694, %v2731
    %v2767 = vmul.f32 %v2695, %v2735
    %v2768 = vmul.f32 %v2696, %v2731
    %v2769 = vmul.f32 %v2697, %v2735
    %v2770 = vmul.f32 %v2698, %v2731
    %v2771 = vmul.f32 %v2699, %v2735
    %v2772 = vmul.f32 %v2700, %v2731
    %v2773 = vmul.f32 %v2701, %v2735
    %v2774 = vmul.f32 %v2702, %v2731
    %v2775 = vmul.f32 %v2703, %v2735
    %v2776 = vmul.f32 %v2704, %v2731
    %v2777 = vmul.f32 %v2705, %v2735
    %v2778 = vmul.f32 %v2706, %v2731
    %v2779 = vmul.f32 %v2707, %v2735
    %v2780 = vmul.f32 %v2708, %v2731
    %v2781 = vmul.f32 %v2709, %v2735
    %v2782 = vmul.f32 %v2710, %v2731
    %v2783 = vmul.f32 %v2711, %v2735
    %v2784 = vmul.f32 %v2712, %v2731
    %v2785 = vmul.f32 %v2713, %v2735
    %v2786 = vmul.f32 %v2714, %v2731
    %v2787 = vmul.f32 %v2715, %v2735
    %v2788 = vmul.f32 %v2716, %v2731
    %v2789 = vmul.f32 %v2717, %v2735
    %v2790 = vmul.f32 %v2718, %v2731
    %v2791 = vmul.f32 %v2719, %v2735
    %v2792 = vmul.f32 %v2720, %v2731
    %v2793 = vmul.f32 %v2721, %v2735
    %v2794 = vmul.f32 %v2722, %v2731
    %v2795 = vmul.f32 %v2723, %v2735
    %v2796 = vmul.f32 %v2724, %v2731
    %v2797 = vmul.f32 %v2725, %v2735
    %v2798 = vmul.f32 %v2726, %v2731
    %v2799 = vmul.f32 %v2727, %v2735
    %v2800 = vlaneseq
    %v2801 = vshrl.u32 %v2800, 7
    %v2802 = vsub.s32 5, %v2801
    %v2803 = vrot.slane %v563, %v2802
    %v2804 = vlaneseq
    %v2805 = vshrl.u32 %v2804, 7
    %v2806 = vsub.s32 5, %v2805
    %v2807 = vrot.slane %v564, %v2806
    %v2808 = vadd.f32 %v2736, %v2803
    %v2809 = vadd.f32 %v2737, %v2807
    %v2810 = vadd.f32 %v2738, %v2803
    %v2811 = vadd.f32 %v2739, %v2807
    %v2812 = vadd.f32 %v2740, %v2803
    %v2813 = vadd.f32 %v2741, %v2807
    %v2814 = vadd.f32 %v2742, %v2803
    %v2815 = vadd.f32 %v2743, %v2807
    %v2816 = vadd.f32 %v2744, %v2803
    %v2817 = vadd.f32 %v2745, %v2807
    %v2818 = vadd.f32 %v2746, %v2803
    %v2819 = vadd.f32 %v2747, %v2807
    %v2820 = vadd.f32 %v2748, %v2803
    %v2821 = vadd.f32 %v2749, %v2807
    %v2822 = vadd.f32 %v2750, %v2803
    %v2823 = vadd.f32 %v2751, %v2807
    %v2824 = vadd.f32 %v2752, %v2803
    %v2825 = vadd.f32 %v2753, %v2807
    %v2826 = vadd.f32 %v2754, %v2803
    %v2827 = vadd.f32 %v2755, %v2807
    %v2828 = vadd.f32 %v2756, %v2803
    %v2829 = vadd.f32 %v2757, %v2807
    %v2830 = vadd.f32 %v2758, %v2803
    %v2831 = vadd.f32 %v2759, %v2807
    %v2832 = vadd.f32 %v2760, %v2803
    %v2833 = vadd.f32 %v2761, %v2807
    %v2834 = vadd.f32 %v2762, %v2803
    %v2835 = vadd.f32 %v2763, %v2807
    %v2836 = vadd.f32 %v2764, %v2803
    %v2837 = vadd.f32 %v2765, %v2807
    %v2838 = vadd.f32 %v2766, %v2803
    %v2839 = vadd.f32 %v2767, %v2807
    %v2840 = vadd.f32 %v2768, %v2803
    %v2841 = vadd.f32 %v2769, %v2807
    %v2842 = vadd.f32 %v2770, %v2803
    %v2843 = vadd.f32 %v2771, %v2807
    %v2844 = vadd.f32 %v2772, %v2803
    %v2845 = vadd.f32 %v2773, %v2807
    %v2846 = vadd.f32 %v2774, %v2803
    %v2847 = vadd.f32 %v2775, %v2807
    %v2848 = vadd.f32 %v2776, %v2803
    %v2849 = vadd.f32 %v2777, %v2807
    %v2850 = vadd.f32 %v2778, %v2803
    %v2851 = vadd.f32 %v2779, %v2807
    %v2852 = vadd.f32 %v2780, %v2803
    %v2853 = vadd.f32 %v2781, %v2807
    %v2854 = vadd.f32 %v2782, %v2803
    %v2855 = vadd.f32 %v2783, %v2807
    %v2856 = vadd.f32 %v2784, %v2803
    %v2857 = vadd.f32 %v2785, %v2807
    %v2858 = vadd.f32 %v2786, %v2803
    %v2859 = vadd.f32 %v2787, %v2807
    %v2860 = vadd.f32 %v2788, %v2803
    %v2861 = vadd.f32 %v2789, %v2807
    %v2862 = vadd.f32 %v2790, %v2803
    %v2863 = vadd.f32 %v2791, %v2807
    %v2864 = vadd.f32 %v2792, %v2803
    %v2865 = vadd.f32 %v2793, %v2807
    %v2866 = vadd.f32 %v2794, %v2803
    %v2867 = vadd.f32 %v2795, %v2807
    %v2868 = vadd.f32 %v2796, %v2803
    %v2869 = vadd.f32 %v2797, %v2807
    %v2870 = vadd.f32 %v2798, %v2803
    %v2871 = vadd.f32 %v2799, %v2807
    %v2872 = vtanh.pop %v2808
    %v2873 = vtanh.pop %v2809
    %v2874 = vtanh.pop %v2810
    %v2875 = vtanh.pop %v2811
    %v2876 = vtanh.pop %v2812
    %v2877 = vtanh.pop %v2813
    %v2878 = vtanh.pop %v2814
    %v2879 = vtanh.pop %v2815
    %v2880 = vtanh.pop %v2816
    %v2881 = vtanh.pop %v2817
    %v2882 = vtanh.pop %v2818
    %v2883 = vtanh.pop %v2819
    %v2884 = vtanh.pop %v2820
    %v2885 = vtanh.pop %v2821
    %v2886 = vtanh.pop %v2822
    %v2887 = vtanh.pop %v2823
    %v2888 = vtanh.pop %v2824
    %v2889 = vtanh.pop %v2825
    %v2890 = vtanh.pop %v2826
    %v2891 = vtanh.pop %v2827
    %v2892 = vtanh.pop %v2828
    %v2893 = vtanh.pop %v2829
    %v2894 = vtanh.pop %v2830
    %v2895 = vtanh.pop %v2831
    %v2896 = vtanh.pop %v2832
    %v2897 = vtanh.pop %v2833
    %v2898 = vtanh.pop %v2834
    %v2899 = vtanh.pop %v2835
    %v2900 = vtanh.pop %v2836
    %v2901 = vtanh.pop %v2837
    %v2902 = vtanh.pop %v2838
    %v2903 = vtanh.pop %v2839
    %v2904 = vtanh.pop %v2840
    %v2905 = vtanh.pop %v2841
    %v2906 = vtanh.pop %v2842
    %v2907 = vtanh.pop %v2843
    %v2908 = vtanh.pop %v2844
    %v2909 = vtanh.pop %v2845
    %v2910 = vtanh.pop %v2846
    %v2911 = vtanh.pop %v2847
    %v2912 = vtanh.pop %v2848
    %v2913 = vtanh.pop %v2849
    %v2914 = vtanh.pop %v2850
    %v2915 = vtanh.pop %v2851
    %v2916 = vtanh.pop %v2852
    %v2917 = vtanh.pop %v2853
    %v2918 = vtanh.pop %v2854
    %v2919 = vtanh.pop %v2855
    %v2920 = vtanh.pop %v2856
    %v2921 = vtanh.pop %v2857
    %v2922 = vtanh.pop %v2858
    %v2923 = vtanh.pop %v2859
    %v2924 = vtanh.pop %v2860
    %v2925 = vtanh.pop %v2861
    %v2926 = vtanh.pop %v2862
    %v2927 = vtanh.pop %v2863
    %v2928 = vtanh.pop %v2864
    %v2929 = vtanh.pop %v2865
    %v2930 = vtanh.pop %v2866
    %v2931 = vtanh.pop %v2867
    %v2932 = vtanh.pop %v2868
    %v2933 = vtanh.pop %v2869
    %v2934 = vtanh.pop %v2870
    %v2935 = vtanh.pop %v2871
    %v2936 = vpack.c.bf16 %v2874, %v2872
    %v2937 = vpack.c.bf16 %v2875, %v2873
    %v2938 = vpack.c.bf16 %v2878, %v2876
    %v2939 = vpack.c.bf16 %v2879, %v2877
    %v2940 = vpack.c.bf16 %v2882, %v2880
    %v2941 = vpack.c.bf16 %v2883, %v2881
    %v2942 = vpack.c.bf16 %v2886, %v2884
    %v2943 = vpack.c.bf16 %v2887, %v2885
    %v2944 = vpack.c.bf16 %v2890, %v2888
    %v2945 = vpack.c.bf16 %v2891, %v2889
    %v2946 = vpack.c.bf16 %v2894, %v2892
    %v2947 = vpack.c.bf16 %v2895, %v2893
    %v2948 = vpack.c.bf16 %v2898, %v2896
    %v2949 = vpack.c.bf16 %v2899, %v2897
    %v2950 = vpack.c.bf16 %v2902, %v2900
    %v2951 = vpack.c.bf16 %v2903, %v2901
    %v2952 = vpack.c.bf16 %v2906, %v2904
    %v2953 = vpack.c.bf16 %v2907, %v2905
    %v2954 = vpack.c.bf16 %v2910, %v2908
    %v2955 = vpack.c.bf16 %v2911, %v2909
    %v2956 = vpack.c.bf16 %v2914, %v2912
    %v2957 = vpack.c.bf16 %v2915, %v2913
    %v2958 = vpack.c.bf16 %v2918, %v2916
    %v2959 = vpack.c.bf16 %v2919, %v2917
    %v2960 = vpack.c.bf16 %v2922, %v2920
    %v2961 = vpack.c.bf16 %v2923, %v2921
    %v2962 = vpack.c.bf16 %v2926, %v2924
    %v2963 = vpack.c.bf16 %v2927, %v2925
    %v2964 = vpack.c.bf16 %v2930, %v2928
    %v2965 = vpack.c.bf16 %v2931, %v2929
    %v2966 = vpack.c.bf16 %v2934, %v2932
    %v2967 = vpack.c.bf16 %v2935, %v2933
    %v2968 = vld [vmem:[#allocation2] sm:$0xf]
    %v2969 = vld [vmem:[#allocation2 + $0x4] sm:$0xf]
    %v2970 = vld [vmem:[#allocation2 + $0x8] sm:$0xf]
    %v2971 = vld [vmem:[#allocation2 + $0xc] sm:$0xf]
    %v2972 = vld [vmem:[#allocation2 + $0x10] sm:$0xf]
    %v2973 = vld [vmem:[#allocation2 + $0x14] sm:$0xf]
    %v2974 = vld [vmem:[#allocation2 + $0x18] sm:$0xf]
    %v2975 = vld [vmem:[#allocation2 + $0x1c] sm:$0xf]
    %v2976 = vld [vmem:[#allocation2 + $0x20] sm:$0xf]
    %v2977 = vld [vmem:[#allocation2 + $0x24] sm:$0xf]
    %v2978 = vld [vmem:[#allocation2 + $0x28] sm:$0xf]
    %v2979 = vld [vmem:[#allocation2 + $0x2c] sm:$0xf]
    %v2980 = vld [vmem:[#allocation2 + $0x30] sm:$0xf]
    %v2981 = vld [vmem:[#allocation2 + $0x34] sm:$0xf]
    %v2982 = vld [vmem:[#allocation2 + $0x38] sm:$0xf]
    %v2983 = vld [vmem:[#allocation2 + $0x3c] sm:$0xf]
    %v2984 = vld [vmem:[#allocation2 + $0x40] sm:$0xf]
    %v2985 = vld [vmem:[#allocation2 + $0x44] sm:$0xf]
    %v2986 = vld [vmem:[#allocation2 + $0x48] sm:$0xf]
    %v2987 = vld [vmem:[#allocation2 + $0x4c] sm:$0xf]
    %v2988 = vld [vmem:[#allocation2 + $0x50] sm:$0xf]
    %v2989 = vld [vmem:[#allocation2 + $0x54] sm:$0xf]
    %v2990 = vld [vmem:[#allocation2 + $0x58] sm:$0xf]
    %v2991 = vld [vmem:[#allocation2 + $0x5c] sm:$0xf]
    %v2992 = vld [vmem:[#allocation2 + $0x60] sm:$0xf]
    %v2993 = vld [vmem:[#allocation2 + $0x64] sm:$0xf]
    %v2994 = vld [vmem:[#allocation2 + $0x68] sm:$0xf]
    %v2995 = vld [vmem:[#allocation2 + $0x6c] sm:$0xf]
    %v2996 = vld [vmem:[#allocation2 + $0x70] sm:$0xf]
    %v2997 = vld [vmem:[#allocation2 + $0x74] sm:$0xf]
    %v2998 = vld [vmem:[#allocation2 + $0x78] sm:$0xf]
    %v2999 = vld [vmem:[#allocation2 + $0x7c] sm:$0xf]
    %v3000 = vlaneseq
    %v3001 = vshrl.u32 %v3000, 7
    %v3002 = vsub.s32 0, %v3001
    %v3003 = vrot.slane %v565, %v3002
    %v3036 = vunpack.c.l.b16 %v2968
    %v3037 = vunpack.c.l.b16 %v2969
    %v3038 = vunpack.c.l.b16 %v2970
    %v3039 = vunpack.c.l.b16 %v2971
    %v3040 = vunpack.c.l.b16 %v2972
    %v3041 = vunpack.c.l.b16 %v2973
    %v3042 = vunpack.c.l.b16 %v2974
    %v3043 = vunpack.c.l.b16 %v2975
    %v3044 = vunpack.c.l.b16 %v2976
    %v3045 = vunpack.c.l.b16 %v2977
    %v3046 = vunpack.c.l.b16 %v2978
    %v3047 = vunpack.c.l.b16 %v2979
    %v3048 = vunpack.c.l.b16 %v2980
    %v3049 = vunpack.c.l.b16 %v2981
    %v3050 = vunpack.c.l.b16 %v2982
    %v3051 = vunpack.c.l.b16 %v2983
    %v3052 = vunpack.c.l.b16 %v2984
    %v3053 = vunpack.c.l.b16 %v2985
    %v3054 = vunpack.c.l.b16 %v2986
    %v3055 = vunpack.c.l.b16 %v2987
    %v3056 = vunpack.c.l.b16 %v2988
    %v3057 = vunpack.c.l.b16 %v2989
    %v3058 = vunpack.c.l.b16 %v2990
    %v3059 = vunpack.c.l.b16 %v2991
    %v3060 = vunpack.c.l.b16 %v2992
    %v3061 = vunpack.c.l.b16 %v2993
    %v3062 = vunpack.c.l.b16 %v2994
    %v3063 = vunpack.c.l.b16 %v2995
    %v3064 = vunpack.c.l.b16 %v2996
    %v3065 = vunpack.c.l.b16 %v2997
    %v3066 = vunpack.c.l.b16 %v2998
    %v3067 = vunpack.c.l.b16 %v2999
    %v3068 = vpack.c.b16 %v3037, %v3036
    %v3069 = vpack.c.b16 %v3039, %v3038
    %v3070 = vpack.c.b16 %v3041, %v3040
    %v3071 = vpack.c.b16 %v3043, %v3042
    %v3072 = vpack.c.b16 %v3045, %v3044
    %v3073 = vpack.c.b16 %v3047, %v3046
    %v3074 = vpack.c.b16 %v3049, %v3048
    %v3075 = vpack.c.b16 %v3051, %v3050
    %v3076 = vpack.c.b16 %v3053, %v3052
    %v3077 = vpack.c.b16 %v3055, %v3054
    %v3078 = vpack.c.b16 %v3057, %v3056
    %v3079 = vpack.c.b16 %v3059, %v3058
    %v3080 = vpack.c.b16 %v3061, %v3060
    %v3081 = vpack.c.b16 %v3063, %v3062
    %v3082 = vpack.c.b16 %v3065, %v3064
    %v3083 = vpack.c.b16 %v3067, %v3066
    %3100 = vmatprep.subr.bf16.mxu0 0
    %3101 = vmatpush1.bf16.msra.mxu0 %v3068
    %3102 = vmatprep.subr.bf16.mxu0 0
    %3103 = vmatpush1.bf16.msra.mxu0 %v3069
    %3104 = vmatprep.subr.bf16.mxu0 0
    %3105 = vmatpush1.bf16.msra.mxu0 %v3070
    %3106 = vmatprep.subr.bf16.mxu0 0
    %3107 = vmatpush1.bf16.msra.mxu0 %v3071
    %3108 = vmatprep.subr.bf16.mxu0 0
    %3109 = vmatpush1.bf16.msra.mxu0 %v3072
    %3110 = vmatprep.subr.bf16.mxu0 0
    %3111 = vmatpush1.bf16.msra.mxu0 %v3073
    %3112 = vmatprep.subr.bf16.mxu0 0
    %3113 = vmatpush1.bf16.msra.mxu0 %v3074
    %3114 = vmatprep.subr.bf16.mxu0 0
    %3115 = vmatpush1.bf16.msra.mxu0 %v3075
    %3116 = vmatprep.subr.bf16.mxu0 0
    %3117 = vmatpush1.bf16.msra.mxu0 %v3076
    %3118 = vmatprep.subr.bf16.mxu0 0
    %3119 = vmatpush1.bf16.msra.mxu0 %v3077
    %3120 = vmatprep.subr.bf16.mxu0 0
    %3121 = vmatpush1.bf16.msra.mxu0 %v3078
    %3122 = vmatprep.subr.bf16.mxu0 0
    %3123 = vmatpush1.bf16.msra.mxu0 %v3079
    %3124 = vmatprep.subr.bf16.mxu0 0
    %3125 = vmatpush1.bf16.msra.mxu0 %v3080
    %3126 = vmatprep.subr.bf16.mxu0 0
    %3127 = vmatpush1.bf16.msra.mxu0 %v3081
    %3128 = vmatprep.subr.bf16.mxu0 0
    %3129 = vmatpush1.bf16.msra.mxu0 %v3082
    %3130 = vmatprep.subr.bf16.mxu0 0
    %3131 = vmatpush1.bf16.msra.mxu0 %v3083
    %3132 = vmatprep.mubr.bf16.mxu0 %v2937
    %3133 = vmatmul.mubr.bf16.gmra.mrb[0].mxu0 %v2936
    %v3134 = vpop.f32.mrb[0].mxu0
    %v3135 = vadd.f32 %v3003, %v3134
    %v3136 = vpop.f32.mrb[0].mxu0
    %v3137 = vpop.f32.mrb[0].mxu0
    %v3138 = vadd.f32 %v3003, %v3137
    %v3139 = vpop.f32.mrb[0].mxu0
    %3140 = vmatprep.mubr.bf16.mxu0 %v2939
    %3141 = vmatmul.mubr.bf16.gmra.mrb[0].mxu0 %v2938
    %v3142 = vpop.f32.mrb[0].mxu0
    %v3143 = vadd.f32 %v3003, %v3142
    %v3144 = vpop.f32.mrb[0].mxu0
    %v3145 = vpop.f32.mrb[0].mxu0
    %v3146 = vadd.f32 %v3003, %v3145
    %v3147 = vpop.f32.mrb[0].mxu0
    %3148 = vmatprep.mubr.bf16.mxu0 %v2941
    %3149 = vmatmul.mubr.bf16.gmra.mrb[0].mxu0 %v2940
    %v3150 = vpop.f32.mrb[0].mxu0
    %v3151 = vadd.f32 %v3003, %v3150
    %v3152 = vpop.f32.mrb[0].mxu0
    %v3153 = vpop.f32.mrb[0].mxu0
    %v3154 = vadd.f32 %v3003, %v3153
    %v3155 = vpop.f32.mrb[0].mxu0
    %3156 = vmatprep.mubr.bf16.mxu0 %v2943
    %3157 = vmatmul.mubr.bf16.gmra.mrb[0].mxu0 %v2942
    %v3158 = vpop.f32.mrb[0].mxu0
    %v3159 = vadd.f32 %v3003, %v3158
    %v3160 = vpop.f32.mrb[0].mxu0
    %v3161 = vpop.f32.mrb[0].mxu0
    %v3162 = vadd.f32 %v3003, %v3161
    %v3163 = vpop.f32.mrb[0].mxu0
    %3164 = vmatprep.mubr.bf16.mxu0 %v2945
    %3165 = vmatmul.mubr.bf16.gmra.mrb[0].mxu0 %v2944
    %v3166 = vpop.f32.mrb[0].mxu0
    %v3167 = vadd.f32 %v3003, %v3166
    %v3168 = vpop.f32.mrb[0].mxu0
    %v3169 = vpop.f32.mrb[0].mxu0
    %v3170 = vadd.f32 %v3003, %v3169
    %v3171 = vpop.f32.mrb[0].mxu0
    %3172 = vmatprep.mubr.bf16.mxu0 %v2947
    %3173 = vmatmul.mubr.bf16.gmra.mrb[0].mxu0 %v2946
    %v3174 = vpop.f32.mrb[0].mxu0
    %v3175 = vadd.f32 %v3003, %v3174
    %v3176 = vpop.f32.mrb[0].mxu0
    %v3177 = vpop.f32.mrb[0].mxu0
    %v3178 = vadd.f32 %v3003, %v3177
    %v3179 = vpop.f32.mrb[0].mxu0
    %3180 = vmatprep.mubr.bf16.mxu0 %v2949
    %3181 = vmatmul.mubr.bf16.gmra.mrb[0].mxu0 %v2948
    %v3182 = vpop.f32.mrb[0].mxu0
    %v3183 = vadd.f32 %v3003, %v3182
    %v3184 = vpop.f32.mrb[0].mxu0
    %v3185 = vpop.f32.mrb[0].mxu0
    %v3186 = vadd.f32 %v3003, %v3185
    %v3187 = vpop.f32.mrb[0].mxu0
    %3188 = vmatprep.mubr.bf16.mxu0 %v2951
    %3189 = vmatmul.mubr.bf16.gmra.mrb[0].mxu0 %v2950
    %v3190 = vpop.f32.mrb[0].mxu0
    %v3191 = vadd.f32 %v3003, %v3190
    %v3192 = vpop.f32.mrb[0].mxu0
    %v3193 = vpop.f32.mrb[0].mxu0
    %v3194 = vadd.f32 %v3003, %v3193
    %v3195 = vpop.f32.mrb[0].mxu0
    %3196 = vmatprep.mubr.bf16.mxu0 %v2953
    %3197 = vmatmul.mubr.bf16.gmra.mrb[0].mxu0 %v2952
    %v3198 = vpop.f32.mrb[0].mxu0
    %v3199 = vadd.f32 %v3003, %v3198
    %v3200 = vpop.f32.mrb[0].mxu0
    %v3201 = vpop.f32.mrb[0].mxu0
    %v3202 = vadd.f32 %v3003, %v3201
    %v3203 = vpop.f32.mrb[0].mxu0
    %3204 = vmatprep.mubr.bf16.mxu0 %v2955
    %3205 = vmatmul.mubr.bf16.gmra.mrb[0].mxu0 %v2954
    %v3206 = vpop.f32.mrb[0].mxu0
    %v3207 = vadd.f32 %v3003, %v3206
    %v3208 = vpop.f32.mrb[0].mxu0
    %v3209 = vpop.f32.mrb[0].mxu0
    %v3210 = vadd.f32 %v3003, %v3209
    %v3211 = vpop.f32.mrb[0].mxu0
    %3212 = vmatprep.mubr.bf16.mxu0 %v2957
    %3213 = vmatmul.mubr.bf16.gmra.mrb[0].mxu0 %v2956
    %v3214 = vpop.f32.mrb[0].mxu0
    %v3215 = vadd.f32 %v3003, %v3214
    %v3216 = vpop.f32.mrb[0].mxu0
    %v3217 = vpop.f32.mrb[0].mxu0
    %v3218 = vadd.f32 %v3003, %v3217
    %v3219 = vpop.f32.mrb[0].mxu0
    %3220 = vmatprep.mubr.bf16.mxu0 %v2959
    %3221 = vmatmul.mubr.bf16.gmra.mrb[0].mxu0 %v2958
    %v3222 = vpop.f32.mrb[0].mxu0
    %v3223 = vadd.f32 %v3003, %v3222
    %v3224 = vpop.f32.mrb[0].mxu0
    %v3225 = vpop.f32.mrb[0].mxu0
    %v3226 = vadd.f32 %v3003, %v3225
    %v3227 = vpop.f32.mrb[0].mxu0
    %3228 = vmatprep.mubr.bf16.mxu0 %v2961
    %3229 = vmatmul.mubr.bf16.gmra.mrb[0].mxu0 %v2960
    %v3230 = vpop.f32.mrb[0].mxu0
    %v3231 = vadd.f32 %v3003, %v3230
    %v3232 = vpop.f32.mrb[0].mxu0
    %v3233 = vpop.f32.mrb[0].mxu0
    %v3234 = vadd.f32 %v3003, %v3233
    %v3235 = vpop.f32.mrb[0].mxu0
    %3236 = vmatprep.mubr.bf16.mxu0 %v2963
    %3237 = vmatmul.mubr.bf16.gmra.mrb[0].mxu0 %v2962
    %v3238 = vpop.f32.mrb[0].mxu0
    %v3239 = vadd.f32 %v3003, %v3238
    %v3240 = vpop.f32.mrb[0].mxu0
    %v3241 = vpop.f32.mrb[0].mxu0
    %v3242 = vadd.f32 %v3003, %v3241
    %v3243 = vpop.f32.mrb[0].mxu0
    %3244 = vmatprep.mubr.bf16.mxu0 %v2965
    %3245 = vmatmul.mubr.bf16.gmra.mrb[0].mxu0 %v2964
    %v3246 = vpop.f32.mrb[0].mxu0
    %v3247 = vadd.f32 %v3003, %v3246
    %v3248 = vpop.f32.mrb[0].mxu0
    %v3249 = vpop.f32.mrb[0].mxu0
    %v3250 = vadd.f32 %v3003, %v3249
    %v3251 = vpop.f32.mrb[0].mxu0
    %3252 = vmatprep.mubr.bf16.mxu0 %v2967
    %3253 = vmatmul.mubr.bf16.gmra.mrb[0].mxu0 %v2966
    %v3254 = vpop.f32.mrb[0].mxu0
    %v3255 = vadd.f32 %v3003, %v3254
    %v3256 = vpop.f32.mrb[0].mxu0
    %v3257 = vpop.f32.mrb[0].mxu0
    %v3258 = vadd.f32 %v3003, %v3257
    %v3259 = vpop.f32.mrb[0].mxu0
    %3260 = vdwg.mxu0
    %3261 = vadd.xlane.f32.xlu0 %v3135
    %v3262 = vpop.xlane.xlu0 %3261
    %3263 = vadd.xlane.f32.xlu0 %v3138
    %v3264 = vpop.xlane.xlu0 %3263
    %3265 = vadd.xlane.f32.xlu0 %v3143
    %v3266 = vpop.xlane.xlu0 %3265
    %3267 = vadd.xlane.f32.xlu0 %v3146
    %v3268 = vpop.xlane.xlu0 %3267
    %3269 = vadd.xlane.f32.xlu0 %v3151
    %v3270 = vpop.xlane.xlu0 %3269
    %3271 = vadd.xlane.f32.xlu0 %v3154
    %v3272 = vpop.xlane.xlu0 %3271
    %3273 = vadd.xlane.f32.xlu0 %v3159
    %v3274 = vpop.xlane.xlu0 %3273
    %3275 = vadd.xlane.f32.xlu0 %v3162
    %v3276 = vpop.xlane.xlu0 %3275
    %3277 = vadd.xlane.f32.xlu0 %v3167
    %v3278 = vpop.xlane.xlu0 %3277
    %3279 = vadd.xlane.f32.xlu0 %v3170
    %v3280 = vpop.xlane.xlu0 %3279
    %3281 = vadd.xlane.f32.xlu0 %v3175
    %v3282 = vpop.xlane.xlu0 %3281
    %3283 = vadd.xlane.f32.xlu0 %v3178
    %v3284 = vpop.xlane.xlu0 %3283
    %3285 = vadd.xlane.f32.xlu0 %v3183
    %v3286 = vpop.xlane.xlu0 %3285
    %3287 = vadd.xlane.f32.xlu0 %v3186
    %v3288 = vpop.xlane.xlu0 %3287
    %3289 = vadd.xlane.f32.xlu0 %v3191
    %v3290 = vpop.xlane.xlu0 %3289
    %3291 = vadd.xlane.f32.xlu0 %v3194
    %v3292 = vpop.xlane.xlu0 %3291
    %3293 = vadd.xlane.f32.xlu0 %v3199
    %v3294 = vpop.xlane.xlu0 %3293
    %3295 = vadd.xlane.f32.xlu0 %v3202
    %v3296 = vpop.xlane.xlu0 %3295
    %3297 = vadd.xlane.f32.xlu0 %v3207
    %v3298 = vpop.xlane.xlu0 %3297
    %3299 = vadd.xlane.f32.xlu0 %v3210
    %v3300 = vpop.xlane.xlu0 %3299
    %3301 = vadd.xlane.f32.xlu0 %v3215
    %v3302 = vpop.xlane.xlu0 %3301
    %3303 = vadd.xlane.f32.xlu0 %v3218
    %v3304 = vpop.xlane.xlu0 %3303
    %3305 = vadd.xlane.f32.xlu0 %v3223
    %v3306 = vpop.xlane.xlu0 %3305
    %3307 = vadd.xlane.f32.xlu0 %v3226
    %v3308 = vpop.xlane.xlu0 %3307
    %3309 = vadd.xlane.f32.xlu0 %v3231
    %v3310 = vpop.xlane.xlu0 %3309
    %3311 = vadd.xlane.f32.xlu0 %v3234
    %v3312 = vpop.xlane.xlu0 %3311
    %3313 = vadd.xlane.f32.xlu0 %v3239
    %v3314 = vpop.xlane.xlu0 %3313
    %3315 = vadd.xlane.f32.xlu0 %v3242
    %v3316 = vpop.xlane.xlu0 %3315
    %3317 = vadd.xlane.f32.xlu0 %v3247
    %v3318 = vpop.xlane.xlu0 %3317
    %3319 = vadd.xlane.f32.xlu0 %v3250
    %v3320 = vpop.xlane.xlu0 %3319
    %3321 = vadd.xlane.f32.xlu0 %v3255
    %v3322 = vpop.xlane.xlu0 %3321
    %3323 = vadd.xlane.f32.xlu0 %v3258
    %v3324 = vpop.xlane.xlu0 %3323
    %v3325 = vmul.f32 %v3135, %v3135
    %v3326 = vmul.f32 %v3138, %v3138
    %v3327 = vmul.f32 %v3143, %v3143
    %v3328 = vmul.f32 %v3146, %v3146
    %v3329 = vmul.f32 %v3151, %v3151
    %v3330 = vmul.f32 %v3154, %v3154
    %v3331 = vmul.f32 %v3159, %v3159
    %v3332 = vmul.f32 %v3162, %v3162
    %v3333 = vmul.f32 %v3167, %v3167
    %v3334 = vmul.f32 %v3170, %v3170
    %v3335 = vmul.f32 %v3175, %v3175
    %v3336 = vmul.f32 %v3178, %v3178
    %v3337 = vmul.f32 %v3183, %v3183
    %v3338 = vmul.f32 %v3186, %v3186
    %v3339 = vmul.f32 %v3191, %v3191
    %v3340 = vmul.f32 %v3194, %v3194
    %v3341 = vmul.f32 %v3199, %v3199
    %v3342 = vmul.f32 %v3202, %v3202
    %v3343 = vmul.f32 %v3207, %v3207
    %v3344 = vmul.f32 %v3210, %v3210
    %v3345 = vmul.f32 %v3215, %v3215
    %v3346 = vmul.f32 %v3218, %v3218
    %v3347 = vmul.f32 %v3223, %v3223
    %v3348 = vmul.f32 %v3226, %v3226
    %v3349 = vmul.f32 %v3231, %v3231
    %v3350 = vmul.f32 %v3234, %v3234
    %v3351 = vmul.f32 %v3239, %v3239
    %v3352 = vmul.f32 %v3242, %v3242
    %v3353 = vmul.f32 %v3247, %v3247
    %v3354 = vmul.f32 %v3250, %v3250
    %v3355 = vmul.f32 %v3255, %v3255
    %v3356 = vmul.f32 %v3258, %v3258
    %3357 = vadd.xlane.f32.xlu0 %v3325
    %v3358 = vpop.xlane.xlu0 %3357
    %3359 = vadd.xlane.f32.xlu0 %v3326
    %v3360 = vpop.xlane.xlu0 %3359
    %3361 = vadd.xlane.f32.xlu0 %v3327
    %v3362 = vpop.xlane.xlu0 %3361
    %3363 = vadd.xlane.f32.xlu0 %v3328
    %v3364 = vpop.xlane.xlu0 %3363
    %3365 = vadd.xlane.f32.xlu0 %v3329
    %v3366 = vpop.xlane.xlu0 %3365
    %3367 = vadd.xlane.f32.xlu0 %v3330
    %v3368 = vpop.xlane.xlu0 %3367
    %3369 = vadd.xlane.f32.xlu0 %v3331
    %v3370 = vpop.xlane.xlu0 %3369
    %3371 = vadd.xlane.f32.xlu0 %v3332
    %v3372 = vpop.xlane.xlu0 %3371
    %3373 = vadd.xlane.f32.xlu0 %v3333
    %v3374 = vpop.xlane.xlu0 %3373
    %3375 = vadd.xlane.f32.xlu0 %v3334
    %v3376 = vpop.xlane.xlu0 %3375
    %3377 = vadd.xlane.f32.xlu0 %v3335
    %v3378 = vpop.xlane.xlu0 %3377
    %3379 = vadd.xlane.f32.xlu0 %v3336
    %v3380 = vpop.xlane.xlu0 %3379
    %3381 = vadd.xlane.f32.xlu0 %v3337
    %v3382 = vpop.xlane.xlu0 %3381
    %3383 = vadd.xlane.f32.xlu0 %v3338
    %v3384 = vpop.xlane.xlu0 %3383
    %3385 = vadd.xlane.f32.xlu0 %v3339
    %v3386 = vpop.xlane.xlu0 %3385
    %3387 = vadd.xlane.f32.xlu0 %v3340
    %v3388 = vpop.xlane.xlu0 %3387
    %3389 = vadd.xlane.f32.xlu0 %v3341
    %v3390 = vpop.xlane.xlu0 %3389
    %3391 = vadd.xlane.f32.xlu0 %v3342
    %v3392 = vpop.xlane.xlu0 %3391
    %3393 = vadd.xlane.f32.xlu0 %v3343
    %v3394 = vpop.xlane.xlu0 %3393
    %3395 = vadd.xlane.f32.xlu0 %v3344
    %v3396 = vpop.xlane.xlu0 %3395
    %3397 = vadd.xlane.f32.xlu0 %v3345
    %v3398 = vpop.xlane.xlu0 %3397
    %3399 = vadd.xlane.f32.xlu0 %v3346
    %v3400 = vpop.xlane.xlu0 %3399
    %3401 = vadd.xlane.f32.xlu0 %v3347
    %v3402 = vpop.xlane.xlu0 %3401
    %3403 = vadd.xlane.f32.xlu0 %v3348
    %v3404 = vpop.xlane.xlu0 %3403
    %3405 = vadd.xlane.f32.xlu0 %v3349
    %v3406 = vpop.xlane.xlu0 %3405
    %3407 = vadd.xlane.f32.xlu0 %v3350
    %v3408 = vpop.xlane.xlu0 %3407
    %3409 = vadd.xlane.f32.xlu0 %v3351
    %v3410 = vpop.xlane.xlu0 %3409
    %3411 = vadd.xlane.f32.xlu0 %v3352
    %v3412 = vpop.xlane.xlu0 %3411
    %3413 = vadd.xlane.f32.xlu0 %v3353
    %v3414 = vpop.xlane.xlu0 %3413
    %3415 = vadd.xlane.f32.xlu0 %v3354
    %v3416 = vpop.xlane.xlu0 %3415
    %3417 = vadd.xlane.f32.xlu0 %v3355
    %v3418 = vpop.xlane.xlu0 %3417
    %3419 = vadd.xlane.f32.xlu0 %v3356
    %v3420 = vpop.xlane.xlu0 %3419
    %v3421 = vmul.f32 %v3262, 0.0078125
    %v3422 = vmul.f32 %v3264, 0.0078125
    %v3423 = vmul.f32 %v3266, 0.0078125
    %v3424 = vmul.f32 %v3268, 0.0078125
    %v3425 = vmul.f32 %v3270, 0.0078125
    %v3426 = vmul.f32 %v3272, 0.0078125
    %v3427 = vmul.f32 %v3274, 0.0078125
    %v3428 = vmul.f32 %v3276, 0.0078125
    %v3429 = vmul.f32 %v3278, 0.0078125
    %v3430 = vmul.f32 %v3280, 0.0078125
    %v3431 = vmul.f32 %v3282, 0.0078125
    %v3432 = vmul.f32 %v3284, 0.0078125
    %v3433 = vmul.f32 %v3286, 0.0078125
    %v3434 = vmul.f32 %v3288, 0.0078125
    %v3435 = vmul.f32 %v3290, 0.0078125
    %v3436 = vmul.f32 %v3292, 0.0078125
    %v3437 = vmul.f32 %v3294, 0.0078125
    %v3438 = vmul.f32 %v3296, 0.0078125
    %v3439 = vmul.f32 %v3298, 0.0078125
    %v3440 = vmul.f32 %v3300, 0.0078125
    %v3441 = vmul.f32 %v3302, 0.0078125
    %v3442 = vmul.f32 %v3304, 0.0078125
    %v3443 = vmul.f32 %v3306, 0.0078125
    %v3444 = vmul.f32 %v3308, 0.0078125
    %v3445 = vmul.f32 %v3310, 0.0078125
    %v3446 = vmul.f32 %v3312, 0.0078125
    %v3447 = vmul.f32 %v3314, 0.0078125
    %v3448 = vmul.f32 %v3316, 0.0078125
    %v3449 = vmul.f32 %v3318, 0.0078125
    %v3450 = vmul.f32 %v3320, 0.0078125
    %v3451 = vmul.f32 %v3322, 0.0078125
    %v3452 = vmul.f32 %v3324, 0.0078125
    %v3453 = vmul.f32 %v3358, 0.0078125
    %v3454 = vmul.f32 %v3360, 0.0078125
    %v3455 = vmul.f32 %v3362, 0.0078125
    %v3456 = vmul.f32 %v3364, 0.0078125
    %v3457 = vmul.f32 %v3366, 0.0078125
    %v3458 = vmul.f32 %v3368, 0.0078125
    %v3459 = vmul.f32 %v3370, 0.0078125
    %v3460 = vmul.f32 %v3372, 0.0078125
    %v3461 = vmul.f32 %v3374, 0.0078125
    %v3462 = vmul.f32 %v3376, 0.0078125
    %v3463 = vmul.f32 %v3378, 0.0078125
    %v3464 = vmul.f32 %v3380, 0.0078125
    %v3465 = vmul.f32 %v3382, 0.0078125
    %v3466 = vmul.f32 %v3384, 0.0078125
    %v3467 = vmul.f32 %v3386, 0.0078125
    %v3468 = vmul.f32 %v3388, 0.0078125
    %v3469 = vmul.f32 %v3390, 0.0078125
    %v3470 = vmul.f32 %v3392, 0.0078125
    %v3471 = vmul.f32 %v3394, 0.0078125
    %v3472 = vmul.f32 %v3396, 0.0078125
    %v3473 = vmul.f32 %v3398, 0.0078125
    %v3474 = vmul.f32 %v3400, 0.0078125
    %v3475 = vmul.f32 %v3402, 0.0078125
    %v3476 = vmul.f32 %v3404, 0.0078125
    %v3477 = vmul.f32 %v3406, 0.0078125
    %v3478 = vmul.f32 %v3408, 0.0078125
    %v3479 = vmul.f32 %v3410, 0.0078125
    %v3480 = vmul.f32 %v3412, 0.0078125
    %v3481 = vmul.f32 %v3414, 0.0078125
    %v3482 = vmul.f32 %v3416, 0.0078125
    %v3483 = vmul.f32 %v3418, 0.0078125
    %v3484 = vmul.f32 %v3420, 0.0078125
    %v3485 = vmul.f32 %v3421, %v3421
    %v3486 = vmul.f32 %v3422, %v3422
    %v3487 = vmul.f32 %v3423, %v3423
    %v3488 = vmul.f32 %v3424, %v3424
    %v3489 = vmul.f32 %v3425, %v3425
    %v3490 = vmul.f32 %v3426, %v3426
    %v3491 = vmul.f32 %v3427, %v3427
    %v3492 = vmul.f32 %v3428, %v3428
    %v3493 = vmul.f32 %v3429, %v3429
    %v3494 = vmul.f32 %v3430, %v3430
    %v3495 = vmul.f32 %v3431, %v3431
    %v3496 = vmul.f32 %v3432, %v3432
    %v3497 = vmul.f32 %v3433, %v3433
    %v3498 = vmul.f32 %v3434, %v3434
    %v3499 = vmul.f32 %v3435, %v3435
    %v3500 = vmul.f32 %v3436, %v3436
    %v3501 = vmul.f32 %v3437, %v3437
    %v3502 = vmul.f32 %v3438, %v3438
    %v3503 = vmul.f32 %v3439, %v3439
    %v3504 = vmul.f32 %v3440, %v3440
    %v3505 = vmul.f32 %v3441, %v3441
    %v3506 = vmul.f32 %v3442, %v3442
    %v3507 = vmul.f32 %v3443, %v3443
    %v3508 = vmul.f32 %v3444, %v3444
    %v3509 = vmul.f32 %v3445, %v3445
    %v3510 = vmul.f32 %v3446, %v3446
    %v3511 = vmul.f32 %v3447, %v3447
    %v3512 = vmul.f32 %v3448, %v3448
    %v3513 = vmul.f32 %v3449, %v3449
    %v3514 = vmul.f32 %v3450, %v3450
    %v3515 = vmul.f32 %v3451, %v3451
    %v3516 = vmul.f32 %v3452, %v3452
    %v3517 = vsub.f32 %v3453, %v3485
    %v3518 = vsub.f32 %v3454, %v3486
    %v3519 = vsub.f32 %v3455, %v3487
    %v3520 = vsub.f32 %v3456, %v3488
    %v3521 = vsub.f32 %v3457, %v3489
    %v3522 = vsub.f32 %v3458, %v3490
    %v3523 = vsub.f32 %v3459, %v3491
    %v3524 = vsub.f32 %v3460, %v3492
    %v3525 = vsub.f32 %v3461, %v3493
    %v3526 = vsub.f32 %v3462, %v3494
    %v3527 = vsub.f32 %v3463, %v3495
    %v3528 = vsub.f32 %v3464, %v3496
    %v3529 = vsub.f32 %v3465, %v3497
    %v3530 = vsub.f32 %v3466, %v3498
    %v3531 = vsub.f32 %v3467, %v3499
    %v3532 = vsub.f32 %v3468, %v3500
    %v3533 = vsub.f32 %v3469, %v3501
    %v3534 = vsub.f32 %v3470, %v3502
    %v3535 = vsub.f32 %v3471, %v3503
    %v3536 = vsub.f32 %v3472, %v3504
    %v3537 = vsub.f32 %v3473, %v3505
    %v3538 = vsub.f32 %v3474, %v3506
    %v3539 = vsub.f32 %v3475, %v3507
    %v3540 = vsub.f32 %v3476, %v3508
    %v3541 = vsub.f32 %v3477, %v3509
    %v3542 = vsub.f32 %v3478, %v3510
    %v3543 = vsub.f32 %v3479, %v3511
    %v3544 = vsub.f32 %v3480, %v3512
    %v3545 = vsub.f32 %v3481, %v3513
    %v3546 = vsub.f32 %v3482, %v3514
    %v3547 = vsub.f32 %v3483, %v3515
    %v3548 = vsub.f32 %v3484, %v3516
    %v3549 = vmax.f32 %v3517, 0.0
    %v3550 = vmax.f32 %v3518, 0.0
    %v3551 = vmax.f32 %v3519, 0.0
    %v3552 = vmax.f32 %v3520, 0.0
    %v3553 = vmax.f32 %v3521, 0.0
    %v3554 = vmax.f32 %v3522, 0.0
    %v3555 = vmax.f32 %v3523, 0.0
    %v3556 = vmax.f32 %v3524, 0.0
    %v3557 = vmax.f32 %v3525, 0.0
    %v3558 = vmax.f32 %v3526, 0.0
    %v3559 = vmax.f32 %v3527, 0.0
    %v3560 = vmax.f32 %v3528, 0.0
    %v3561 = vmax.f32 %v3529, 0.0
    %v3562 = vmax.f32 %v3530, 0.0
    %v3563 = vmax.f32 %v3531, 0.0
    %v3564 = vmax.f32 %v3532, 0.0
    %v3565 = vmax.f32 %v3533, 0.0
    %v3566 = vmax.f32 %v3534, 0.0
    %v3567 = vmax.f32 %v3535, 0.0
    %v3568 = vmax.f32 %v3536, 0.0
    %v3569 = vmax.f32 %v3537, 0.0
    %v3570 = vmax.f32 %v3538, 0.0
    %v3571 = vmax.f32 %v3539, 0.0
    %v3572 = vmax.f32 %v3540, 0.0
    %v3573 = vmax.f32 %v3541, 0.0
    %v3574 = vmax.f32 %v3542, 0.0
    %v3575 = vmax.f32 %v3543, 0.0
    %v3576 = vmax.f32 %v3544, 0.0
    %v3577 = vmax.f32 %v3545, 0.0
    %v3578 = vmax.f32 %v3546, 0.0
    %v3579 = vmax.f32 %v3547, 0.0
    %v3580 = vmax.f32 %v3548, 0.0
    %v3581 = vsub.f32 %v3135, %v3421
    %v3582 = vsub.f32 %v3138, %v3422
    %v3583 = vsub.f32 %v3143, %v3423
    %v3584 = vsub.f32 %v3146, %v3424
    %v3585 = vsub.f32 %v3151, %v3425
    %v3586 = vsub.f32 %v3154, %v3426
    %v3587 = vsub.f32 %v3159, %v3427
    %v3588 = vsub.f32 %v3162, %v3428
    %v3589 = vsub.f32 %v3167, %v3429
    %v3590 = vsub.f32 %v3170, %v3430
    %v3591 = vsub.f32 %v3175, %v3431
    %v3592 = vsub.f32 %v3178, %v3432
    %v3593 = vsub.f32 %v3183, %v3433
    %v3594 = vsub.f32 %v3186, %v3434
    %v3595 = vsub.f32 %v3191, %v3435
    %v3596 = vsub.f32 %v3194, %v3436
    %v3597 = vsub.f32 %v3199, %v3437
    %v3598 = vsub.f32 %v3202, %v3438
    %v3599 = vsub.f32 %v3207, %v3439
    %v3600 = vsub.f32 %v3210, %v3440
    %v3601 = vsub.f32 %v3215, %v3441
    %v3602 = vsub.f32 %v3218, %v3442
    %v3603 = vsub.f32 %v3223, %v3443
    %v3604 = vsub.f32 %v3226, %v3444
    %v3605 = vsub.f32 %v3231, %v3445
    %v3606 = vsub.f32 %v3234, %v3446
    %v3607 = vsub.f32 %v3239, %v3447
    %v3608 = vsub.f32 %v3242, %v3448
    %v3609 = vsub.f32 %v3247, %v3449
    %v3610 = vsub.f32 %v3250, %v3450
    %v3611 = vsub.f32 %v3255, %v3451
    %v3612 = vsub.f32 %v3258, %v3452
    %v3613 = vadd.f32 %v3549, 1e-05
    %v3614 = vadd.f32 %v3550, 1e-05
    %v3615 = vadd.f32 %v3551, 1e-05
    %v3616 = vadd.f32 %v3552, 1e-05
    %v3617 = vadd.f32 %v3553, 1e-05
    %v3618 = vadd.f32 %v3554, 1e-05
    %v3619 = vadd.f32 %v3555, 1e-05
    %v3620 = vadd.f32 %v3556, 1e-05
    %v3621 = vadd.f32 %v3557, 1e-05
    %v3622 = vadd.f32 %v3558, 1e-05
    %v3623 = vadd.f32 %v3559, 1e-05
    %v3624 = vadd.f32 %v3560, 1e-05
    %v3625 = vadd.f32 %v3561, 1e-05
    %v3626 = vadd.f32 %v3562, 1e-05
    %v3627 = vadd.f32 %v3563, 1e-05
    %v3628 = vadd.f32 %v3564, 1e-05
    %v3629 = vadd.f32 %v3565, 1e-05
    %v3630 = vadd.f32 %v3566, 1e-05
    %v3631 = vadd.f32 %v3567, 1e-05
    %v3632 = vadd.f32 %v3568, 1e-05
    %v3633 = vadd.f32 %v3569, 1e-05
    %v3634 = vadd.f32 %v3570, 1e-05
    %v3635 = vadd.f32 %v3571, 1e-05
    %v3636 = vadd.f32 %v3572, 1e-05
    %v3637 = vadd.f32 %v3573, 1e-05
    %v3638 = vadd.f32 %v3574, 1e-05
    %v3639 = vadd.f32 %v3575, 1e-05
    %v3640 = vadd.f32 %v3576, 1e-05
    %v3641 = vadd.f32 %v3577, 1e-05
    %v3642 = vadd.f32 %v3578, 1e-05
    %v3643 = vadd.f32 %v3579, 1e-05
    %v3644 = vadd.f32 %v3580, 1e-05
    %v3645 = vrsqrt.pop %v3613
    %v3646 = vrsqrt.pop %v3614
    %v3647 = vrsqrt.pop %v3615
    %v3648 = vrsqrt.pop %v3616
    %v3649 = vrsqrt.pop %v3617
    %v3650 = vrsqrt.pop %v3618
    %v3651 = vrsqrt.pop %v3619
    %v3652 = vrsqrt.pop %v3620
    %v3653 = vrsqrt.pop %v3621
    %v3654 = vrsqrt.pop %v3622
    %v3655 = vrsqrt.pop %v3623
    %v3656 = vrsqrt.pop %v3624
    %v3657 = vrsqrt.pop %v3625
    %v3658 = vrsqrt.pop %v3626
    %v3659 = vrsqrt.pop %v3627
    %v3660 = vrsqrt.pop %v3628
    %v3661 = vrsqrt.pop %v3629
    %v3662 = vrsqrt.pop %v3630
    %v3663 = vrsqrt.pop %v3631
    %v3664 = vrsqrt.pop %v3632
    %v3665 = vrsqrt.pop %v3633
    %v3666 = vrsqrt.pop %v3634
    %v3667 = vrsqrt.pop %v3635
    %v3668 = vrsqrt.pop %v3636
    %v3669 = vrsqrt.pop %v3637
    %v3670 = vrsqrt.pop %v3638
    %v3671 = vrsqrt.pop %v3639
    %v3672 = vrsqrt.pop %v3640
    %v3673 = vrsqrt.pop %v3641
    %v3674 = vrsqrt.pop %v3642
    %v3675 = vrsqrt.pop %v3643
    %v3676 = vrsqrt.pop %v3644
    %v3677 = vmul.f32 %v3581, %v3645
    %v3678 = vmul.f32 %v3582, %v3646
    %v3679 = vmul.f32 %v3583, %v3647
    %v3680 = vmul.f32 %v3584, %v3648
    %v3681 = vmul.f32 %v3585, %v3649
    %v3682 = vmul.f32 %v3586, %v3650
    %v3683 = vmul.f32 %v3587, %v3651
    %v3684 = vmul.f32 %v3588, %v3652
    %v3685 = vmul.f32 %v3589, %v3653
    %v3686 = vmul.f32 %v3590, %v3654
    %v3687 = vmul.f32 %v3591, %v3655
    %v3688 = vmul.f32 %v3592, %v3656
    %v3689 = vmul.f32 %v3593, %v3657
    %v3690 = vmul.f32 %v3594, %v3658
    %v3691 = vmul.f32 %v3595, %v3659
    %v3692 = vmul.f32 %v3596, %v3660
    %v3693 = vmul.f32 %v3597, %v3661
    %v3694 = vmul.f32 %v3598, %v3662
    %v3695 = vmul.f32 %v3599, %v3663
    %v3696 = vmul.f32 %v3600, %v3664
    %v3697 = vmul.f32 %v3601, %v3665
    %v3698 = vmul.f32 %v3602, %v3666
    %v3699 = vmul.f32 %v3603, %v3667
    %v3700 = vmul.f32 %v3604, %v3668
    %v3701 = vmul.f32 %v3605, %v3669
    %v3702 = vmul.f32 %v3606, %v3670
    %v3703 = vmul.f32 %v3607, %v3671
    %v3704 = vmul.f32 %v3608, %v3672
    %v3705 = vmul.f32 %v3609, %v3673
    %v3706 = vmul.f32 %v3610, %v3674
    %v3707 = vmul.f32 %v3611, %v3675
    %v3708 = vmul.f32 %v3612, %v3676
    %v3709 = vlaneseq
    %v3710 = vshrl.u32 %v3709, 7
    %v3711 = vsub.s32 1, %v3710
    %v3712 = vrot.slane %v565, %v3711
    %v3713 = vmul.f32 %v3677, %v3712
    %v3714 = vmul.f32 %v3678, %v3712
    %v3715 = vmul.f32 %v3679, %v3712
    %v3716 = vmul.f32 %v3680, %v3712
    %v3717 = vmul.f32 %v3681, %v3712
    %v3718 = vmul.f32 %v3682, %v3712
    %v3719 = vmul.f32 %v3683, %v3712
    %v3720 = vmul.f32 %v3684, %v3712
    %v3721 = vmul.f32 %v3685, %v3712
    %v3722 = vmul.f32 %v3686, %v3712
    %v3723 = vmul.f32 %v3687, %v3712
    %v3724 = vmul.f32 %v3688, %v3712
    %v3725 = vmul.f32 %v3689, %v3712
    %v3726 = vmul.f32 %v3690, %v3712
    %v3727 = vmul.f32 %v3691, %v3712
    %v3728 = vmul.f32 %v3692, %v3712
    %v3729 = vmul.f32 %v3693, %v3712
    %v3730 = vmul.f32 %v3694, %v3712
    %v3731 = vmul.f32 %v3695, %v3712
    %v3732 = vmul.f32 %v3696, %v3712
    %v3733 = vmul.f32 %v3697, %v3712
    %v3734 = vmul.f32 %v3698, %v3712
    %v3735 = vmul.f32 %v3699, %v3712
    %v3736 = vmul.f32 %v3700, %v3712
    %v3737 = vmul.f32 %v3701, %v3712
    %v3738 = vmul.f32 %v3702, %v3712
    %v3739 = vmul.f32 %v3703, %v3712
    %v3740 = vmul.f32 %v3704, %v3712
    %v3741 = vmul.f32 %v3705, %v3712
    %v3742 = vmul.f32 %v3706, %v3712
    %v3743 = vmul.f32 %v3707, %v3712
    %v3744 = vmul.f32 %v3708, %v3712
    %v3745 = vlaneseq
    %v3746 = vshrl.u32 %v3745, 7
    %v3747 = vsub.s32 2, %v3746
    %v3748 = vrot.slane %v565, %v3747
    %v3749 = vadd.f32 %v3713, %v3748
    %v3750 = vadd.f32 %v3714, %v3748
    %v3751 = vadd.f32 %v3715, %v3748
    %v3752 = vadd.f32 %v3716, %v3748
    %v3753 = vadd.f32 %v3717, %v3748
    %v3754 = vadd.f32 %v3718, %v3748
    %v3755 = vadd.f32 %v3719, %v3748
    %v3756 = vadd.f32 %v3720, %v3748
    %v3757 = vadd.f32 %v3721, %v3748
    %v3758 = vadd.f32 %v3722, %v3748
    %v3759 = vadd.f32 %v3723, %v3748
    %v3760 = vadd.f32 %v3724, %v3748
    %v3761 = vadd.f32 %v3725, %v3748
    %v3762 = vadd.f32 %v3726, %v3748
    %v3763 = vadd.f32 %v3727, %v3748
    %v3764 = vadd.f32 %v3728, %v3748
    %v3765 = vadd.f32 %v3729, %v3748
    %v3766 = vadd.f32 %v3730, %v3748
    %v3767 = vadd.f32 %v3731, %v3748
    %v3768 = vadd.f32 %v3732, %v3748
    %v3769 = vadd.f32 %v3733, %v3748
    %v3770 = vadd.f32 %v3734, %v3748
    %v3771 = vadd.f32 %v3735, %v3748
    %v3772 = vadd.f32 %v3736, %v3748
    %v3773 = vadd.f32 %v3737, %v3748
    %v3774 = vadd.f32 %v3738, %v3748
    %v3775 = vadd.f32 %v3739, %v3748
    %v3776 = vadd.f32 %v3740, %v3748
    %v3777 = vadd.f32 %v3741, %v3748
    %v3778 = vadd.f32 %v3742, %v3748
    %v3779 = vadd.f32 %v3743, %v3748
    %v3780 = vadd.f32 %v3744, %v3748
    %v3781 = vtanh.pop %v3749
    %v3782 = vtanh.pop %v3750
    %v3783 = vtanh.pop %v3751
    %v3784 = vtanh.pop %v3752
    %v3785 = vtanh.pop %v3753
    %v3786 = vtanh.pop %v3754
    %v3787 = vtanh.pop %v3755
    %v3788 = vtanh.pop %v3756
    %v3789 = vtanh.pop %v3757
    %v3790 = vtanh.pop %v3758
    %v3791 = vtanh.pop %v3759
    %v3792 = vtanh.pop %v3760
    %v3793 = vtanh.pop %v3761
    %v3794 = vtanh.pop %v3762
    %v3795 = vtanh.pop %v3763
    %v3796 = vtanh.pop %v3764
    %v3797 = vtanh.pop %v3765
    %v3798 = vtanh.pop %v3766
    %v3799 = vtanh.pop %v3767
    %v3800 = vtanh.pop %v3768
    %v3801 = vtanh.pop %v3769
    %v3802 = vtanh.pop %v3770
    %v3803 = vtanh.pop %v3771
    %v3804 = vtanh.pop %v3772
    %v3805 = vtanh.pop %v3773
    %v3806 = vtanh.pop %v3774
    %v3807 = vtanh.pop %v3775
    %v3808 = vtanh.pop %v3776
    %v3809 = vtanh.pop %v3777
    %v3810 = vtanh.pop %v3778
    %v3811 = vtanh.pop %v3779
    %v3812 = vtanh.pop %v3780
    %3813 = vst [vmem:[#allocation7] sm:$0xff] %v3781
    %3814 = vst [vmem:[#allocation7 + $0x8] sm:$0xff] %v3782
    %3815 = vst [vmem:[#allocation7 + $0x10] sm:$0xff] %v3783
    %3816 = vst [vmem:[#allocation7 + $0x18] sm:$0xff] %v3784
    %3817 = vst [vmem:[#allocation7 + $0x20] sm:$0xff] %v3785
    %3818 = vst [vmem:[#allocation7 + $0x28] sm:$0xff] %v3786
    %3819 = vst [vmem:[#allocation7 + $0x30] sm:$0xff] %v3787
    %3820 = vst [vmem:[#allocation7 + $0x38] sm:$0xff] %v3788
    %3821 = vst [vmem:[#allocation7 + $0x40] sm:$0xff] %v3789
    %3822 = vst [vmem:[#allocation7 + $0x48] sm:$0xff] %v3790
    %3823 = vst [vmem:[#allocation7 + $0x50] sm:$0xff] %v3791
    %3824 = vst [vmem:[#allocation7 + $0x58] sm:$0xff] %v3792
    %3825 = vst [vmem:[#allocation7 + $0x60] sm:$0xff] %v3793
    %3826 = vst [vmem:[#allocation7 + $0x68] sm:$0xff] %v3794
    %3827 = vst [vmem:[#allocation7 + $0x70] sm:$0xff] %v3795
    %3828 = vst [vmem:[#allocation7 + $0x78] sm:$0xff] %v3796
    %3829 = vst [vmem:[#allocation7 + $0x80] sm:$0xff] %v3797
    %3830 = vst [vmem:[#allocation7 + $0x88] sm:$0xff] %v3798
    %3831 = vst [vmem:[#allocation7 + $0x90] sm:$0xff] %v3799
    %3832 = vst [vmem:[#allocation7 + $0x98] sm:$0xff] %v3800
    %3833 = vst [vmem:[#allocation7 + $0xa0] sm:$0xff] %v3801
    %3834 = vst [vmem:[#allocation7 + $0xa8] sm:$0xff] %v3802
    %3835 = vst [vmem:[#allocation7 + $0xb0] sm:$0xff] %v3803
    %3836 = vst [vmem:[#allocation7 + $0xb8] sm:$0xff] %v3804
    %3837 = vst [vmem:[#allocation7 + $0xc0] sm:$0xff] %v3805
    %3838 = vst [vmem:[#allocation7 + $0xc8] sm:$0xff] %v3806
    %3839 = vst [vmem:[#allocation7 + $0xd0] sm:$0xff] %v3807
    %3840 = vst [vmem:[#allocation7 + $0xd8] sm:$0xff] %v3808
    %3841 = vst [vmem:[#allocation7 + $0xe0] sm:$0xff] %v3809
    %3842 = vst [vmem:[#allocation7 + $0xe8] sm:$0xff] %v3810
    %3843 = vst [vmem:[#allocation7 + $0xf0] sm:$0xff] %v3811
    %3844 = vst [vmem:[#allocation7 + $0xf8] sm:$0xff] %v3812
    // Predicated region
    $region34: #{ppo_forward.1} parent=1 // pred_check
      _
    $region35: #{ppo_forward.1} parent=1 // pred_check_branch
      %3846 = sbr.rel (0) target = $region37
    $region36: #{ppo_forward.1} parent=1 // pred_region
      %s3848 = ssub.s32 4096, 4096
      %3849 = vsyncadd [#allocation4], %s3848
      %s3850 = sshll.u32 [#allocation7], 4
      %s3851 = int_to_ptr.vmem [resolvable:$true] %s3850
      %3856 = dma.vmem_to_hbm [thread:$0]  %s3851, 4096, %s6, [#allocation4], 128, 128, 8
    $region37: #{ppo_forward.1} parent=1 // pred_fallthru
      _
    // Predicated region
    $region38: #{ppo_forward.1} parent=1 // pred_check
      _
    $region39: #{ppo_forward.1} parent=1 // pred_check_branch
      %3858 = sbr.rel (0) target = $region41
    $region40: #{ppo_forward.1} parent=1 // pred_region
      %3859 = dma.done [#allocation4], 4096
    $region41: #{ppo_forward.1} parent=1 // pred_fallthru
      _
    %3860 = vsyncpa [#allocation3], 1
    %3861 = vsyncpa [#allocation6], 1
    %3862 = vsyncpa [#allocation4], 1

</llo_original>
